<compile_context>
chip_gen: v7x
topology: tpu7x:2x2x1
jax: 0.10.0
libtpu: 0.0.40
codegen_flags: <defaults>
</compile_context>

<pallas_src>
import math
import functools

import jax
import jax.numpy as jnp
from jax.experimental import pallas as pl
from jax.experimental.pallas import tpu as pltpu


MAX_FACES = 15
BN_EPS = 1e-5


def _pick_tile(dim, target, align):
    """Largest tile <= target that is a multiple of `align` and divides `dim`;
    falls back to the full dim (always legal for BlockSpec)."""
    t = min(target, dim)
    t -= t % align
    while t >= align:
        if dim % t == 0:
            return t
        t -= align
    return dim


# ---------------------------------------------------------------------------
# Kernel A: ReLU -> global avg-pool(7x7) -> global_fc_main  (B,2208,49) -> (B,256)
# ---------------------------------------------------------------------------
def _global_head_kernel(x_ref, w_ref, b_ref, o_ref, acc_ref, *, inv_pool):
    k = pl.program_id(1)

    @pl.when(k == 0)
    def _init():
        acc_ref[...] = jnp.zeros_like(acc_ref)

    x = x_ref[...]                                                # (B, tk, HW) f32
    pooled = jnp.sum(jnp.maximum(x, 0.0), axis=2) * inv_pool      # (B, tk)  relu + mean
    # TODO(synk): optionally cast pooled / w to bf16 on v6e/v7x for MXU rate once
    # tolerance is re-verified; accumulation stays f32 either way.
    acc_ref[...] += jnp.dot(pooled, w_ref[...],
                            preferred_element_type=jnp.float32)   # (B, tn)

    @pl.when(k == pl.num_programs(1) - 1)
    def _finalize():
        o_ref[...] = (acc_ref[...] + b_ref[...]).astype(o_ref.dtype)


def global_head(features_3d, w_main_t, b_main_row):
    """features_3d: (B, K, HW) pre-ReLU backbone features; w_main_t: (K, N); b: (1, N)."""
    B, K, HW = features_3d.shape
    N = w_main_t.shape[1]
    tk = _pick_tile(K, 576, 8)      # 2208 -> 552 (4 reduction steps)
    tn = _pick_tile(N, 128, 128)    # 256  -> 128 (lane-dense output tiles)
    grid = (N // tn, K // tk)

    kernel = functools.partial(_global_head_kernel, inv_pool=1.0 / HW)
    cost = pl.CostEstimate(
        flops=2 * B * K * N + 2 * B * K * HW,
        transcendentals=0,
        bytes_accessed=4 * (B * K * HW + K * N + N + B * N),
    )
    return pl.pallas_call(
        kernel,
        out_shape=jax.ShapeDtypeStruct((B, N), jnp.float32),
        grid_spec=pltpu.PrefetchScalarGridSpec(
            num_scalar_prefetch=0,
            grid=grid,
            in_specs=[
                pl.BlockSpec((B, tk, HW), lambda n, k: (0, k, 0)),
                pl.BlockSpec((tk, tn), lambda n, k: (k, n)),
                pl.BlockSpec((1, tn), lambda n, k: (0, n)),
            ],
            out_specs=pl.BlockSpec((B, tn), lambda n, k: (0, n)),
            scratch_shapes=[pltpu.VMEM((B, tn), jnp.float32)],
        ),
        compiler_params=pltpu.CompilerParams(
            dimension_semantics=("parallel", "arbitrary")),
        cost_estimate=cost,
    )(features_3d, w_main_t, b_main_row)


# ---------------------------------------------------------------------------
# Kernel B: face attention + mask/softmax + BN(affine=False) + concat-fc3
# ---------------------------------------------------------------------------
def _attention_head_kernel(face_ref, nf_ref, g_ref,
                           w1_ref, b1_ref, w2_ref, b2_ref,
                           w3f_ref, w3g_ref, b3_ref, out_ref):
    face = face_ref[...]                       # (B, F, D) f32
    nf = nf_ref[...]                           # (B, 1, 1) int32
    g = g_ref[...]                             # (B, D)    f32

    # attentionfc2(attentionfc1(x)) with identity dropout is one affine map 256 -> 1.
    v_row = jnp.dot(w2_ref[...], w1_ref[...],
                    preferred_element_type=jnp.float32)            # (1, D)
    b_eff = jnp.sum(w2_ref[...] * b1_ref[...], axis=1,
                    keepdims=True) + b2_ref[...]                   # (1, 1)

    # Raw attention scores, kept in (B, F, 1) so F stays on the sublane axis throughout.
    scores = jnp.sum(face * v_row, axis=2, keepdims=True) + b_eff  # (B, F, 1)

    # Mask faces >= numberFaces with -inf (built in-kernel; no HBM mask tensor).
    face_idx = jax.lax.broadcasted_iota(jnp.int32, scores.shape, 1)
    masked = jnp.where(face_idx >= nf, -jnp.inf, scores)

    # Softmax over the face axis.
    m = jnp.max(masked, axis=1, keepdims=True)                     # (B, 1, 1)
    e = jnp.exp(masked - m)
    s = jnp.sum(e, axis=1, keepdims=True)
    weights = e / s
    # Rows with zero faces: PyTorch overwrites the NaN softmax with zeros.
    weights = jnp.where(nf <= 0, 0.0, weights)                     # (B, F, 1)

    attended = jnp.sum(weights * face, axis=1)                     # (B, D)

    def _bn(x):  # BatchNorm1d(affine=False), batch statistics, biased variance
        mu = jnp.mean(x, axis=0, keepdims=True)
        var = jnp.mean((x - mu) * (x - mu), axis=0, keepdims=True)
        return (x - mu) * jax.lax.rsqrt(var + BN_EPS)

    an = _bn(attended)
    gn = _bn(g)

    # cat([an, gn], 1) @ W_fc3.T + b  ==  an @ W3t[:D] + gn @ W3t[D:] + b
    out_ref[...] = (jnp.dot(an, w3f_ref[...], preferred_element_type=jnp.float32)
                    + jnp.dot(gn, w3g_ref[...], preferred_element_type=jnp.float32)
                    + b3_ref[...]).astype(out_ref.dtype)


def attention_head(face_feats, number_faces, global_feats,
                   w_att1, b_att1, w_att2, b_att2, w_fc3, b_fc3):
    B, F, D = face_feats.shape
    n_out = w_fc3.shape[0]
    nf3 = number_faces.astype(jnp.int32).reshape(B, 1, 1)
    w3t = w_fc3.T                                   # (2D, n_out)
    w3f, w3g = w3t[:D, :], w3t[D:, :]
    b1 = b_att1.reshape(1, -1)
    b2 = b_att2.reshape(1, 1)
    b3 = b_fc3.reshape(1, -1)

    z2 = lambda i: (0, 0)
    z3 = lambda i: (0, 0, 0)
    return pl.pallas_call(
        _attention_head_kernel,
        out_shape=jax.ShapeDtypeStruct((B, n_out), jnp.float32),
        grid_spec=pltpu.PrefetchScalarGridSpec(
            num_scalar_prefetch=0,
            grid=(1,),
            in_specs=[
                pl.BlockSpec((B, F, D), z3),
                pl.BlockSpec((B, 1, 1), z3),
                pl.BlockSpec((B, D), z2),
                pl.BlockSpec(w_att1.shape, z2),
                pl.BlockSpec((1, b1.shape[1]), z2),
                pl.BlockSpec(w_att2.shape, z2),
                pl.BlockSpec((1, 1), z2),
                pl.BlockSpec((D, n_out), z2),
                pl.BlockSpec((D, n_out), z2),
                pl.BlockSpec((1, n_out), z2),
            ],
            out_specs=pl.BlockSpec((B, n_out), z2),
        ),
        compiler_params=pltpu.CompilerParams(
            dimension_semantics=("arbitrary",)),
    )(face_feats, nf3, global_feats, w_att1, b1, w_att2, b2, w3f, w3g, b3)


# ---------------------------------------------------------------------------
# Full forward
# ---------------------------------------------------------------------------
def face_attention_forward(features, face_features, number_faces, params):
    """FaceAttention head forward.

    features:      (B, 2208, 7, 7) pre-ReLU DenseNet161 feature map (backbone output).
    face_features: (B, 15, 256)    per-face embeddings (non_align_model output).
    number_faces:  (B,) int        number of valid faces per image.
    Returns logits (B, 3).
    """
    B, C, H, W = features.shape
    feats3 = features.reshape(B, C, H * W)
    gfeat = global_head(feats3, params['w_main'].T, params['b_main'].reshape(1, -1))
    return attention_head(face_features, number_faces, gfeat,
                          params['w_att1'], params['b_att1'],
                          params['w_att2'], params['b_att2'],
                          params['w_fc3'], params['b_fc3'])


# ---------------------------------------------------------------------------
# Pure-JAX reference mirroring the PyTorch forward (eval dropout, batch-stats BN)
# ---------------------------------------------------------------------------
def _reference(features, face_feats, number_faces, p):
    B, C, H, W = features.shape
    out = jnp.maximum(features, 0.0)
    gp = jnp.mean(out.reshape(B, C, H * W), axis=2)
    g = gp @ p['w_main'].T + p['b_main']
    h = face_feats @ p['w_att1'].T + p['b_att1']
    mid = jnp.squeeze(h @ p['w_att2'].T + p['b_att2'], axis=-1)        # (B, F)
    F_ = face_feats.shape[1]
    idx = jnp.arange(F_)[None, :]
    mask = jnp.where(idx >= number_faces[:, None], -jnp.inf, 0.0)
    scores = jax.nn.softmax(mid + mask, axis=-1)
    scores = jnp.where(number_faces[:, None] <= 0, 0.0, scores)
    attended = jnp.einsum('bf,bfd->bd', scores, face_feats)

    def bn(x):
        mu = jnp.mean(x, axis=0, keepdims=True)
        var = jnp.mean((x - mu) ** 2, axis=0, keepdims=True)
        return (x - mu) / jnp.sqrt(var + BN_EPS)

    final = jnp.concatenate([bn(attended), bn(g)], axis=1)
    return final @ p['w_fc3'].T + p['b_fc3']


if __name__ == "__main__":
    key = jax.random.PRNGKey(0)
    ks = jax.random.split(key, 6)

    B = 4                 # small batch (>= 2 so batch-stats BN is well-defined)
    C_FEAT = 2208         # DenseNet161 feature channels (fixed by global_fc_main 2208->256)
    S = 7                 # backbone spatial size (7x7 avg-pool in forward)
    D = 256
    H1 = 64
    N_CLASSES = 3

    # TODO(synk): the DenseNet161 global_model and the non_align_model face backbone are
    # external pretrained modules loaded from disk; their outputs are synthesized here.
    features = jax.random.normal(ks[0], (B, C_FEAT, S, S), dtype=jnp.float32) * 0.5
    face_feats = jax.random.normal(ks[1], (B, MAX_FACES, D), dtype=jnp.float32) * 0.5
    number_faces = jnp.array([0, 3, 15, 22], dtype=jnp.int32)   # covers masked / full / >max

    params = {
        'w_main': jax.random.normal(ks[2], (D, C_FEAT), jnp.float32) * math.sqrt(2.0 / C_FEAT),
        'b_main': jnp.full((D,), 0.01, jnp.float32),
        'w_att1': jax.random.normal(ks[3], (H1, D), jnp.float32) * math.sqrt(2.0 / D),
        'b_att1': jnp.full((H1,), 0.01, jnp.float32),
        'w_att2': jax.random.normal(ks[4], (1, H1), jnp.float32) * math.sqrt(2.0 / H1),
        'b_att2': jnp.full((1,), 0.01, jnp.float32),
        'w_fc3': jax.random.normal(ks[5], (N_CLASSES, 2 * D), jnp.float32) * math.sqrt(2.0 / (2 * D)),
        'b_fc3': jnp.full((N_CLASSES,), 0.01, jnp.float32),
    }

    logits = face_attention_forward(features, face_feats, number_faces, params)
    logits = jax.block_until_ready(logits)

    ref = _reference(features, face_feats, number_faces, params)
    assert logits.shape == (B, N_CLASSES)
    assert bool(jnp.all(jnp.isfinite(logits))), "non-finite logits"
    assert jnp.allclose(logits, ref, atol=2e-4, rtol=1e-3), (
        f"logits mismatch, max abs err = {float(jnp.max(jnp.abs(logits - ref)))}")

    print("KERNEL_OK")
</pallas_src>

<mosaic_0001>
module attributes {stable_mosaic.version = 11 : i64} {
  func.func @_global_head_kernel(%arg0: i32, %arg1: i32, %arg2: memref<4x552x49xf32, #tpu.memory_space<vmem>>, %arg3: memref<552x128xf32, #tpu.memory_space<vmem>>, %arg4: memref<1x128xf32, #tpu.memory_space<vmem>>, %arg5: memref<4x128xf32, #tpu.memory_space<vmem>>, %arg6: memref<4x128xf32, #tpu.memory_space<vmem>>) attributes {dimension_semantics = [#tpu.dimension_semantics<parallel>, #tpu.dimension_semantics<arbitrary>], iteration_bounds = array<i64: 2, 4>, scalar_prefetch = 0 : i64, scratch_operands = 1 : i64, tpu.core_type = #tpu.core_type<tc>, window_params = [{transform_indices = @transform_0, window_bounds = array<i64: 4, 552, 49>}, {transform_indices = @transform_1, window_bounds = array<i64: 552, 128>}, {transform_indices = @transform_2, window_bounds = array<i64: 1, 128>}, {transform_indices = @transform_3, window_bounds = array<i64: 4, 128>}]} {
    %c0_i32 = arith.constant 0 : i32
    %0 = arith.cmpi eq, %arg1, %c0_i32 : i32
    %1 = arith.extui %0 : i1 to i32
    %c0_i32_0 = arith.constant 0 : i32
    %2 = arith.cmpi ne, %1, %c0_i32_0 : i32
    scf.if %2 {
      %cst_13 = arith.constant 0.000000e+00 : f32
      %17 = vector.broadcast %cst_13 : f32 to vector<4x128xf32>
      %c0_14 = arith.constant 0 : index
      %c0_15 = arith.constant 0 : index
      %18 = vector.load %arg6[%c0_14, %c0_15] : memref<4x128xf32, #tpu.memory_space<vmem>>, vector<4x128xf32>
      tpu.vector_store %arg6[%c0_14, %c0_15], %17 {strides = array<i32>} : memref<4x128xf32, #tpu.memory_space<vmem>>, vector<4x128xf32>,
    } else {
    }
    %c0 = arith.constant 0 : index
    %c0_1 = arith.constant 0 : index
    %c0_2 = arith.constant 0 : index
    %3 = vector.load %arg2[%c0, %c0_1, %c0_2] : memref<4x552x49xf32, #tpu.memory_space<vmem>>, vector<4x552x49xf32>
    %cst = arith.constant 0.000000e+00 : f32
    %4 = vector.broadcast %cst : f32 to vector<4x552x49xf32>
    %5 = arith.maximumf %3, %4 : vector<4x552x49xf32>
    %cst_3 = arith.constant dense<0.000000e+00> : vector<4x552xf32>
    %6 = vector.multi_reduction <add>, %5, %cst_3 [2] : vector<4x552x49xf32> to vector<4x552xf32>
    %cst_4 = arith.constant 0.0204081628 : f32
    %7 = vector.broadcast %cst_4 : f32 to vector<4x552xf32>
    %8 = arith.mulf %6, %7 : vector<4x552xf32>
    %c0_5 = arith.constant 0 : index
    %c0_6 = arith.constant 0 : index
    %9 = vector.load %arg6[%c0_5, %c0_6] : memref<4x128xf32, #tpu.memory_space<vmem>>, vector<4x128xf32>
    %c0_7 = arith.constant 0 : index
    %c0_8 = arith.constant 0 : index
    %10 = vector.load %arg3[%c0_7, %c0_8] : memref<552x128xf32, #tpu.memory_space<vmem>>, vector<552x128xf32>
    %cst_9 = arith.constant dense<0.000000e+00> : vector<4x128xf32>
    %11 = tpu.matmul %8, %10, %cst_9 {dimension_numbers = #tpu.dot_dimension_numbers<[1], [0], [0], [1], [0, 0, 1, 1], [], []>} : vector<4x552xf32>, vector<552x128xf32>, vector<4x128xf32> -> vector<4x128xf32>
    %12 = arith.addf %9, %11 : vector<4x128xf32>
    %c0_10 = arith.constant 0 : index
    %c0_11 = arith.constant 0 : index
    %13 = vector.load %arg6[%c0_10, %c0_11] : memref<4x128xf32, #tpu.memory_space<vmem>>, vector<4x128xf32>
    tpu.vector_store %arg6[%c0_10, %c0_11], %12 {strides = array<i32>} : memref<4x128xf32, #tpu.memory_space<vmem>>, vector<4x128xf32>,
    %c3_i32 = arith.constant 3 : i32
    %14 = arith.cmpi eq, %arg1, %c3_i32 : i32
    %15 = arith.extui %14 : i1 to i32
    %c0_i32_12 = arith.constant 0 : i32
    %16 = arith.cmpi ne, %15, %c0_i32_12 : i32
    scf.if %16 {
      %c0_13 = arith.constant 0 : index
      %c0_14 = arith.constant 0 : index
      %17 = vector.load %arg6[%c0_13, %c0_14] : memref<4x128xf32, #tpu.memory_space<vmem>>, vector<4x128xf32>
      %c0_15 = arith.constant 0 : index
      %c0_16 = arith.constant 0 : index
      %18 = vector.load %arg4[%c0_15, %c0_16] : memref<1x128xf32, #tpu.memory_space<vmem>>, vector<1x128xf32>
      %19 = vector.broadcast %18 : vector<1x128xf32> to vector<4x128xf32>
      %20 = arith.addf %17, %19 : vector<4x128xf32>
      %c0_17 = arith.constant 0 : index
      %c0_18 = arith.constant 0 : index
      %21 = vector.load %arg5[%c0_17, %c0_18] : memref<4x128xf32, #tpu.memory_space<vmem>>, vector<4x128xf32>
      tpu.vector_store %arg5[%c0_17, %c0_18], %20 {strides = array<i32>} : memref<4x128xf32, #tpu.memory_space<vmem>>, vector<4x128xf32>,
    } else {
    }
    return
  }
  func.func @transform_0(%arg0: i32, %arg1: i32) -> (i32, i32, i32) {
    %c0_i32 = arith.constant 0 : i32
    %c0_i32_0 = arith.constant 0 : i32
    %c0_i32_1 = arith.constant 0 : i32
    return %c0_i32, %arg1, %c0_i32_0 : i32, i32, i32
  }
  func.func @transform_1(%arg0: i32, %arg1: i32) -> (i32, i32) {
    %c0_i32 = arith.constant 0 : i32
    return %arg1, %arg0 : i32, i32
  }
  func.func @transform_2(%arg0: i32, %arg1: i32) -> (i32, i32) {
    %c0_i32 = arith.constant 0 : i32
    %c0_i32_0 = arith.constant 0 : i32
    return %c0_i32, %arg0 : i32, i32
  }
  func.func @transform_3(%arg0: i32, %arg1: i32) -> (i32, i32) {
    %c0_i32 = arith.constant 0 : i32
    %c0_i32_0 = arith.constant 0 : i32
    return %c0_i32, %arg0 : i32, i32
  }
}

</mosaic_0001>

<llo_original>
// kernel: tpu_custom_call.1
$region0: #{tpu_custom_call.1}
  #allocation0 [shape = 'u32[]', space=smem, size = 0x4, offset = 0x4, fixed_abs, tag = 'smem constant byte address 0x4 - core index']
  #allocation1 [shape = 'u32[144,128]{1,0:T(1,128)}', space=vmem, size = 0x12000, scoped, tag = 'internal scratch']
  #allocation2 [shape = 'f32[4,128]{1,0:T(4,128)}', space=vmem, size = 0x800, scoped, tag = 'scratch operand']
  %s0 = inlined_call_operand.vmem [shape: f32[4,2208,49], index: 0, kind: input, shape index: {}]
  %s1 = inlined_call_operand.vmem [shape: f32[2208,256], index: 1, kind: input, shape index: {}]
  %s2 = inlined_call_operand.vmem [shape: f32[1,256], index: 2, kind: input, shape index: {}]
  %s3 = inlined_call_operand.hbm [shape: f32[4,256], index: 3, kind: output, shape index: {}]
  %s4 = sld [smem:[#allocation0]]
  $region129: #{tpu_custom_call.1} parent=0
    _
  %s6 = ssub.s32 1, %s4
  %s7 = scalar_select 0, %s6, %s4
  $region1: #{tpu_custom_call.1} parent=0
    #allocation3 [shape = 'u8[2260992]{0}', space=vmem, size = 0x228000, scoped, tag = 'input window, operand 0']
    #allocation4 [shape = 'u8[565248]{0}', space=vmem, size = 0x8a000, scoped, tag = 'input window, operand 1']
    #allocation5 [shape = 'u8[4096]{0}', space=vmem, size = 0x1000, scoped, tag = 'output window, operand 0']
    #allocation6 [shape = 's32[2]{0}', space=sflag, size = 0x8, scoped, tag = 'scoped memory for tpu_custom_call.1']
    %8 = vsyncpa [#allocation6], 0
    %s9 = scalar_lea.sflag [#allocation6], 1
    %10 = vsyncpa %s9, 0
    loop: start=0, step=1, limit=10
    $region2: #{tpu_custom_call.1} parent=1 // loop_pre_header
      _
    $region3: #{tpu_custom_call.1} parent=1 // loop_header
      %s12 = sphi 0, %s16
      %p13 = scmp.ge.s32.totalorder %s12, 10
      %s19 = sphi 0, %s31
      %s20 = sphi 0, %s27
      %s21 = sphi 0, %s19
      %s22 = sphi 0, %s20
      %s23 = sphi 0, %s21
      %s24 = sphi 0, %s22
      %s34 = sphi 0, %s36
      %s37 = sphi 0, %s34
      %s38 = sphi 0, %s37
      %s54 = sphi 0, %s38
      %s62 = sphi 0, %s64
      %s65 = sphi 0, %s62
      %s66 = sphi 0, %s65
      %s82 = sphi 0, %s66
      %s88 = sphi 0, %s90
      %s91 = sphi 0, %s88
      %s92 = sphi 0, %s91
      %s108 = sphi 0, %s92
      %s114 = sphi 0, %s116
      %s117 = sphi 0, %s114
      %s118 = sphi 0, %s117
      %s134 = sphi 0, %s118
    $region4: #{tpu_custom_call.1} parent=1 // loop_header_branch
      %15 = sbr.rel (%p13) target = $region8
    $region5: #{tpu_custom_call.1} parent=1 // loop_body
      %s17 = ssub.s32 %s12, 1
      %s18 = ssub.s32 %s12, 2
      %s25 = sadd.s32 1, %s20
      %p26 = scmp.ge.s32.totalorder %s25, 4
      %s27 = scalar_select %p26, 0, %s25
      %s28 = sadd.s32 1, %s19
      %s29 = scalar_select %p26, %s28, %s19
      %p30 = scmp.ge.s32.totalorder %s29, 2
      %s31 = scalar_select %p30, 0, %s29
      %s32 = ssub.s32 %s20, %s27
      %p33 = scmp.eq.s32.totalorder %s32, 0
      %s35 = sadd.s32 %s34, 1
      %s36 = scalar_select %p33, %s34, %s35
      %p39 = pneg %p33
      %p40 = scmp.eq.s32.totalorder %s12, 7
      %p41 = por %p39, %p40
      %p42 = scmp.ne.s32.totalorder %s34, %s37
      %p43 = scmp.eq.s32.totalorder %s12, 0
      %p44 = por %p42, %p43
      %p45 = scmp.ne.s32.totalorder %s34, %s37
      %p46 = scmp.eq.s32.totalorder %s17, 7
      %p47 = por %p45, %p46
      %p48 = scmp.ne.s32.totalorder %s37, %s38
      %p49 = scmp.eq.s32.totalorder %s17, 0
      %p50 = por %p48, %p49
      %p51 = scmp.ne.s32.totalorder %s37, %s38
      %p52 = scmp.eq.s32.totalorder %s18, 7
      %p53 = por %p51, %p52
      %p55 = scmp.ne.s32.totalorder %s38, %s54
      %p56 = scmp.eq.s32.totalorder %s18, 0
      %p57 = por %p55, %p56
      %s58 = ssub.s32 %s20, %s27
      %s59 = ssub.s32 %s19, %s31
      %s60 = sor.u32 %s58, %s59
      %p61 = scmp.eq.s32.totalorder %s60, 0
      %s63 = sadd.s32 %s62, 1
      %s64 = scalar_select %p61, %s62, %s63
      %p67 = pneg %p61
      %p68 = scmp.eq.s32.totalorder %s12, 7
      %p69 = por %p67, %p68
      %p70 = scmp.ne.s32.totalorder %s62, %s65
      %p71 = scmp.eq.s32.totalorder %s12, 0
      %p72 = por %p70, %p71
      %p73 = scmp.ne.s32.totalorder %s62, %s65
      %p74 = scmp.eq.s32.totalorder %s17, 7
      %p75 = por %p73, %p74
      %p76 = scmp.ne.s32.totalorder %s65, %s66
      %p77 = scmp.eq.s32.totalorder %s17, 0
      %p78 = por %p76, %p77
      %p79 = scmp.ne.s32.totalorder %s65, %s66
      %p80 = scmp.eq.s32.totalorder %s18, 7
      %p81 = por %p79, %p80
      %p83 = scmp.ne.s32.totalorder %s66, %s82
      %p84 = scmp.eq.s32.totalorder %s18, 0
      %p85 = por %p83, %p84
      %s86 = ssub.s32 %s19, %s31
      %p87 = scmp.eq.s32.totalorder %s86, 0
      %s89 = sadd.s32 %s88, 1
      %s90 = scalar_select %p87, %s88, %s89
      %p93 = pneg %p87
      %p94 = scmp.eq.s32.totalorder %s12, 7
      %p95 = por %p93, %p94
      %p96 = scmp.ne.s32.totalorder %s88, %s91
      %p97 = scmp.eq.s32.totalorder %s12, 0
      %p98 = por %p96, %p97
      %p99 = scmp.ne.s32.totalorder %s88, %s91
      %p100 = scmp.eq.s32.totalorder %s17, 7
      %p101 = por %p99, %p100
      %p102 = scmp.ne.s32.totalorder %s91, %s92
      %p103 = scmp.eq.s32.totalorder %s17, 0
      %p104 = por %p102, %p103
      %p105 = scmp.ne.s32.totalorder %s91, %s92
      %p106 = scmp.eq.s32.totalorder %s18, 7
      %p107 = por %p105, %p106
      %p109 = scmp.ne.s32.totalorder %s92, %s108
      %p110 = scmp.eq.s32.totalorder %s18, 0
      %p111 = por %p109, %p110
      %s112 = ssub.s32 %s19, %s31
      %p113 = scmp.eq.s32.totalorder %s112, 0
      %s115 = sadd.s32 %s114, 1
      %s116 = scalar_select %p113, %s114, %s115
      %p119 = pneg %p113
      %p120 = scmp.eq.s32.totalorder %s12, 7
      %p121 = por %p119, %p120
      %p122 = scmp.ne.s32.totalorder %s114, %s117
      %p123 = scmp.eq.s32.totalorder %s12, 0
      %p124 = por %p122, %p123
      %p125 = scmp.ne.s32.totalorder %s114, %s117
      %p126 = scmp.eq.s32.totalorder %s17, 7
      %p127 = por %p125, %p126
      %p128 = scmp.ne.s32.totalorder %s117, %s118
      %p129 = scmp.eq.s32.totalorder %s17, 0
      %p130 = por %p128, %p129
      %p131 = scmp.ne.s32.totalorder %s117, %s118
      %p132 = scmp.eq.s32.totalorder %s18, 7
      %p133 = por %p131, %p132
      %p135 = scmp.ne.s32.totalorder %s118, %s134
      %p136 = scmp.eq.s32.totalorder %s18, 0
      %p137 = por %p135, %p136
      %p138 = scmp.le.s32.totalorder 1, %s12
      %p139 = scmp.lt.s32.totalorder %s12, 9
      %p140 = pnand %p138, %p139
      %p141 = pneg %p140
      // Predicated region
      $region9: #{tpu_custom_call.1} parent=5 // pred_check
        _
      $region10: #{tpu_custom_call.1} parent=5 // pred_check_branch
        %143 = sbr.rel (%p140) target = $region12
      $region11: #{tpu_custom_call.1} parent=5 // pred_region
        %s144 = ssub.s32 %s12, 1
      $region12: #{tpu_custom_call.1} parent=5 // pred_fallthru
        _
      %p145 = scmp.lt.s32.totalorder %s12, 8
      // Predicated region
      $region13: #{tpu_custom_call.1} parent=5 // pred_check
        %p146 = pneg %p145
      $region14: #{tpu_custom_call.1} parent=5 // pred_check_branch
        %148 = sbr.rel (%p146) target = $region16
      $region15: #{tpu_custom_call.1} parent=5 // pred_region
        // Predicated region
        $region17: #{tpu_custom_call.1} parent=15 // pred_check
          %p149 = pneg %p44
        $region18: #{tpu_custom_call.1} parent=15 // pred_check_branch
          %151 = sbr.rel (%p149) target = $region20
        $region19: #{tpu_custom_call.1} parent=15 // pred_region
          %s152 = sand.u32 %s34, 1
          %s153 = sand.u32 %s34, 1
          %s154 = smul.addr %s153, 2208
          %s155 = scalar_lea.vmem [#allocation3], %s154
          %s156 = smul.u32 69, %s20
          %s157 = smul.addr %s156, 8
          %s158 = scalar_lea.vmem %s0, %s157
          // Predicated region
          $region21: #{tpu_custom_call.1} parent=19 // pred_check
            _
          $region22: #{tpu_custom_call.1} parent=19 // pred_check_branch
            %160 = sbr.rel (0) target = $region24
          $region23: #{tpu_custom_call.1} parent=19 // pred_region
            // Predicated region
            $region25: #{tpu_custom_call.1} parent=23 // pred_check
              _
            $region26: #{tpu_custom_call.1} parent=23 // pred_check_branch
              %162 = sbr.rel (0) target = $region28
            $region27: #{tpu_custom_call.1} parent=23 // pred_region
              // Predicated region
              $region40: #{tpu_custom_call.1} parent=27 // pred_check
                _
              $region41: #{tpu_custom_call.1} parent=27 // pred_check_branch
                %727 = sbr.rel (0) target = $region43
              $region42: #{tpu_custom_call.1} parent=27 // pred_region
                loop: start=0, step=1, limit=1
                $region44: #{tpu_custom_call.1} parent=42 // loop_pre_header
                  _
                $region45: #{tpu_custom_call.1} parent=42 // loop_header
                  %s729 = sphi 0, %s733
                  %p730 = scmp.ge.s32.totalorder %s729, 1
                  %s734 = sphi %s158, %s158
                  %s735 = sphi %s155, %s155
                $region46: #{tpu_custom_call.1} parent=42 // loop_header_branch
                  %732 = sbr.rel (%p730) target = $region50
                $region47: #{tpu_custom_call.1} parent=42 // loop_body
                  %v736 = vld [vmem:[%s734] sm:$0xff]
                  %737 = vst [vmem:[%s735] sm:$0xff] %v736
                  %v738 = vld [vmem:[%s734 + $0x8] sm:$0xff]
                  %739 = vst [vmem:[%s735 + $0x8] sm:$0xff] %v738
                  %v740 = vld [vmem:[%s734 + $0x10] sm:$0xff]
                  %741 = vst [vmem:[%s735 + $0x10] sm:$0xff] %v740
                  %v742 = vld [vmem:[%s734 + $0x18] sm:$0xff]
                  %743 = vst [vmem:[%s735 + $0x18] sm:$0xff] %v742
                  %v744 = vld [vmem:[%s734 + $0x20] sm:$0xff]
                  %745 = vst [vmem:[%s735 + $0x20] sm:$0xff] %v744
                  %v746 = vld [vmem:[%s734 + $0x28] sm:$0xff]
                  %747 = vst [vmem:[%s735 + $0x28] sm:$0xff] %v746
                  %v748 = vld [vmem:[%s734 + $0x30] sm:$0xff]
                  %749 = vst [vmem:[%s735 + $0x30] sm:$0xff] %v748
                  %v750 = vld [vmem:[%s734 + $0x38] sm:$0xff]
                  %751 = vst [vmem:[%s735 + $0x38] sm:$0xff] %v750
                  %v752 = vld [vmem:[%s734 + $0x40] sm:$0xff]
                  %753 = vst [vmem:[%s735 + $0x40] sm:$0xff] %v752
                  %v754 = vld [vmem:[%s734 + $0x48] sm:$0xff]
                  %755 = vst [vmem:[%s735 + $0x48] sm:$0xff] %v754
                  %v756 = vld [vmem:[%s734 + $0x50] sm:$0xff]
                  %757 = vst [vmem:[%s735 + $0x50] sm:$0xff] %v756
                  %v758 = vld [vmem:[%s734 + $0x58] sm:$0xff]
                  %759 = vst [vmem:[%s735 + $0x58] sm:$0xff] %v758
                  %v760 = vld [vmem:[%s734 + $0x60] sm:$0xff]
                  %761 = vst [vmem:[%s735 + $0x60] sm:$0xff] %v760
                  %v762 = vld [vmem:[%s734 + $0x68] sm:$0xff]
                  %763 = vst [vmem:[%s735 + $0x68] sm:$0xff] %v762
                  %v764 = vld [vmem:[%s734 + $0x70] sm:$0xff]
                  %765 = vst [vmem:[%s735 + $0x70] sm:$0xff] %v764
                  %v766 = vld [vmem:[%s734 + $0x78] sm:$0xff]
                  %767 = vst [vmem:[%s735 + $0x78] sm:$0xff] %v766
                  %v768 = vld [vmem:[%s734 + $0x80] sm:$0xff]
                  %769 = vst [vmem:[%s735 + $0x80] sm:$0xff] %v768
                  %v770 = vld [vmem:[%s734 + $0x88] sm:$0xff]
                  %771 = vst [vmem:[%s735 + $0x88] sm:$0xff] %v770
                  %v772 = vld [vmem:[%s734 + $0x90] sm:$0xff]
                  %773 = vst [vmem:[%s735 + $0x90] sm:$0xff] %v772
                  %v774 = vld [vmem:[%s734 + $0x98] sm:$0xff]
                  %775 = vst [vmem:[%s735 + $0x98] sm:$0xff] %v774
                  %v776 = vld [vmem:[%s734 + $0xa0] sm:$0xff]
                  %777 = vst [vmem:[%s735 + $0xa0] sm:$0xff] %v776
                  %v778 = vld [vmem:[%s734 + $0xa8] sm:$0xff]
                  %779 = vst [vmem:[%s735 + $0xa8] sm:$0xff] %v778
                  %v780 = vld [vmem:[%s734 + $0xb0] sm:$0xff]
                  %781 = vst [vmem:[%s735 + $0xb0] sm:$0xff] %v780
                  %v782 = vld [vmem:[%s734 + $0xb8] sm:$0xff]
                  %783 = vst [vmem:[%s735 + $0xb8] sm:$0xff] %v782
                  %v784 = vld [vmem:[%s734 + $0xc0] sm:$0xff]
                  %785 = vst [vmem:[%s735 + $0xc0] sm:$0xff] %v784
                  %v786 = vld [vmem:[%s734 + $0xc8] sm:$0xff]
                  %787 = vst [vmem:[%s735 + $0xc8] sm:$0xff] %v786
                  %v788 = vld [vmem:[%s734 + $0xd0] sm:$0xff]
                  %789 = vst [vmem:[%s735 + $0xd0] sm:$0xff] %v788
                  %v790 = vld [vmem:[%s734 + $0xd8] sm:$0xff]
                  %791 = vst [vmem:[%s735 + $0xd8] sm:$0xff] %v790
                  %v792 = vld [vmem:[%s734 + $0xe0] sm:$0xff]
                  %793 = vst [vmem:[%s735 + $0xe0] sm:$0xff] %v792
                  %v794 = vld [vmem:[%s734 + $0xe8] sm:$0xff]
                  %795 = vst [vmem:[%s735 + $0xe8] sm:$0xff] %v794
                  %v796 = vld [vmem:[%s734 + $0xf0] sm:$0xff]
                  %797 = vst [vmem:[%s735 + $0xf0] sm:$0xff] %v796
                  %v798 = vld [vmem:[%s734 + $0xf8] sm:$0xff]
                  %799 = vst [vmem:[%s735 + $0xf8] sm:$0xff] %v798
                  %v800 = vld [vmem:[%s734 + $0x100] sm:$0xff]
                  %801 = vst [vmem:[%s735 + $0x100] sm:$0xff] %v800
                  %v802 = vld [vmem:[%s734 + $0x108] sm:$0xff]
                  %803 = vst [vmem:[%s735 + $0x108] sm:$0xff] %v802
                  %v804 = vld [vmem:[%s734 + $0x110] sm:$0xff]
                  %805 = vst [vmem:[%s735 + $0x110] sm:$0xff] %v804
                  %v806 = vld [vmem:[%s734 + $0x118] sm:$0xff]
                  %807 = vst [vmem:[%s735 + $0x118] sm:$0xff] %v806
                  %v808 = vld [vmem:[%s734 + $0x120] sm:$0xff]
                  %809 = vst [vmem:[%s735 + $0x120] sm:$0xff] %v808
                  %v810 = vld [vmem:[%s734 + $0x128] sm:$0xff]
                  %811 = vst [vmem:[%s735 + $0x128] sm:$0xff] %v810
                  %v812 = vld [vmem:[%s734 + $0x130] sm:$0xff]
                  %813 = vst [vmem:[%s735 + $0x130] sm:$0xff] %v812
                  %v814 = vld [vmem:[%s734 + $0x138] sm:$0xff]
                  %815 = vst [vmem:[%s735 + $0x138] sm:$0xff] %v814
                  %v816 = vld [vmem:[%s734 + $0x140] sm:$0xff]
                  %817 = vst [vmem:[%s735 + $0x140] sm:$0xff] %v816
                  %v818 = vld [vmem:[%s734 + $0x148] sm:$0xff]
                  %819 = vst [vmem:[%s735 + $0x148] sm:$0xff] %v818
                  %v820 = vld [vmem:[%s734 + $0x150] sm:$0xff]
                  %821 = vst [vmem:[%s735 + $0x150] sm:$0xff] %v820
                  %v822 = vld [vmem:[%s734 + $0x158] sm:$0xff]
                  %823 = vst [vmem:[%s735 + $0x158] sm:$0xff] %v822
                  %v824 = vld [vmem:[%s734 + $0x160] sm:$0xff]
                  %825 = vst [vmem:[%s735 + $0x160] sm:$0xff] %v824
                  %v826 = vld [vmem:[%s734 + $0x168] sm:$0xff]
                  %827 = vst [vmem:[%s735 + $0x168] sm:$0xff] %v826
                  %v828 = vld [vmem:[%s734 + $0x170] sm:$0xff]
                  %829 = vst [vmem:[%s735 + $0x170] sm:$0xff] %v828
                  %v830 = vld [vmem:[%s734 + $0x178] sm:$0xff]
                  %831 = vst [vmem:[%s735 + $0x178] sm:$0xff] %v830
                  %v832 = vld [vmem:[%s734 + $0x180] sm:$0xff]
                  %833 = vst [vmem:[%s735 + $0x180] sm:$0xff] %v832
                  %v834 = vld [vmem:[%s734 + $0x188] sm:$0xff]
                  %835 = vst [vmem:[%s735 + $0x188] sm:$0xff] %v834
                  %v836 = vld [vmem:[%s734 + $0x190] sm:$0xff]
                  %837 = vst [vmem:[%s735 + $0x190] sm:$0xff] %v836
                  %v838 = vld [vmem:[%s734 + $0x198] sm:$0xff]
                  %839 = vst [vmem:[%s735 + $0x198] sm:$0xff] %v838
                  %v840 = vld [vmem:[%s734 + $0x1a0] sm:$0xff]
                  %841 = vst [vmem:[%s735 + $0x1a0] sm:$0xff] %v840
                  %v842 = vld [vmem:[%s734 + $0x1a8] sm:$0xff]
                  %843 = vst [vmem:[%s735 + $0x1a8] sm:$0xff] %v842
                  %v844 = vld [vmem:[%s734 + $0x1b0] sm:$0xff]
                  %845 = vst [vmem:[%s735 + $0x1b0] sm:$0xff] %v844
                  %v846 = vld [vmem:[%s734 + $0x1b8] sm:$0xff]
                  %847 = vst [vmem:[%s735 + $0x1b8] sm:$0xff] %v846
                  %v848 = vld [vmem:[%s734 + $0x1c0] sm:$0xff]
                  %849 = vst [vmem:[%s735 + $0x1c0] sm:$0xff] %v848
                  %v850 = vld [vmem:[%s734 + $0x1c8] sm:$0xff]
                  %851 = vst [vmem:[%s735 + $0x1c8] sm:$0xff] %v850
                  %v852 = vld [vmem:[%s734 + $0x1d0] sm:$0xff]
                  %853 = vst [vmem:[%s735 + $0x1d0] sm:$0xff] %v852
                  %v854 = vld [vmem:[%s734 + $0x1d8] sm:$0xff]
                  %855 = vst [vmem:[%s735 + $0x1d8] sm:$0xff] %v854
                  %v856 = vld [vmem:[%s734 + $0x1e0] sm:$0xff]
                  %857 = vst [vmem:[%s735 + $0x1e0] sm:$0xff] %v856
                  %v858 = vld [vmem:[%s734 + $0x1e8] sm:$0xff]
                  %859 = vst [vmem:[%s735 + $0x1e8] sm:$0xff] %v858
                  %v860 = vld [vmem:[%s734 + $0x1f0] sm:$0xff]
                  %861 = vst [vmem:[%s735 + $0x1f0] sm:$0xff] %v860
                  %v862 = vld [vmem:[%s734 + $0x1f8] sm:$0xff]
                  %863 = vst [vmem:[%s735 + $0x1f8] sm:$0xff] %v862
                  %v864 = vld [vmem:[%s734 + $0x200] sm:$0xff]
                  %865 = vst [vmem:[%s735 + $0x200] sm:$0xff] %v864
                  %v866 = vld [vmem:[%s734 + $0x208] sm:$0xff]
                  %867 = vst [vmem:[%s735 + $0x208] sm:$0xff] %v866
                  %v868 = vld [vmem:[%s734 + $0x210] sm:$0xff]
                  %869 = vst [vmem:[%s735 + $0x210] sm:$0xff] %v868
                  %v870 = vld [vmem:[%s734 + $0x218] sm:$0xff]
                  %871 = vst [vmem:[%s735 + $0x218] sm:$0xff] %v870
                  %v872 = vld [vmem:[%s734 + $0x220] sm:$0xff]
                  %873 = vst [vmem:[%s735 + $0x220] sm:$0xff] %v872
                  %v874 = vld [vmem:[%s734 + $0x8a0] sm:$0xff]
                  %875 = vst [vmem:[%s735 + $0x228] sm:$0xff] %v874
                  %v876 = vld [vmem:[%s734 + $0x8a8] sm:$0xff]
                  %877 = vst [vmem:[%s735 + $0x230] sm:$0xff] %v876
                  %v878 = vld [vmem:[%s734 + $0x8b0] sm:$0xff]
                  %879 = vst [vmem:[%s735 + $0x238] sm:$0xff] %v878
                  %v880 = vld [vmem:[%s734 + $0x8b8] sm:$0xff]
                  %881 = vst [vmem:[%s735 + $0x240] sm:$0xff] %v880
                  %v882 = vld [vmem:[%s734 + $0x8c0] sm:$0xff]
                  %883 = vst [vmem:[%s735 + $0x248] sm:$0xff] %v882
                  %v884 = vld [vmem:[%s734 + $0x8c8] sm:$0xff]
                  %885 = vst [vmem:[%s735 + $0x250] sm:$0xff] %v884
                  %v886 = vld [vmem:[%s734 + $0x8d0] sm:$0xff]
                  %887 = vst [vmem:[%s735 + $0x258] sm:$0xff] %v886
                  %v888 = vld [vmem:[%s734 + $0x8d8] sm:$0xff]
                  %889 = vst [vmem:[%s735 + $0x260] sm:$0xff] %v888
                  %v890 = vld [vmem:[%s734 + $0x8e0] sm:$0xff]
                  %891 = vst [vmem:[%s735 + $0x268] sm:$0xff] %v890
                  %v892 = vld [vmem:[%s734 + $0x8e8] sm:$0xff]
                  %893 = vst [vmem:[%s735 + $0x270] sm:$0xff] %v892
                  %v894 = vld [vmem:[%s734 + $0x8f0] sm:$0xff]
                  %895 = vst [vmem:[%s735 + $0x278] sm:$0xff] %v894
                  %v896 = vld [vmem:[%s734 + $0x8f8] sm:$0xff]
                  %897 = vst [vmem:[%s735 + $0x280] sm:$0xff] %v896
                  %v898 = vld [vmem:[%s734 + $0x900] sm:$0xff]
                  %899 = vst [vmem:[%s735 + $0x288] sm:$0xff] %v898
                  %v900 = vld [vmem:[%s734 + $0x908] sm:$0xff]
                  %901 = vst [vmem:[%s735 + $0x290] sm:$0xff] %v900
                  %v902 = vld [vmem:[%s734 + $0x910] sm:$0xff]
                  %903 = vst [vmem:[%s735 + $0x298] sm:$0xff] %v902
                  %v904 = vld [vmem:[%s734 + $0x918] sm:$0xff]
                  %905 = vst [vmem:[%s735 + $0x2a0] sm:$0xff] %v904
                  %v906 = vld [vmem:[%s734 + $0x920] sm:$0xff]
                  %907 = vst [vmem:[%s735 + $0x2a8] sm:$0xff] %v906
                  %v908 = vld [vmem:[%s734 + $0x928] sm:$0xff]
                  %909 = vst [vmem:[%s735 + $0x2b0] sm:$0xff] %v908
                  %v910 = vld [vmem:[%s734 + $0x930] sm:$0xff]
                  %911 = vst [vmem:[%s735 + $0x2b8] sm:$0xff] %v910
                  %v912 = vld [vmem:[%s734 + $0x938] sm:$0xff]
                  %913 = vst [vmem:[%s735 + $0x2c0] sm:$0xff] %v912
                  %v914 = vld [vmem:[%s734 + $0x940] sm:$0xff]
                  %915 = vst [vmem:[%s735 + $0x2c8] sm:$0xff] %v914
                  %v916 = vld [vmem:[%s734 + $0x948] sm:$0xff]
                  %917 = vst [vmem:[%s735 + $0x2d0] sm:$0xff] %v916
                  %v918 = vld [vmem:[%s734 + $0x950] sm:$0xff]
                  %919 = vst [vmem:[%s735 + $0x2d8] sm:$0xff] %v918
                  %v920 = vld [vmem:[%s734 + $0x958] sm:$0xff]
                  %921 = vst [vmem:[%s735 + $0x2e0] sm:$0xff] %v920
                  %v922 = vld [vmem:[%s734 + $0x960] sm:$0xff]
                  %923 = vst [vmem:[%s735 + $0x2e8] sm:$0xff] %v922
                  %v924 = vld [vmem:[%s734 + $0x968] sm:$0xff]
                  %925 = vst [vmem:[%s735 + $0x2f0] sm:$0xff] %v924
                  %v926 = vld [vmem:[%s734 + $0x970] sm:$0xff]
                  %927 = vst [vmem:[%s735 + $0x2f8] sm:$0xff] %v926
                  %v928 = vld [vmem:[%s734 + $0x978] sm:$0xff]
                  %929 = vst [vmem:[%s735 + $0x300] sm:$0xff] %v928
                  %v930 = vld [vmem:[%s734 + $0x980] sm:$0xff]
                  %931 = vst [vmem:[%s735 + $0x308] sm:$0xff] %v930
                  %v932 = vld [vmem:[%s734 + $0x988] sm:$0xff]
                  %933 = vst [vmem:[%s735 + $0x310] sm:$0xff] %v932
                  %v934 = vld [vmem:[%s734 + $0x990] sm:$0xff]
                  %935 = vst [vmem:[%s735 + $0x318] sm:$0xff] %v934
                  %v936 = vld [vmem:[%s734 + $0x998] sm:$0xff]
                  %937 = vst [vmem:[%s735 + $0x320] sm:$0xff] %v936
                  %v938 = vld [vmem:[%s734 + $0x9a0] sm:$0xff]
                  %939 = vst [vmem:[%s735 + $0x328] sm:$0xff] %v938
                  %v940 = vld [vmem:[%s734 + $0x9a8] sm:$0xff]
                  %941 = vst [vmem:[%s735 + $0x330] sm:$0xff] %v940
                  %v942 = vld [vmem:[%s734 + $0x9b0] sm:$0xff]
                  %943 = vst [vmem:[%s735 + $0x338] sm:$0xff] %v942
                  %v944 = vld [vmem:[%s734 + $0x9b8] sm:$0xff]
                  %945 = vst [vmem:[%s735 + $0x340] sm:$0xff] %v944
                  %v946 = vld [vmem:[%s734 + $0x9c0] sm:$0xff]
                  %947 = vst [vmem:[%s735 + $0x348] sm:$0xff] %v946
                  %v948 = vld [vmem:[%s734 + $0x9c8] sm:$0xff]
                  %949 = vst [vmem:[%s735 + $0x350] sm:$0xff] %v948
                  %v950 = vld [vmem:[%s734 + $0x9d0] sm:$0xff]
                  %951 = vst [vmem:[%s735 + $0x358] sm:$0xff] %v950
                  %v952 = vld [vmem:[%s734 + $0x9d8] sm:$0xff]
                  %953 = vst [vmem:[%s735 + $0x360] sm:$0xff] %v952
                  %v954 = vld [vmem:[%s734 + $0x9e0] sm:$0xff]
                  %955 = vst [vmem:[%s735 + $0x368] sm:$0xff] %v954
                  %v956 = vld [vmem:[%s734 + $0x9e8] sm:$0xff]
                  %957 = vst [vmem:[%s735 + $0x370] sm:$0xff] %v956
                  %v958 = vld [vmem:[%s734 + $0x9f0] sm:$0xff]
                  %959 = vst [vmem:[%s735 + $0x378] sm:$0xff] %v958
                  %v960 = vld [vmem:[%s734 + $0x9f8] sm:$0xff]
                  %961 = vst [vmem:[%s735 + $0x380] sm:$0xff] %v960
                  %v962 = vld [vmem:[%s734 + $0xa00] sm:$0xff]
                  %963 = vst [vmem:[%s735 + $0x388] sm:$0xff] %v962
                  %v964 = vld [vmem:[%s734 + $0xa08] sm:$0xff]
                  %965 = vst [vmem:[%s735 + $0x390] sm:$0xff] %v964
                  %v966 = vld [vmem:[%s734 + $0xa10] sm:$0xff]
                  %967 = vst [vmem:[%s735 + $0x398] sm:$0xff] %v966
                  %v968 = vld [vmem:[%s734 + $0xa18] sm:$0xff]
                  %969 = vst [vmem:[%s735 + $0x3a0] sm:$0xff] %v968
                  %v970 = vld [vmem:[%s734 + $0xa20] sm:$0xff]
                  %971 = vst [vmem:[%s735 + $0x3a8] sm:$0xff] %v970
                  %v972 = vld [vmem:[%s734 + $0xa28] sm:$0xff]
                  %973 = vst [vmem:[%s735 + $0x3b0] sm:$0xff] %v972
                  %v974 = vld [vmem:[%s734 + $0xa30] sm:$0xff]
                  %975 = vst [vmem:[%s735 + $0x3b8] sm:$0xff] %v974
                  %v976 = vld [vmem:[%s734 + $0xa38] sm:$0xff]
                  %977 = vst [vmem:[%s735 + $0x3c0] sm:$0xff] %v976
                  %v978 = vld [vmem:[%s734 + $0xa40] sm:$0xff]
                  %979 = vst [vmem:[%s735 + $0x3c8] sm:$0xff] %v978
                  %v980 = vld [vmem:[%s734 + $0xa48] sm:$0xff]
                  %981 = vst [vmem:[%s735 + $0x3d0] sm:$0xff] %v980
                  %v982 = vld [vmem:[%s734 + $0xa50] sm:$0xff]
                  %983 = vst [vmem:[%s735 + $0x3d8] sm:$0xff] %v982
                  %v984 = vld [vmem:[%s734 + $0xa58] sm:$0xff]
                  %985 = vst [vmem:[%s735 + $0x3e0] sm:$0xff] %v984
                  %v986 = vld [vmem:[%s734 + $0xa60] sm:$0xff]
                  %987 = vst [vmem:[%s735 + $0x3e8] sm:$0xff] %v986
                  %v988 = vld [vmem:[%s734 + $0xa68] sm:$0xff]
                  %989 = vst [vmem:[%s735 + $0x3f0] sm:$0xff] %v988
                  %v990 = vld [vmem:[%s734 + $0xa70] sm:$0xff]
                  %991 = vst [vmem:[%s735 + $0x3f8] sm:$0xff] %v990
                  %v992 = vld [vmem:[%s734 + $0xa78] sm:$0xff]
                  %993 = vst [vmem:[%s735 + $0x400] sm:$0xff] %v992
                  %v994 = vld [vmem:[%s734 + $0xa80] sm:$0xff]
                  %995 = vst [vmem:[%s735 + $0x408] sm:$0xff] %v994
                  %v996 = vld [vmem:[%s734 + $0xa88] sm:$0xff]
                  %997 = vst [vmem:[%s735 + $0x410] sm:$0xff] %v996
                  %v998 = vld [vmem:[%s734 + $0xa90] sm:$0xff]
                  %999 = vst [vmem:[%s735 + $0x418] sm:$0xff] %v998
                  %v1000 = vld [vmem:[%s734 + $0xa98] sm:$0xff]
                  %1001 = vst [vmem:[%s735 + $0x420] sm:$0xff] %v1000
                  %v1002 = vld [vmem:[%s734 + $0xaa0] sm:$0xff]
                  %1003 = vst [vmem:[%s735 + $0x428] sm:$0xff] %v1002
                  %v1004 = vld [vmem:[%s734 + $0xaa8] sm:$0xff]
                  %1005 = vst [vmem:[%s735 + $0x430] sm:$0xff] %v1004
                  %v1006 = vld [vmem:[%s734 + $0xab0] sm:$0xff]
                  %1007 = vst [vmem:[%s735 + $0x438] sm:$0xff] %v1006
                  %v1008 = vld [vmem:[%s734 + $0xab8] sm:$0xff]
                  %1009 = vst [vmem:[%s735 + $0x440] sm:$0xff] %v1008
                  %v1010 = vld [vmem:[%s734 + $0xac0] sm:$0xff]
                  %1011 = vst [vmem:[%s735 + $0x448] sm:$0xff] %v1010
                  %v1012 = vld [vmem:[%s734 + $0x1140] sm:$0xff]
                  %1013 = vst [vmem:[%s735 + $0x450] sm:$0xff] %v1012
                  %v1014 = vld [vmem:[%s734 + $0x1148] sm:$0xff]
                  %1015 = vst [vmem:[%s735 + $0x458] sm:$0xff] %v1014
                  %v1016 = vld [vmem:[%s734 + $0x1150] sm:$0xff]
                  %1017 = vst [vmem:[%s735 + $0x460] sm:$0xff] %v1016
                  %v1018 = vld [vmem:[%s734 + $0x1158] sm:$0xff]
                  %1019 = vst [vmem:[%s735 + $0x468] sm:$0xff] %v1018
                  %v1020 = vld [vmem:[%s734 + $0x1160] sm:$0xff]
                  %1021 = vst [vmem:[%s735 + $0x470] sm:$0xff] %v1020
                  %v1022 = vld [vmem:[%s734 + $0x1168] sm:$0xff]
                  %1023 = vst [vmem:[%s735 + $0x478] sm:$0xff] %v1022
                  %v1024 = vld [vmem:[%s734 + $0x1170] sm:$0xff]
                  %1025 = vst [vmem:[%s735 + $0x480] sm:$0xff] %v1024
                  %v1026 = vld [vmem:[%s734 + $0x1178] sm:$0xff]
                  %1027 = vst [vmem:[%s735 + $0x488] sm:$0xff] %v1026
                  %v1028 = vld [vmem:[%s734 + $0x1180] sm:$0xff]
                  %1029 = vst [vmem:[%s735 + $0x490] sm:$0xff] %v1028
                  %v1030 = vld [vmem:[%s734 + $0x1188] sm:$0xff]
                  %1031 = vst [vmem:[%s735 + $0x498] sm:$0xff] %v1030
                  %v1032 = vld [vmem:[%s734 + $0x1190] sm:$0xff]
                  %1033 = vst [vmem:[%s735 + $0x4a0] sm:$0xff] %v1032
                  %v1034 = vld [vmem:[%s734 + $0x1198] sm:$0xff]
                  %1035 = vst [vmem:[%s735 + $0x4a8] sm:$0xff] %v1034
                  %v1036 = vld [vmem:[%s734 + $0x11a0] sm:$0xff]
                  %1037 = vst [vmem:[%s735 + $0x4b0] sm:$0xff] %v1036
                  %v1038 = vld [vmem:[%s734 + $0x11a8] sm:$0xff]
                  %1039 = vst [vmem:[%s735 + $0x4b8] sm:$0xff] %v1038
                  %v1040 = vld [vmem:[%s734 + $0x11b0] sm:$0xff]
                  %1041 = vst [vmem:[%s735 + $0x4c0] sm:$0xff] %v1040
                  %v1042 = vld [vmem:[%s734 + $0x11b8] sm:$0xff]
                  %1043 = vst [vmem:[%s735 + $0x4c8] sm:$0xff] %v1042
                  %v1044 = vld [vmem:[%s734 + $0x11c0] sm:$0xff]
                  %1045 = vst [vmem:[%s735 + $0x4d0] sm:$0xff] %v1044
                  %v1046 = vld [vmem:[%s734 + $0x11c8] sm:$0xff]
                  %1047 = vst [vmem:[%s735 + $0x4d8] sm:$0xff] %v1046
                  %v1048 = vld [vmem:[%s734 + $0x11d0] sm:$0xff]
                  %1049 = vst [vmem:[%s735 + $0x4e0] sm:$0xff] %v1048
                  %v1050 = vld [vmem:[%s734 + $0x11d8] sm:$0xff]
                  %1051 = vst [vmem:[%s735 + $0x4e8] sm:$0xff] %v1050
                  %v1052 = vld [vmem:[%s734 + $0x11e0] sm:$0xff]
                  %1053 = vst [vmem:[%s735 + $0x4f0] sm:$0xff] %v1052
                  %v1054 = vld [vmem:[%s734 + $0x11e8] sm:$0xff]
                  %1055 = vst [vmem:[%s735 + $0x4f8] sm:$0xff] %v1054
                  %v1056 = vld [vmem:[%s734 + $0x11f0] sm:$0xff]
                  %1057 = vst [vmem:[%s735 + $0x500] sm:$0xff] %v1056
                  %v1058 = vld [vmem:[%s734 + $0x11f8] sm:$0xff]
                  %1059 = vst [vmem:[%s735 + $0x508] sm:$0xff] %v1058
                  %v1060 = vld [vmem:[%s734 + $0x1200] sm:$0xff]
                  %1061 = vst [vmem:[%s735 + $0x510] sm:$0xff] %v1060
                  %v1062 = vld [vmem:[%s734 + $0x1208] sm:$0xff]
                  %1063 = vst [vmem:[%s735 + $0x518] sm:$0xff] %v1062
                  %v1064 = vld [vmem:[%s734 + $0x1210] sm:$0xff]
                  %1065 = vst [vmem:[%s735 + $0x520] sm:$0xff] %v1064
                  %v1066 = vld [vmem:[%s734 + $0x1218] sm:$0xff]
                  %1067 = vst [vmem:[%s735 + $0x528] sm:$0xff] %v1066
                  %v1068 = vld [vmem:[%s734 + $0x1220] sm:$0xff]
                  %1069 = vst [vmem:[%s735 + $0x530] sm:$0xff] %v1068
                  %v1070 = vld [vmem:[%s734 + $0x1228] sm:$0xff]
                  %1071 = vst [vmem:[%s735 + $0x538] sm:$0xff] %v1070
                  %v1072 = vld [vmem:[%s734 + $0x1230] sm:$0xff]
                  %1073 = vst [vmem:[%s735 + $0x540] sm:$0xff] %v1072
                  %v1074 = vld [vmem:[%s734 + $0x1238] sm:$0xff]
                  %1075 = vst [vmem:[%s735 + $0x548] sm:$0xff] %v1074
                  %v1076 = vld [vmem:[%s734 + $0x1240] sm:$0xff]
                  %1077 = vst [vmem:[%s735 + $0x550] sm:$0xff] %v1076
                  %v1078 = vld [vmem:[%s734 + $0x1248] sm:$0xff]
                  %1079 = vst [vmem:[%s735 + $0x558] sm:$0xff] %v1078
                  %v1080 = vld [vmem:[%s734 + $0x1250] sm:$0xff]
                  %1081 = vst [vmem:[%s735 + $0x560] sm:$0xff] %v1080
                  %v1082 = vld [vmem:[%s734 + $0x1258] sm:$0xff]
                  %1083 = vst [vmem:[%s735 + $0x568] sm:$0xff] %v1082
                  %v1084 = vld [vmem:[%s734 + $0x1260] sm:$0xff]
                  %1085 = vst [vmem:[%s735 + $0x570] sm:$0xff] %v1084
                  %v1086 = vld [vmem:[%s734 + $0x1268] sm:$0xff]
                  %1087 = vst [vmem:[%s735 + $0x578] sm:$0xff] %v1086
                  %v1088 = vld [vmem:[%s734 + $0x1270] sm:$0xff]
                  %1089 = vst [vmem:[%s735 + $0x580] sm:$0xff] %v1088
                  %v1090 = vld [vmem:[%s734 + $0x1278] sm:$0xff]
                  %1091 = vst [vmem:[%s735 + $0x588] sm:$0xff] %v1090
                  %v1092 = vld [vmem:[%s734 + $0x1280] sm:$0xff]
                  %1093 = vst [vmem:[%s735 + $0x590] sm:$0xff] %v1092
                  %v1094 = vld [vmem:[%s734 + $0x1288] sm:$0xff]
                  %1095 = vst [vmem:[%s735 + $0x598] sm:$0xff] %v1094
                  %v1096 = vld [vmem:[%s734 + $0x1290] sm:$0xff]
                  %1097 = vst [vmem:[%s735 + $0x5a0] sm:$0xff] %v1096
                  %v1098 = vld [vmem:[%s734 + $0x1298] sm:$0xff]
                  %1099 = vst [vmem:[%s735 + $0x5a8] sm:$0xff] %v1098
                  %v1100 = vld [vmem:[%s734 + $0x12a0] sm:$0xff]
                  %1101 = vst [vmem:[%s735 + $0x5b0] sm:$0xff] %v1100
                  %v1102 = vld [vmem:[%s734 + $0x12a8] sm:$0xff]
                  %1103 = vst [vmem:[%s735 + $0x5b8] sm:$0xff] %v1102
                  %v1104 = vld [vmem:[%s734 + $0x12b0] sm:$0xff]
                  %1105 = vst [vmem:[%s735 + $0x5c0] sm:$0xff] %v1104
                  %v1106 = vld [vmem:[%s734 + $0x12b8] sm:$0xff]
                  %1107 = vst [vmem:[%s735 + $0x5c8] sm:$0xff] %v1106
                  %v1108 = vld [vmem:[%s734 + $0x12c0] sm:$0xff]
                  %1109 = vst [vmem:[%s735 + $0x5d0] sm:$0xff] %v1108
                  %v1110 = vld [vmem:[%s734 + $0x12c8] sm:$0xff]
                  %1111 = vst [vmem:[%s735 + $0x5d8] sm:$0xff] %v1110
                  %v1112 = vld [vmem:[%s734 + $0x12d0] sm:$0xff]
                  %1113 = vst [vmem:[%s735 + $0x5e0] sm:$0xff] %v1112
                  %v1114 = vld [vmem:[%s734 + $0x12d8] sm:$0xff]
                  %1115 = vst [vmem:[%s735 + $0x5e8] sm:$0xff] %v1114
                  %v1116 = vld [vmem:[%s734 + $0x12e0] sm:$0xff]
                  %1117 = vst [vmem:[%s735 + $0x5f0] sm:$0xff] %v1116
                  %v1118 = vld [vmem:[%s734 + $0x12e8] sm:$0xff]
                  %1119 = vst [vmem:[%s735 + $0x5f8] sm:$0xff] %v1118
                  %v1120 = vld [vmem:[%s734 + $0x12f0] sm:$0xff]
                  %1121 = vst [vmem:[%s735 + $0x600] sm:$0xff] %v1120
                  %v1122 = vld [vmem:[%s734 + $0x12f8] sm:$0xff]
                  %1123 = vst [vmem:[%s735 + $0x608] sm:$0xff] %v1122
                  %v1124 = vld [vmem:[%s734 + $0x1300] sm:$0xff]
                  %1125 = vst [vmem:[%s735 + $0x610] sm:$0xff] %v1124
                  %v1126 = vld [vmem:[%s734 + $0x1308] sm:$0xff]
                  %1127 = vst [vmem:[%s735 + $0x618] sm:$0xff] %v1126
                  %v1128 = vld [vmem:[%s734 + $0x1310] sm:$0xff]
                  %1129 = vst [vmem:[%s735 + $0x620] sm:$0xff] %v1128
                  %v1130 = vld [vmem:[%s734 + $0x1318] sm:$0xff]
                  %1131 = vst [vmem:[%s735 + $0x628] sm:$0xff] %v1130
                  %v1132 = vld [vmem:[%s734 + $0x1320] sm:$0xff]
                  %1133 = vst [vmem:[%s735 + $0x630] sm:$0xff] %v1132
                  %v1134 = vld [vmem:[%s734 + $0x1328] sm:$0xff]
                  %1135 = vst [vmem:[%s735 + $0x638] sm:$0xff] %v1134
                  %v1136 = vld [vmem:[%s734 + $0x1330] sm:$0xff]
                  %1137 = vst [vmem:[%s735 + $0x640] sm:$0xff] %v1136
                  %v1138 = vld [vmem:[%s734 + $0x1338] sm:$0xff]
                  %1139 = vst [vmem:[%s735 + $0x648] sm:$0xff] %v1138
                  %v1140 = vld [vmem:[%s734 + $0x1340] sm:$0xff]
                  %1141 = vst [vmem:[%s735 + $0x650] sm:$0xff] %v1140
                  %v1142 = vld [vmem:[%s734 + $0x1348] sm:$0xff]
                  %1143 = vst [vmem:[%s735 + $0x658] sm:$0xff] %v1142
                  %v1144 = vld [vmem:[%s734 + $0x1350] sm:$0xff]
                  %1145 = vst [vmem:[%s735 + $0x660] sm:$0xff] %v1144
                  %v1146 = vld [vmem:[%s734 + $0x1358] sm:$0xff]
                  %1147 = vst [vmem:[%s735 + $0x668] sm:$0xff] %v1146
                  %v1148 = vld [vmem:[%s734 + $0x1360] sm:$0xff]
                  %1149 = vst [vmem:[%s735 + $0x670] sm:$0xff] %v1148
                  %v1150 = vld [vmem:[%s734 + $0x19e0] sm:$0xff]
                  %1151 = vst [vmem:[%s735 + $0x678] sm:$0xff] %v1150
                  %v1152 = vld [vmem:[%s734 + $0x19e8] sm:$0xff]
                  %1153 = vst [vmem:[%s735 + $0x680] sm:$0xff] %v1152
                  %v1154 = vld [vmem:[%s734 + $0x19f0] sm:$0xff]
                  %1155 = vst [vmem:[%s735 + $0x688] sm:$0xff] %v1154
                  %v1156 = vld [vmem:[%s734 + $0x19f8] sm:$0xff]
                  %1157 = vst [vmem:[%s735 + $0x690] sm:$0xff] %v1156
                  %v1158 = vld [vmem:[%s734 + $0x1a00] sm:$0xff]
                  %1159 = vst [vmem:[%s735 + $0x698] sm:$0xff] %v1158
                  %v1160 = vld [vmem:[%s734 + $0x1a08] sm:$0xff]
                  %1161 = vst [vmem:[%s735 + $0x6a0] sm:$0xff] %v1160
                  %v1162 = vld [vmem:[%s734 + $0x1a10] sm:$0xff]
                  %1163 = vst [vmem:[%s735 + $0x6a8] sm:$0xff] %v1162
                  %v1164 = vld [vmem:[%s734 + $0x1a18] sm:$0xff]
                  %1165 = vst [vmem:[%s735 + $0x6b0] sm:$0xff] %v1164
                  %v1166 = vld [vmem:[%s734 + $0x1a20] sm:$0xff]
                  %1167 = vst [vmem:[%s735 + $0x6b8] sm:$0xff] %v1166
                  %v1168 = vld [vmem:[%s734 + $0x1a28] sm:$0xff]
                  %1169 = vst [vmem:[%s735 + $0x6c0] sm:$0xff] %v1168
                  %v1170 = vld [vmem:[%s734 + $0x1a30] sm:$0xff]
                  %1171 = vst [vmem:[%s735 + $0x6c8] sm:$0xff] %v1170
                  %v1172 = vld [vmem:[%s734 + $0x1a38] sm:$0xff]
                  %1173 = vst [vmem:[%s735 + $0x6d0] sm:$0xff] %v1172
                  %v1174 = vld [vmem:[%s734 + $0x1a40] sm:$0xff]
                  %1175 = vst [vmem:[%s735 + $0x6d8] sm:$0xff] %v1174
                  %v1176 = vld [vmem:[%s734 + $0x1a48] sm:$0xff]
                  %1177 = vst [vmem:[%s735 + $0x6e0] sm:$0xff] %v1176
                  %v1178 = vld [vmem:[%s734 + $0x1a50] sm:$0xff]
                  %1179 = vst [vmem:[%s735 + $0x6e8] sm:$0xff] %v1178
                  %v1180 = vld [vmem:[%s734 + $0x1a58] sm:$0xff]
                  %1181 = vst [vmem:[%s735 + $0x6f0] sm:$0xff] %v1180
                  %v1182 = vld [vmem:[%s734 + $0x1a60] sm:$0xff]
                  %1183 = vst [vmem:[%s735 + $0x6f8] sm:$0xff] %v1182
                  %v1184 = vld [vmem:[%s734 + $0x1a68] sm:$0xff]
                  %1185 = vst [vmem:[%s735 + $0x700] sm:$0xff] %v1184
                  %v1186 = vld [vmem:[%s734 + $0x1a70] sm:$0xff]
                  %1187 = vst [vmem:[%s735 + $0x708] sm:$0xff] %v1186
                  %v1188 = vld [vmem:[%s734 + $0x1a78] sm:$0xff]
                  %1189 = vst [vmem:[%s735 + $0x710] sm:$0xff] %v1188
                  %v1190 = vld [vmem:[%s734 + $0x1a80] sm:$0xff]
                  %1191 = vst [vmem:[%s735 + $0x718] sm:$0xff] %v1190
                  %v1192 = vld [vmem:[%s734 + $0x1a88] sm:$0xff]
                  %1193 = vst [vmem:[%s735 + $0x720] sm:$0xff] %v1192
                  %v1194 = vld [vmem:[%s734 + $0x1a90] sm:$0xff]
                  %1195 = vst [vmem:[%s735 + $0x728] sm:$0xff] %v1194
                  %v1196 = vld [vmem:[%s734 + $0x1a98] sm:$0xff]
                  %1197 = vst [vmem:[%s735 + $0x730] sm:$0xff] %v1196
                  %v1198 = vld [vmem:[%s734 + $0x1aa0] sm:$0xff]
                  %1199 = vst [vmem:[%s735 + $0x738] sm:$0xff] %v1198
                  %v1200 = vld [vmem:[%s734 + $0x1aa8] sm:$0xff]
                  %1201 = vst [vmem:[%s735 + $0x740] sm:$0xff] %v1200
                  %v1202 = vld [vmem:[%s734 + $0x1ab0] sm:$0xff]
                  %1203 = vst [vmem:[%s735 + $0x748] sm:$0xff] %v1202
                  %v1204 = vld [vmem:[%s734 + $0x1ab8] sm:$0xff]
                  %1205 = vst [vmem:[%s735 + $0x750] sm:$0xff] %v1204
                  %v1206 = vld [vmem:[%s734 + $0x1ac0] sm:$0xff]
                  %1207 = vst [vmem:[%s735 + $0x758] sm:$0xff] %v1206
                  %v1208 = vld [vmem:[%s734 + $0x1ac8] sm:$0xff]
                  %1209 = vst [vmem:[%s735 + $0x760] sm:$0xff] %v1208
                  %v1210 = vld [vmem:[%s734 + $0x1ad0] sm:$0xff]
                  %1211 = vst [vmem:[%s735 + $0x768] sm:$0xff] %v1210
                  %v1212 = vld [vmem:[%s734 + $0x1ad8] sm:$0xff]
                  %1213 = vst [vmem:[%s735 + $0x770] sm:$0xff] %v1212
                  %v1214 = vld [vmem:[%s734 + $0x1ae0] sm:$0xff]
                  %1215 = vst [vmem:[%s735 + $0x778] sm:$0xff] %v1214
                  %v1216 = vld [vmem:[%s734 + $0x1ae8] sm:$0xff]
                  %1217 = vst [vmem:[%s735 + $0x780] sm:$0xff] %v1216
                  %v1218 = vld [vmem:[%s734 + $0x1af0] sm:$0xff]
                  %1219 = vst [vmem:[%s735 + $0x788] sm:$0xff] %v1218
                  %v1220 = vld [vmem:[%s734 + $0x1af8] sm:$0xff]
                  %1221 = vst [vmem:[%s735 + $0x790] sm:$0xff] %v1220
                  %v1222 = vld [vmem:[%s734 + $0x1b00] sm:$0xff]
                  %1223 = vst [vmem:[%s735 + $0x798] sm:$0xff] %v1222
                  %v1224 = vld [vmem:[%s734 + $0x1b08] sm:$0xff]
                  %1225 = vst [vmem:[%s735 + $0x7a0] sm:$0xff] %v1224
                  %v1226 = vld [vmem:[%s734 + $0x1b10] sm:$0xff]
                  %1227 = vst [vmem:[%s735 + $0x7a8] sm:$0xff] %v1226
                  %v1228 = vld [vmem:[%s734 + $0x1b18] sm:$0xff]
                  %1229 = vst [vmem:[%s735 + $0x7b0] sm:$0xff] %v1228
                  %v1230 = vld [vmem:[%s734 + $0x1b20] sm:$0xff]
                  %1231 = vst [vmem:[%s735 + $0x7b8] sm:$0xff] %v1230
                  %v1232 = vld [vmem:[%s734 + $0x1b28] sm:$0xff]
                  %1233 = vst [vmem:[%s735 + $0x7c0] sm:$0xff] %v1232
                  %v1234 = vld [vmem:[%s734 + $0x1b30] sm:$0xff]
                  %1235 = vst [vmem:[%s735 + $0x7c8] sm:$0xff] %v1234
                  %v1236 = vld [vmem:[%s734 + $0x1b38] sm:$0xff]
                  %1237 = vst [vmem:[%s735 + $0x7d0] sm:$0xff] %v1236
                  %v1238 = vld [vmem:[%s734 + $0x1b40] sm:$0xff]
                  %1239 = vst [vmem:[%s735 + $0x7d8] sm:$0xff] %v1238
                  %v1240 = vld [vmem:[%s734 + $0x1b48] sm:$0xff]
                  %1241 = vst [vmem:[%s735 + $0x7e0] sm:$0xff] %v1240
                  %v1242 = vld [vmem:[%s734 + $0x1b50] sm:$0xff]
                  %1243 = vst [vmem:[%s735 + $0x7e8] sm:$0xff] %v1242
                  %v1244 = vld [vmem:[%s734 + $0x1b58] sm:$0xff]
                  %1245 = vst [vmem:[%s735 + $0x7f0] sm:$0xff] %v1244
                  %v1246 = vld [vmem:[%s734 + $0x1b60] sm:$0xff]
                  %1247 = vst [vmem:[%s735 + $0x7f8] sm:$0xff] %v1246
                  %v1248 = vld [vmem:[%s734 + $0x1b68] sm:$0xff]
                  %1249 = vst [vmem:[%s735 + $0x800] sm:$0xff] %v1248
                  %v1250 = vld [vmem:[%s734 + $0x1b70] sm:$0xff]
                  %1251 = vst [vmem:[%s735 + $0x808] sm:$0xff] %v1250
                  %v1252 = vld [vmem:[%s734 + $0x1b78] sm:$0xff]
                  %1253 = vst [vmem:[%s735 + $0x810] sm:$0xff] %v1252
                  %v1254 = vld [vmem:[%s734 + $0x1b80] sm:$0xff]
                  %1255 = vst [vmem:[%s735 + $0x818] sm:$0xff] %v1254
                  %v1256 = vld [vmem:[%s734 + $0x1b88] sm:$0xff]
                  %1257 = vst [vmem:[%s735 + $0x820] sm:$0xff] %v1256
                  %v1258 = vld [vmem:[%s734 + $0x1b90] sm:$0xff]
                  %1259 = vst [vmem:[%s735 + $0x828] sm:$0xff] %v1258
                  %v1260 = vld [vmem:[%s734 + $0x1b98] sm:$0xff]
                  %1261 = vst [vmem:[%s735 + $0x830] sm:$0xff] %v1260
                  %v1262 = vld [vmem:[%s734 + $0x1ba0] sm:$0xff]
                  %1263 = vst [vmem:[%s735 + $0x838] sm:$0xff] %v1262
                  %v1264 = vld [vmem:[%s734 + $0x1ba8] sm:$0xff]
                  %1265 = vst [vmem:[%s735 + $0x840] sm:$0xff] %v1264
                  %v1266 = vld [vmem:[%s734 + $0x1bb0] sm:$0xff]
                  %1267 = vst [vmem:[%s735 + $0x848] sm:$0xff] %v1266
                  %v1268 = vld [vmem:[%s734 + $0x1bb8] sm:$0xff]
                  %1269 = vst [vmem:[%s735 + $0x850] sm:$0xff] %v1268
                  %v1270 = vld [vmem:[%s734 + $0x1bc0] sm:$0xff]
                  %1271 = vst [vmem:[%s735 + $0x858] sm:$0xff] %v1270
                  %v1272 = vld [vmem:[%s734 + $0x1bc8] sm:$0xff]
                  %1273 = vst [vmem:[%s735 + $0x860] sm:$0xff] %v1272
                  %v1274 = vld [vmem:[%s734 + $0x1bd0] sm:$0xff]
                  %1275 = vst [vmem:[%s735 + $0x868] sm:$0xff] %v1274
                  %v1276 = vld [vmem:[%s734 + $0x1bd8] sm:$0xff]
                  %1277 = vst [vmem:[%s735 + $0x870] sm:$0xff] %v1276
                  %v1278 = vld [vmem:[%s734 + $0x1be0] sm:$0xff]
                  %1279 = vst [vmem:[%s735 + $0x878] sm:$0xff] %v1278
                  %v1280 = vld [vmem:[%s734 + $0x1be8] sm:$0xff]
                  %1281 = vst [vmem:[%s735 + $0x880] sm:$0xff] %v1280
                  %v1282 = vld [vmem:[%s734 + $0x1bf0] sm:$0xff]
                  %1283 = vst [vmem:[%s735 + $0x888] sm:$0xff] %v1282
                  %v1284 = vld [vmem:[%s734 + $0x1bf8] sm:$0xff]
                  %1285 = vst [vmem:[%s735 + $0x890] sm:$0xff] %v1284
                  %v1286 = vld [vmem:[%s734 + $0x1c00] sm:$0xff]
                  %1287 = vst [vmem:[%s735 + $0x898] sm:$0xff] %v1286
                $region48: #{tpu_custom_call.1} parent=42 // loop_footer
                  %s733 = sadd.s32 1, %s729
                $region49: #{tpu_custom_call.1} parent=42 // loop_footer_branch
                  %728 = sbr.rel target = $region45
                $region50: #{tpu_custom_call.1} parent=42 // loop_exit
                  _
              $region43: #{tpu_custom_call.1} parent=27 // pred_fallthru
                _
              // Predicated region
              $region51: #{tpu_custom_call.1} parent=27 // pred_check
                _
              $region52: #{tpu_custom_call.1} parent=27 // pred_check_branch
                %1289 = sbr.rel target = $region54
              $region53: #{tpu_custom_call.1} parent=27 // pred_region
                _
              $region54: #{tpu_custom_call.1} parent=27 // pred_fallthru
                _
            $region28: #{tpu_custom_call.1} parent=23 // pred_fallthru
              _
            // Predicated region
            $region29: #{tpu_custom_call.1} parent=23 // pred_check
              _
            $region30: #{tpu_custom_call.1} parent=23 // pred_check_branch
              %164 = sbr.rel target = $region32
            $region31: #{tpu_custom_call.1} parent=23 // pred_region
              loop: start=0, step=1, limit=1
              $region33: #{tpu_custom_call.1} parent=31 // loop_pre_header
                _
              $region34: #{tpu_custom_call.1} parent=31 // loop_header
                %s167 = sphi 0, %s171
                %p168 = scmp.ge.s32.totalorder %s167, 1
                %s172 = sphi %s158, %s158
                %s173 = sphi %s155, %s155
              $region35: #{tpu_custom_call.1} parent=31 // loop_header_branch
                %170 = sbr.rel (%p168) target = $region39
              $region36: #{tpu_custom_call.1} parent=31 // loop_body
                %v174 = vld [vmem:[%s172] sm:$0xff]
                %175 = vst [vmem:[%s173] sm:$0xff] %v174
                %v176 = vld [vmem:[%s172 + $0x8] sm:$0xff]
                %177 = vst [vmem:[%s173 + $0x8] sm:$0xff] %v176
                %v178 = vld [vmem:[%s172 + $0x10] sm:$0xff]
                %179 = vst [vmem:[%s173 + $0x10] sm:$0xff] %v178
                %v180 = vld [vmem:[%s172 + $0x18] sm:$0xff]
                %181 = vst [vmem:[%s173 + $0x18] sm:$0xff] %v180
                %v182 = vld [vmem:[%s172 + $0x20] sm:$0xff]
                %183 = vst [vmem:[%s173 + $0x20] sm:$0xff] %v182
                %v184 = vld [vmem:[%s172 + $0x28] sm:$0xff]
                %185 = vst [vmem:[%s173 + $0x28] sm:$0xff] %v184
                %v186 = vld [vmem:[%s172 + $0x30] sm:$0xff]
                %187 = vst [vmem:[%s173 + $0x30] sm:$0xff] %v186
                %v188 = vld [vmem:[%s172 + $0x38] sm:$0xff]
                %189 = vst [vmem:[%s173 + $0x38] sm:$0xff] %v188
                %v190 = vld [vmem:[%s172 + $0x40] sm:$0xff]
                %191 = vst [vmem:[%s173 + $0x40] sm:$0xff] %v190
                %v192 = vld [vmem:[%s172 + $0x48] sm:$0xff]
                %193 = vst [vmem:[%s173 + $0x48] sm:$0xff] %v192
                %v194 = vld [vmem:[%s172 + $0x50] sm:$0xff]
                %195 = vst [vmem:[%s173 + $0x50] sm:$0xff] %v194
                %v196 = vld [vmem:[%s172 + $0x58] sm:$0xff]
                %197 = vst [vmem:[%s173 + $0x58] sm:$0xff] %v196
                %v198 = vld [vmem:[%s172 + $0x60] sm:$0xff]
                %199 = vst [vmem:[%s173 + $0x60] sm:$0xff] %v198
                %v200 = vld [vmem:[%s172 + $0x68] sm:$0xff]
                %201 = vst [vmem:[%s173 + $0x68] sm:$0xff] %v200
                %v202 = vld [vmem:[%s172 + $0x70] sm:$0xff]
                %203 = vst [vmem:[%s173 + $0x70] sm:$0xff] %v202
                %v204 = vld [vmem:[%s172 + $0x78] sm:$0xff]
                %205 = vst [vmem:[%s173 + $0x78] sm:$0xff] %v204
                %v206 = vld [vmem:[%s172 + $0x80] sm:$0xff]
                %207 = vst [vmem:[%s173 + $0x80] sm:$0xff] %v206
                %v208 = vld [vmem:[%s172 + $0x88] sm:$0xff]
                %209 = vst [vmem:[%s173 + $0x88] sm:$0xff] %v208
                %v210 = vld [vmem:[%s172 + $0x90] sm:$0xff]
                %211 = vst [vmem:[%s173 + $0x90] sm:$0xff] %v210
                %v212 = vld [vmem:[%s172 + $0x98] sm:$0xff]
                %213 = vst [vmem:[%s173 + $0x98] sm:$0xff] %v212
                %v214 = vld [vmem:[%s172 + $0xa0] sm:$0xff]
                %215 = vst [vmem:[%s173 + $0xa0] sm:$0xff] %v214
                %v216 = vld [vmem:[%s172 + $0xa8] sm:$0xff]
                %217 = vst [vmem:[%s173 + $0xa8] sm:$0xff] %v216
                %v218 = vld [vmem:[%s172 + $0xb0] sm:$0xff]
                %219 = vst [vmem:[%s173 + $0xb0] sm:$0xff] %v218
                %v220 = vld [vmem:[%s172 + $0xb8] sm:$0xff]
                %221 = vst [vmem:[%s173 + $0xb8] sm:$0xff] %v220
                %v222 = vld [vmem:[%s172 + $0xc0] sm:$0xff]
                %223 = vst [vmem:[%s173 + $0xc0] sm:$0xff] %v222
                %v224 = vld [vmem:[%s172 + $0xc8] sm:$0xff]
                %225 = vst [vmem:[%s173 + $0xc8] sm:$0xff] %v224
                %v226 = vld [vmem:[%s172 + $0xd0] sm:$0xff]
                %227 = vst [vmem:[%s173 + $0xd0] sm:$0xff] %v226
                %v228 = vld [vmem:[%s172 + $0xd8] sm:$0xff]
                %229 = vst [vmem:[%s173 + $0xd8] sm:$0xff] %v228
                %v230 = vld [vmem:[%s172 + $0xe0] sm:$0xff]
                %231 = vst [vmem:[%s173 + $0xe0] sm:$0xff] %v230
                %v232 = vld [vmem:[%s172 + $0xe8] sm:$0xff]
                %233 = vst [vmem:[%s173 + $0xe8] sm:$0xff] %v232
                %v234 = vld [vmem:[%s172 + $0xf0] sm:$0xff]
                %235 = vst [vmem:[%s173 + $0xf0] sm:$0xff] %v234
                %v236 = vld [vmem:[%s172 + $0xf8] sm:$0xff]
                %237 = vst [vmem:[%s173 + $0xf8] sm:$0xff] %v236
                %v238 = vld [vmem:[%s172 + $0x100] sm:$0xff]
                %239 = vst [vmem:[%s173 + $0x100] sm:$0xff] %v238
                %v240 = vld [vmem:[%s172 + $0x108] sm:$0xff]
                %241 = vst [vmem:[%s173 + $0x108] sm:$0xff] %v240
                %v242 = vld [vmem:[%s172 + $0x110] sm:$0xff]
                %243 = vst [vmem:[%s173 + $0x110] sm:$0xff] %v242
                %v244 = vld [vmem:[%s172 + $0x118] sm:$0xff]
                %245 = vst [vmem:[%s173 + $0x118] sm:$0xff] %v244
                %v246 = vld [vmem:[%s172 + $0x120] sm:$0xff]
                %247 = vst [vmem:[%s173 + $0x120] sm:$0xff] %v246
                %v248 = vld [vmem:[%s172 + $0x128] sm:$0xff]
                %249 = vst [vmem:[%s173 + $0x128] sm:$0xff] %v248
                %v250 = vld [vmem:[%s172 + $0x130] sm:$0xff]
                %251 = vst [vmem:[%s173 + $0x130] sm:$0xff] %v250
                %v252 = vld [vmem:[%s172 + $0x138] sm:$0xff]
                %253 = vst [vmem:[%s173 + $0x138] sm:$0xff] %v252
                %v254 = vld [vmem:[%s172 + $0x140] sm:$0xff]
                %255 = vst [vmem:[%s173 + $0x140] sm:$0xff] %v254
                %v256 = vld [vmem:[%s172 + $0x148] sm:$0xff]
                %257 = vst [vmem:[%s173 + $0x148] sm:$0xff] %v256
                %v258 = vld [vmem:[%s172 + $0x150] sm:$0xff]
                %259 = vst [vmem:[%s173 + $0x150] sm:$0xff] %v258
                %v260 = vld [vmem:[%s172 + $0x158] sm:$0xff]
                %261 = vst [vmem:[%s173 + $0x158] sm:$0xff] %v260
                %v262 = vld [vmem:[%s172 + $0x160] sm:$0xff]
                %263 = vst [vmem:[%s173 + $0x160] sm:$0xff] %v262
                %v264 = vld [vmem:[%s172 + $0x168] sm:$0xff]
                %265 = vst [vmem:[%s173 + $0x168] sm:$0xff] %v264
                %v266 = vld [vmem:[%s172 + $0x170] sm:$0xff]
                %267 = vst [vmem:[%s173 + $0x170] sm:$0xff] %v266
                %v268 = vld [vmem:[%s172 + $0x178] sm:$0xff]
                %269 = vst [vmem:[%s173 + $0x178] sm:$0xff] %v268
                %v270 = vld [vmem:[%s172 + $0x180] sm:$0xff]
                %271 = vst [vmem:[%s173 + $0x180] sm:$0xff] %v270
                %v272 = vld [vmem:[%s172 + $0x188] sm:$0xff]
                %273 = vst [vmem:[%s173 + $0x188] sm:$0xff] %v272
                %v274 = vld [vmem:[%s172 + $0x190] sm:$0xff]
                %275 = vst [vmem:[%s173 + $0x190] sm:$0xff] %v274
                %v276 = vld [vmem:[%s172 + $0x198] sm:$0xff]
                %277 = vst [vmem:[%s173 + $0x198] sm:$0xff] %v276
                %v278 = vld [vmem:[%s172 + $0x1a0] sm:$0xff]
                %279 = vst [vmem:[%s173 + $0x1a0] sm:$0xff] %v278
                %v280 = vld [vmem:[%s172 + $0x1a8] sm:$0xff]
                %281 = vst [vmem:[%s173 + $0x1a8] sm:$0xff] %v280
                %v282 = vld [vmem:[%s172 + $0x1b0] sm:$0xff]
                %283 = vst [vmem:[%s173 + $0x1b0] sm:$0xff] %v282
                %v284 = vld [vmem:[%s172 + $0x1b8] sm:$0xff]
                %285 = vst [vmem:[%s173 + $0x1b8] sm:$0xff] %v284
                %v286 = vld [vmem:[%s172 + $0x1c0] sm:$0xff]
                %287 = vst [vmem:[%s173 + $0x1c0] sm:$0xff] %v286
                %v288 = vld [vmem:[%s172 + $0x1c8] sm:$0xff]
                %289 = vst [vmem:[%s173 + $0x1c8] sm:$0xff] %v288
                %v290 = vld [vmem:[%s172 + $0x1d0] sm:$0xff]
                %291 = vst [vmem:[%s173 + $0x1d0] sm:$0xff] %v290
                %v292 = vld [vmem:[%s172 + $0x1d8] sm:$0xff]
                %293 = vst [vmem:[%s173 + $0x1d8] sm:$0xff] %v292
                %v294 = vld [vmem:[%s172 + $0x1e0] sm:$0xff]
                %295 = vst [vmem:[%s173 + $0x1e0] sm:$0xff] %v294
                %v296 = vld [vmem:[%s172 + $0x1e8] sm:$0xff]
                %297 = vst [vmem:[%s173 + $0x1e8] sm:$0xff] %v296
                %v298 = vld [vmem:[%s172 + $0x1f0] sm:$0xff]
                %299 = vst [vmem:[%s173 + $0x1f0] sm:$0xff] %v298
                %v300 = vld [vmem:[%s172 + $0x1f8] sm:$0xff]
                %301 = vst [vmem:[%s173 + $0x1f8] sm:$0xff] %v300
                %v302 = vld [vmem:[%s172 + $0x200] sm:$0xff]
                %303 = vst [vmem:[%s173 + $0x200] sm:$0xff] %v302
                %v304 = vld [vmem:[%s172 + $0x208] sm:$0xff]
                %305 = vst [vmem:[%s173 + $0x208] sm:$0xff] %v304
                %v306 = vld [vmem:[%s172 + $0x210] sm:$0xff]
                %307 = vst [vmem:[%s173 + $0x210] sm:$0xff] %v306
                %v308 = vld [vmem:[%s172 + $0x218] sm:$0xff]
                %309 = vst [vmem:[%s173 + $0x218] sm:$0xff] %v308
                %v310 = vld [vmem:[%s172 + $0x220] sm:$0xff]
                %311 = vst [vmem:[%s173 + $0x220] sm:$0xff] %v310
                %v312 = vld [vmem:[%s172 + $0x8a0] sm:$0xff]
                %313 = vst [vmem:[%s173 + $0x228] sm:$0xff] %v312
                %v314 = vld [vmem:[%s172 + $0x8a8] sm:$0xff]
                %315 = vst [vmem:[%s173 + $0x230] sm:$0xff] %v314
                %v316 = vld [vmem:[%s172 + $0x8b0] sm:$0xff]
                %317 = vst [vmem:[%s173 + $0x238] sm:$0xff] %v316
                %v318 = vld [vmem:[%s172 + $0x8b8] sm:$0xff]
                %319 = vst [vmem:[%s173 + $0x240] sm:$0xff] %v318
                %v320 = vld [vmem:[%s172 + $0x8c0] sm:$0xff]
                %321 = vst [vmem:[%s173 + $0x248] sm:$0xff] %v320
                %v322 = vld [vmem:[%s172 + $0x8c8] sm:$0xff]
                %323 = vst [vmem:[%s173 + $0x250] sm:$0xff] %v322
                %v324 = vld [vmem:[%s172 + $0x8d0] sm:$0xff]
                %325 = vst [vmem:[%s173 + $0x258] sm:$0xff] %v324
                %v326 = vld [vmem:[%s172 + $0x8d8] sm:$0xff]
                %327 = vst [vmem:[%s173 + $0x260] sm:$0xff] %v326
                %v328 = vld [vmem:[%s172 + $0x8e0] sm:$0xff]
                %329 = vst [vmem:[%s173 + $0x268] sm:$0xff] %v328
                %v330 = vld [vmem:[%s172 + $0x8e8] sm:$0xff]
                %331 = vst [vmem:[%s173 + $0x270] sm:$0xff] %v330
                %v332 = vld [vmem:[%s172 + $0x8f0] sm:$0xff]
                %333 = vst [vmem:[%s173 + $0x278] sm:$0xff] %v332
                %v334 = vld [vmem:[%s172 + $0x8f8] sm:$0xff]
                %335 = vst [vmem:[%s173 + $0x280] sm:$0xff] %v334
                %v336 = vld [vmem:[%s172 + $0x900] sm:$0xff]
                %337 = vst [vmem:[%s173 + $0x288] sm:$0xff] %v336
                %v338 = vld [vmem:[%s172 + $0x908] sm:$0xff]
                %339 = vst [vmem:[%s173 + $0x290] sm:$0xff] %v338
                %v340 = vld [vmem:[%s172 + $0x910] sm:$0xff]
                %341 = vst [vmem:[%s173 + $0x298] sm:$0xff] %v340
                %v342 = vld [vmem:[%s172 + $0x918] sm:$0xff]
                %343 = vst [vmem:[%s173 + $0x2a0] sm:$0xff] %v342
                %v344 = vld [vmem:[%s172 + $0x920] sm:$0xff]
                %345 = vst [vmem:[%s173 + $0x2a8] sm:$0xff] %v344
                %v346 = vld [vmem:[%s172 + $0x928] sm:$0xff]
                %347 = vst [vmem:[%s173 + $0x2b0] sm:$0xff] %v346
                %v348 = vld [vmem:[%s172 + $0x930] sm:$0xff]
                %349 = vst [vmem:[%s173 + $0x2b8] sm:$0xff] %v348
                %v350 = vld [vmem:[%s172 + $0x938] sm:$0xff]
                %351 = vst [vmem:[%s173 + $0x2c0] sm:$0xff] %v350
                %v352 = vld [vmem:[%s172 + $0x940] sm:$0xff]
                %353 = vst [vmem:[%s173 + $0x2c8] sm:$0xff] %v352
                %v354 = vld [vmem:[%s172 + $0x948] sm:$0xff]
                %355 = vst [vmem:[%s173 + $0x2d0] sm:$0xff] %v354
                %v356 = vld [vmem:[%s172 + $0x950] sm:$0xff]
                %357 = vst [vmem:[%s173 + $0x2d8] sm:$0xff] %v356
                %v358 = vld [vmem:[%s172 + $0x958] sm:$0xff]
                %359 = vst [vmem:[%s173 + $0x2e0] sm:$0xff] %v358
                %v360 = vld [vmem:[%s172 + $0x960] sm:$0xff]
                %361 = vst [vmem:[%s173 + $0x2e8] sm:$0xff] %v360
                %v362 = vld [vmem:[%s172 + $0x968] sm:$0xff]
                %363 = vst [vmem:[%s173 + $0x2f0] sm:$0xff] %v362
                %v364 = vld [vmem:[%s172 + $0x970] sm:$0xff]
                %365 = vst [vmem:[%s173 + $0x2f8] sm:$0xff] %v364
                %v366 = vld [vmem:[%s172 + $0x978] sm:$0xff]
                %367 = vst [vmem:[%s173 + $0x300] sm:$0xff] %v366
                %v368 = vld [vmem:[%s172 + $0x980] sm:$0xff]
                %369 = vst [vmem:[%s173 + $0x308] sm:$0xff] %v368
                %v370 = vld [vmem:[%s172 + $0x988] sm:$0xff]
                %371 = vst [vmem:[%s173 + $0x310] sm:$0xff] %v370
                %v372 = vld [vmem:[%s172 + $0x990] sm:$0xff]
                %373 = vst [vmem:[%s173 + $0x318] sm:$0xff] %v372
                %v374 = vld [vmem:[%s172 + $0x998] sm:$0xff]
                %375 = vst [vmem:[%s173 + $0x320] sm:$0xff] %v374
                %v376 = vld [vmem:[%s172 + $0x9a0] sm:$0xff]
                %377 = vst [vmem:[%s173 + $0x328] sm:$0xff] %v376
                %v378 = vld [vmem:[%s172 + $0x9a8] sm:$0xff]
                %379 = vst [vmem:[%s173 + $0x330] sm:$0xff] %v378
                %v380 = vld [vmem:[%s172 + $0x9b0] sm:$0xff]
                %381 = vst [vmem:[%s173 + $0x338] sm:$0xff] %v380
                %v382 = vld [vmem:[%s172 + $0x9b8] sm:$0xff]
                %383 = vst [vmem:[%s173 + $0x340] sm:$0xff] %v382
                %v384 = vld [vmem:[%s172 + $0x9c0] sm:$0xff]
                %385 = vst [vmem:[%s173 + $0x348] sm:$0xff] %v384
                %v386 = vld [vmem:[%s172 + $0x9c8] sm:$0xff]
                %387 = vst [vmem:[%s173 + $0x350] sm:$0xff] %v386
                %v388 = vld [vmem:[%s172 + $0x9d0] sm:$0xff]
                %389 = vst [vmem:[%s173 + $0x358] sm:$0xff] %v388
                %v390 = vld [vmem:[%s172 + $0x9d8] sm:$0xff]
                %391 = vst [vmem:[%s173 + $0x360] sm:$0xff] %v390
                %v392 = vld [vmem:[%s172 + $0x9e0] sm:$0xff]
                %393 = vst [vmem:[%s173 + $0x368] sm:$0xff] %v392
                %v394 = vld [vmem:[%s172 + $0x9e8] sm:$0xff]
                %395 = vst [vmem:[%s173 + $0x370] sm:$0xff] %v394
                %v396 = vld [vmem:[%s172 + $0x9f0] sm:$0xff]
                %397 = vst [vmem:[%s173 + $0x378] sm:$0xff] %v396
                %v398 = vld [vmem:[%s172 + $0x9f8] sm:$0xff]
                %399 = vst [vmem:[%s173 + $0x380] sm:$0xff] %v398
                %v400 = vld [vmem:[%s172 + $0xa00] sm:$0xff]
                %401 = vst [vmem:[%s173 + $0x388] sm:$0xff] %v400
                %v402 = vld [vmem:[%s172 + $0xa08] sm:$0xff]
                %403 = vst [vmem:[%s173 + $0x390] sm:$0xff] %v402
                %v404 = vld [vmem:[%s172 + $0xa10] sm:$0xff]
                %405 = vst [vmem:[%s173 + $0x398] sm:$0xff] %v404
                %v406 = vld [vmem:[%s172 + $0xa18] sm:$0xff]
                %407 = vst [vmem:[%s173 + $0x3a0] sm:$0xff] %v406
                %v408 = vld [vmem:[%s172 + $0xa20] sm:$0xff]
                %409 = vst [vmem:[%s173 + $0x3a8] sm:$0xff] %v408
                %v410 = vld [vmem:[%s172 + $0xa28] sm:$0xff]
                %411 = vst [vmem:[%s173 + $0x3b0] sm:$0xff] %v410
                %v412 = vld [vmem:[%s172 + $0xa30] sm:$0xff]
                %413 = vst [vmem:[%s173 + $0x3b8] sm:$0xff] %v412
                %v414 = vld [vmem:[%s172 + $0xa38] sm:$0xff]
                %415 = vst [vmem:[%s173 + $0x3c0] sm:$0xff] %v414
                %v416 = vld [vmem:[%s172 + $0xa40] sm:$0xff]
                %417 = vst [vmem:[%s173 + $0x3c8] sm:$0xff] %v416
                %v418 = vld [vmem:[%s172 + $0xa48] sm:$0xff]
                %419 = vst [vmem:[%s173 + $0x3d0] sm:$0xff] %v418
                %v420 = vld [vmem:[%s172 + $0xa50] sm:$0xff]
                %421 = vst [vmem:[%s173 + $0x3d8] sm:$0xff] %v420
                %v422 = vld [vmem:[%s172 + $0xa58] sm:$0xff]
                %423 = vst [vmem:[%s173 + $0x3e0] sm:$0xff] %v422
                %v424 = vld [vmem:[%s172 + $0xa60] sm:$0xff]
                %425 = vst [vmem:[%s173 + $0x3e8] sm:$0xff] %v424
                %v426 = vld [vmem:[%s172 + $0xa68] sm:$0xff]
                %427 = vst [vmem:[%s173 + $0x3f0] sm:$0xff] %v426
                %v428 = vld [vmem:[%s172 + $0xa70] sm:$0xff]
                %429 = vst [vmem:[%s173 + $0x3f8] sm:$0xff] %v428
                %v430 = vld [vmem:[%s172 + $0xa78] sm:$0xff]
                %431 = vst [vmem:[%s173 + $0x400] sm:$0xff] %v430
                %v432 = vld [vmem:[%s172 + $0xa80] sm:$0xff]
                %433 = vst [vmem:[%s173 + $0x408] sm:$0xff] %v432
                %v434 = vld [vmem:[%s172 + $0xa88] sm:$0xff]
                %435 = vst [vmem:[%s173 + $0x410] sm:$0xff] %v434
                %v436 = vld [vmem:[%s172 + $0xa90] sm:$0xff]
                %437 = vst [vmem:[%s173 + $0x418] sm:$0xff] %v436
                %v438 = vld [vmem:[%s172 + $0xa98] sm:$0xff]
                %439 = vst [vmem:[%s173 + $0x420] sm:$0xff] %v438
                %v440 = vld [vmem:[%s172 + $0xaa0] sm:$0xff]
                %441 = vst [vmem:[%s173 + $0x428] sm:$0xff] %v440
                %v442 = vld [vmem:[%s172 + $0xaa8] sm:$0xff]
                %443 = vst [vmem:[%s173 + $0x430] sm:$0xff] %v442
                %v444 = vld [vmem:[%s172 + $0xab0] sm:$0xff]
                %445 = vst [vmem:[%s173 + $0x438] sm:$0xff] %v444
                %v446 = vld [vmem:[%s172 + $0xab8] sm:$0xff]
                %447 = vst [vmem:[%s173 + $0x440] sm:$0xff] %v446
                %v448 = vld [vmem:[%s172 + $0xac0] sm:$0xff]
                %449 = vst [vmem:[%s173 + $0x448] sm:$0xff] %v448
                %v450 = vld [vmem:[%s172 + $0x1140] sm:$0xff]
                %451 = vst [vmem:[%s173 + $0x450] sm:$0xff] %v450
                %v452 = vld [vmem:[%s172 + $0x1148] sm:$0xff]
                %453 = vst [vmem:[%s173 + $0x458] sm:$0xff] %v452
                %v454 = vld [vmem:[%s172 + $0x1150] sm:$0xff]
                %455 = vst [vmem:[%s173 + $0x460] sm:$0xff] %v454
                %v456 = vld [vmem:[%s172 + $0x1158] sm:$0xff]
                %457 = vst [vmem:[%s173 + $0x468] sm:$0xff] %v456
                %v458 = vld [vmem:[%s172 + $0x1160] sm:$0xff]
                %459 = vst [vmem:[%s173 + $0x470] sm:$0xff] %v458
                %v460 = vld [vmem:[%s172 + $0x1168] sm:$0xff]
                %461 = vst [vmem:[%s173 + $0x478] sm:$0xff] %v460
                %v462 = vld [vmem:[%s172 + $0x1170] sm:$0xff]
                %463 = vst [vmem:[%s173 + $0x480] sm:$0xff] %v462
                %v464 = vld [vmem:[%s172 + $0x1178] sm:$0xff]
                %465 = vst [vmem:[%s173 + $0x488] sm:$0xff] %v464
                %v466 = vld [vmem:[%s172 + $0x1180] sm:$0xff]
                %467 = vst [vmem:[%s173 + $0x490] sm:$0xff] %v466
                %v468 = vld [vmem:[%s172 + $0x1188] sm:$0xff]
                %469 = vst [vmem:[%s173 + $0x498] sm:$0xff] %v468
                %v470 = vld [vmem:[%s172 + $0x1190] sm:$0xff]
                %471 = vst [vmem:[%s173 + $0x4a0] sm:$0xff] %v470
                %v472 = vld [vmem:[%s172 + $0x1198] sm:$0xff]
                %473 = vst [vmem:[%s173 + $0x4a8] sm:$0xff] %v472
                %v474 = vld [vmem:[%s172 + $0x11a0] sm:$0xff]
                %475 = vst [vmem:[%s173 + $0x4b0] sm:$0xff] %v474
                %v476 = vld [vmem:[%s172 + $0x11a8] sm:$0xff]
                %477 = vst [vmem:[%s173 + $0x4b8] sm:$0xff] %v476
                %v478 = vld [vmem:[%s172 + $0x11b0] sm:$0xff]
                %479 = vst [vmem:[%s173 + $0x4c0] sm:$0xff] %v478
                %v480 = vld [vmem:[%s172 + $0x11b8] sm:$0xff]
                %481 = vst [vmem:[%s173 + $0x4c8] sm:$0xff] %v480
                %v482 = vld [vmem:[%s172 + $0x11c0] sm:$0xff]
                %483 = vst [vmem:[%s173 + $0x4d0] sm:$0xff] %v482
                %v484 = vld [vmem:[%s172 + $0x11c8] sm:$0xff]
                %485 = vst [vmem:[%s173 + $0x4d8] sm:$0xff] %v484
                %v486 = vld [vmem:[%s172 + $0x11d0] sm:$0xff]
                %487 = vst [vmem:[%s173 + $0x4e0] sm:$0xff] %v486
                %v488 = vld [vmem:[%s172 + $0x11d8] sm:$0xff]
                %489 = vst [vmem:[%s173 + $0x4e8] sm:$0xff] %v488
                %v490 = vld [vmem:[%s172 + $0x11e0] sm:$0xff]
                %491 = vst [vmem:[%s173 + $0x4f0] sm:$0xff] %v490
                %v492 = vld [vmem:[%s172 + $0x11e8] sm:$0xff]
                %493 = vst [vmem:[%s173 + $0x4f8] sm:$0xff] %v492
                %v494 = vld [vmem:[%s172 + $0x11f0] sm:$0xff]
                %495 = vst [vmem:[%s173 + $0x500] sm:$0xff] %v494
                %v496 = vld [vmem:[%s172 + $0x11f8] sm:$0xff]
                %497 = vst [vmem:[%s173 + $0x508] sm:$0xff] %v496
                %v498 = vld [vmem:[%s172 + $0x1200] sm:$0xff]
                %499 = vst [vmem:[%s173 + $0x510] sm:$0xff] %v498
                %v500 = vld [vmem:[%s172 + $0x1208] sm:$0xff]
                %501 = vst [vmem:[%s173 + $0x518] sm:$0xff] %v500
                %v502 = vld [vmem:[%s172 + $0x1210] sm:$0xff]
                %503 = vst [vmem:[%s173 + $0x520] sm:$0xff] %v502
                %v504 = vld [vmem:[%s172 + $0x1218] sm:$0xff]
                %505 = vst [vmem:[%s173 + $0x528] sm:$0xff] %v504
                %v506 = vld [vmem:[%s172 + $0x1220] sm:$0xff]
                %507 = vst [vmem:[%s173 + $0x530] sm:$0xff] %v506
                %v508 = vld [vmem:[%s172 + $0x1228] sm:$0xff]
                %509 = vst [vmem:[%s173 + $0x538] sm:$0xff] %v508
                %v510 = vld [vmem:[%s172 + $0x1230] sm:$0xff]
                %511 = vst [vmem:[%s173 + $0x540] sm:$0xff] %v510
                %v512 = vld [vmem:[%s172 + $0x1238] sm:$0xff]
                %513 = vst [vmem:[%s173 + $0x548] sm:$0xff] %v512
                %v514 = vld [vmem:[%s172 + $0x1240] sm:$0xff]
                %515 = vst [vmem:[%s173 + $0x550] sm:$0xff] %v514
                %v516 = vld [vmem:[%s172 + $0x1248] sm:$0xff]
                %517 = vst [vmem:[%s173 + $0x558] sm:$0xff] %v516
                %v518 = vld [vmem:[%s172 + $0x1250] sm:$0xff]
                %519 = vst [vmem:[%s173 + $0x560] sm:$0xff] %v518
                %v520 = vld [vmem:[%s172 + $0x1258] sm:$0xff]
                %521 = vst [vmem:[%s173 + $0x568] sm:$0xff] %v520
                %v522 = vld [vmem:[%s172 + $0x1260] sm:$0xff]
                %523 = vst [vmem:[%s173 + $0x570] sm:$0xff] %v522
                %v524 = vld [vmem:[%s172 + $0x1268] sm:$0xff]
                %525 = vst [vmem:[%s173 + $0x578] sm:$0xff] %v524
                %v526 = vld [vmem:[%s172 + $0x1270] sm:$0xff]
                %527 = vst [vmem:[%s173 + $0x580] sm:$0xff] %v526
                %v528 = vld [vmem:[%s172 + $0x1278] sm:$0xff]
                %529 = vst [vmem:[%s173 + $0x588] sm:$0xff] %v528
                %v530 = vld [vmem:[%s172 + $0x1280] sm:$0xff]
                %531 = vst [vmem:[%s173 + $0x590] sm:$0xff] %v530
                %v532 = vld [vmem:[%s172 + $0x1288] sm:$0xff]
                %533 = vst [vmem:[%s173 + $0x598] sm:$0xff] %v532
                %v534 = vld [vmem:[%s172 + $0x1290] sm:$0xff]
                %535 = vst [vmem:[%s173 + $0x5a0] sm:$0xff] %v534
                %v536 = vld [vmem:[%s172 + $0x1298] sm:$0xff]
                %537 = vst [vmem:[%s173 + $0x5a8] sm:$0xff] %v536
                %v538 = vld [vmem:[%s172 + $0x12a0] sm:$0xff]
                %539 = vst [vmem:[%s173 + $0x5b0] sm:$0xff] %v538
                %v540 = vld [vmem:[%s172 + $0x12a8] sm:$0xff]
                %541 = vst [vmem:[%s173 + $0x5b8] sm:$0xff] %v540
                %v542 = vld [vmem:[%s172 + $0x12b0] sm:$0xff]
                %543 = vst [vmem:[%s173 + $0x5c0] sm:$0xff] %v542
                %v544 = vld [vmem:[%s172 + $0x12b8] sm:$0xff]
                %545 = vst [vmem:[%s173 + $0x5c8] sm:$0xff] %v544
                %v546 = vld [vmem:[%s172 + $0x12c0] sm:$0xff]
                %547 = vst [vmem:[%s173 + $0x5d0] sm:$0xff] %v546
                %v548 = vld [vmem:[%s172 + $0x12c8] sm:$0xff]
                %549 = vst [vmem:[%s173 + $0x5d8] sm:$0xff] %v548
                %v550 = vld [vmem:[%s172 + $0x12d0] sm:$0xff]
                %551 = vst [vmem:[%s173 + $0x5e0] sm:$0xff] %v550
                %v552 = vld [vmem:[%s172 + $0x12d8] sm:$0xff]
                %553 = vst [vmem:[%s173 + $0x5e8] sm:$0xff] %v552
                %v554 = vld [vmem:[%s172 + $0x12e0] sm:$0xff]
                %555 = vst [vmem:[%s173 + $0x5f0] sm:$0xff] %v554
                %v556 = vld [vmem:[%s172 + $0x12e8] sm:$0xff]
                %557 = vst [vmem:[%s173 + $0x5f8] sm:$0xff] %v556
                %v558 = vld [vmem:[%s172 + $0x12f0] sm:$0xff]
                %559 = vst [vmem:[%s173 + $0x600] sm:$0xff] %v558
                %v560 = vld [vmem:[%s172 + $0x12f8] sm:$0xff]
                %561 = vst [vmem:[%s173 + $0x608] sm:$0xff] %v560
                %v562 = vld [vmem:[%s172 + $0x1300] sm:$0xff]
                %563 = vst [vmem:[%s173 + $0x610] sm:$0xff] %v562
                %v564 = vld [vmem:[%s172 + $0x1308] sm:$0xff]
                %565 = vst [vmem:[%s173 + $0x618] sm:$0xff] %v564
                %v566 = vld [vmem:[%s172 + $0x1310] sm:$0xff]
                %567 = vst [vmem:[%s173 + $0x620] sm:$0xff] %v566
                %v568 = vld [vmem:[%s172 + $0x1318] sm:$0xff]
                %569 = vst [vmem:[%s173 + $0x628] sm:$0xff] %v568
                %v570 = vld [vmem:[%s172 + $0x1320] sm:$0xff]
                %571 = vst [vmem:[%s173 + $0x630] sm:$0xff] %v570
                %v572 = vld [vmem:[%s172 + $0x1328] sm:$0xff]
                %573 = vst [vmem:[%s173 + $0x638] sm:$0xff] %v572
                %v574 = vld [vmem:[%s172 + $0x1330] sm:$0xff]
                %575 = vst [vmem:[%s173 + $0x640] sm:$0xff] %v574
                %v576 = vld [vmem:[%s172 + $0x1338] sm:$0xff]
                %577 = vst [vmem:[%s173 + $0x648] sm:$0xff] %v576
                %v578 = vld [vmem:[%s172 + $0x1340] sm:$0xff]
                %579 = vst [vmem:[%s173 + $0x650] sm:$0xff] %v578
                %v580 = vld [vmem:[%s172 + $0x1348] sm:$0xff]
                %581 = vst [vmem:[%s173 + $0x658] sm:$0xff] %v580
                %v582 = vld [vmem:[%s172 + $0x1350] sm:$0xff]
                %583 = vst [vmem:[%s173 + $0x660] sm:$0xff] %v582
                %v584 = vld [vmem:[%s172 + $0x1358] sm:$0xff]
                %585 = vst [vmem:[%s173 + $0x668] sm:$0xff] %v584
                %v586 = vld [vmem:[%s172 + $0x1360] sm:$0xff]
                %587 = vst [vmem:[%s173 + $0x670] sm:$0xff] %v586
                %v588 = vld [vmem:[%s172 + $0x19e0] sm:$0xff]
                %589 = vst [vmem:[%s173 + $0x678] sm:$0xff] %v588
                %v590 = vld [vmem:[%s172 + $0x19e8] sm:$0xff]
                %591 = vst [vmem:[%s173 + $0x680] sm:$0xff] %v590
                %v592 = vld [vmem:[%s172 + $0x19f0] sm:$0xff]
                %593 = vst [vmem:[%s173 + $0x688] sm:$0xff] %v592
                %v594 = vld [vmem:[%s172 + $0x19f8] sm:$0xff]
                %595 = vst [vmem:[%s173 + $0x690] sm:$0xff] %v594
                %v596 = vld [vmem:[%s172 + $0x1a00] sm:$0xff]
                %597 = vst [vmem:[%s173 + $0x698] sm:$0xff] %v596
                %v598 = vld [vmem:[%s172 + $0x1a08] sm:$0xff]
                %599 = vst [vmem:[%s173 + $0x6a0] sm:$0xff] %v598
                %v600 = vld [vmem:[%s172 + $0x1a10] sm:$0xff]
                %601 = vst [vmem:[%s173 + $0x6a8] sm:$0xff] %v600
                %v602 = vld [vmem:[%s172 + $0x1a18] sm:$0xff]
                %603 = vst [vmem:[%s173 + $0x6b0] sm:$0xff] %v602
                %v604 = vld [vmem:[%s172 + $0x1a20] sm:$0xff]
                %605 = vst [vmem:[%s173 + $0x6b8] sm:$0xff] %v604
                %v606 = vld [vmem:[%s172 + $0x1a28] sm:$0xff]
                %607 = vst [vmem:[%s173 + $0x6c0] sm:$0xff] %v606
                %v608 = vld [vmem:[%s172 + $0x1a30] sm:$0xff]
                %609 = vst [vmem:[%s173 + $0x6c8] sm:$0xff] %v608
                %v610 = vld [vmem:[%s172 + $0x1a38] sm:$0xff]
                %611 = vst [vmem:[%s173 + $0x6d0] sm:$0xff] %v610
                %v612 = vld [vmem:[%s172 + $0x1a40] sm:$0xff]
                %613 = vst [vmem:[%s173 + $0x6d8] sm:$0xff] %v612
                %v614 = vld [vmem:[%s172 + $0x1a48] sm:$0xff]
                %615 = vst [vmem:[%s173 + $0x6e0] sm:$0xff] %v614
                %v616 = vld [vmem:[%s172 + $0x1a50] sm:$0xff]
                %617 = vst [vmem:[%s173 + $0x6e8] sm:$0xff] %v616
                %v618 = vld [vmem:[%s172 + $0x1a58] sm:$0xff]
                %619 = vst [vmem:[%s173 + $0x6f0] sm:$0xff] %v618
                %v620 = vld [vmem:[%s172 + $0x1a60] sm:$0xff]
                %621 = vst [vmem:[%s173 + $0x6f8] sm:$0xff] %v620
                %v622 = vld [vmem:[%s172 + $0x1a68] sm:$0xff]
                %623 = vst [vmem:[%s173 + $0x700] sm:$0xff] %v622
                %v624 = vld [vmem:[%s172 + $0x1a70] sm:$0xff]
                %625 = vst [vmem:[%s173 + $0x708] sm:$0xff] %v624
                %v626 = vld [vmem:[%s172 + $0x1a78] sm:$0xff]
                %627 = vst [vmem:[%s173 + $0x710] sm:$0xff] %v626
                %v628 = vld [vmem:[%s172 + $0x1a80] sm:$0xff]
                %629 = vst [vmem:[%s173 + $0x718] sm:$0xff] %v628
                %v630 = vld [vmem:[%s172 + $0x1a88] sm:$0xff]
                %631 = vst [vmem:[%s173 + $0x720] sm:$0xff] %v630
                %v632 = vld [vmem:[%s172 + $0x1a90] sm:$0xff]
                %633 = vst [vmem:[%s173 + $0x728] sm:$0xff] %v632
                %v634 = vld [vmem:[%s172 + $0x1a98] sm:$0xff]
                %635 = vst [vmem:[%s173 + $0x730] sm:$0xff] %v634
                %v636 = vld [vmem:[%s172 + $0x1aa0] sm:$0xff]
                %637 = vst [vmem:[%s173 + $0x738] sm:$0xff] %v636
                %v638 = vld [vmem:[%s172 + $0x1aa8] sm:$0xff]
                %639 = vst [vmem:[%s173 + $0x740] sm:$0xff] %v638
                %v640 = vld [vmem:[%s172 + $0x1ab0] sm:$0xff]
                %641 = vst [vmem:[%s173 + $0x748] sm:$0xff] %v640
                %v642 = vld [vmem:[%s172 + $0x1ab8] sm:$0xff]
                %643 = vst [vmem:[%s173 + $0x750] sm:$0xff] %v642
                %v644 = vld [vmem:[%s172 + $0x1ac0] sm:$0xff]
                %645 = vst [vmem:[%s173 + $0x758] sm:$0xff] %v644
                %v646 = vld [vmem:[%s172 + $0x1ac8] sm:$0xff]
                %647 = vst [vmem:[%s173 + $0x760] sm:$0xff] %v646
                %v648 = vld [vmem:[%s172 + $0x1ad0] sm:$0xff]
                %649 = vst [vmem:[%s173 + $0x768] sm:$0xff] %v648
                %v650 = vld [vmem:[%s172 + $0x1ad8] sm:$0xff]
                %651 = vst [vmem:[%s173 + $0x770] sm:$0xff] %v650
                %v652 = vld [vmem:[%s172 + $0x1ae0] sm:$0xff]
                %653 = vst [vmem:[%s173 + $0x778] sm:$0xff] %v652
                %v654 = vld [vmem:[%s172 + $0x1ae8] sm:$0xff]
                %655 = vst [vmem:[%s173 + $0x780] sm:$0xff] %v654
                %v656 = vld [vmem:[%s172 + $0x1af0] sm:$0xff]
                %657 = vst [vmem:[%s173 + $0x788] sm:$0xff] %v656
                %v658 = vld [vmem:[%s172 + $0x1af8] sm:$0xff]
                %659 = vst [vmem:[%s173 + $0x790] sm:$0xff] %v658
                %v660 = vld [vmem:[%s172 + $0x1b00] sm:$0xff]
                %661 = vst [vmem:[%s173 + $0x798] sm:$0xff] %v660
                %v662 = vld [vmem:[%s172 + $0x1b08] sm:$0xff]
                %663 = vst [vmem:[%s173 + $0x7a0] sm:$0xff] %v662
                %v664 = vld [vmem:[%s172 + $0x1b10] sm:$0xff]
                %665 = vst [vmem:[%s173 + $0x7a8] sm:$0xff] %v664
                %v666 = vld [vmem:[%s172 + $0x1b18] sm:$0xff]
                %667 = vst [vmem:[%s173 + $0x7b0] sm:$0xff] %v666
                %v668 = vld [vmem:[%s172 + $0x1b20] sm:$0xff]
                %669 = vst [vmem:[%s173 + $0x7b8] sm:$0xff] %v668
                %v670 = vld [vmem:[%s172 + $0x1b28] sm:$0xff]
                %671 = vst [vmem:[%s173 + $0x7c0] sm:$0xff] %v670
                %v672 = vld [vmem:[%s172 + $0x1b30] sm:$0xff]
                %673 = vst [vmem:[%s173 + $0x7c8] sm:$0xff] %v672
                %v674 = vld [vmem:[%s172 + $0x1b38] sm:$0xff]
                %675 = vst [vmem:[%s173 + $0x7d0] sm:$0xff] %v674
                %v676 = vld [vmem:[%s172 + $0x1b40] sm:$0xff]
                %677 = vst [vmem:[%s173 + $0x7d8] sm:$0xff] %v676
                %v678 = vld [vmem:[%s172 + $0x1b48] sm:$0xff]
                %679 = vst [vmem:[%s173 + $0x7e0] sm:$0xff] %v678
                %v680 = vld [vmem:[%s172 + $0x1b50] sm:$0xff]
                %681 = vst [vmem:[%s173 + $0x7e8] sm:$0xff] %v680
                %v682 = vld [vmem:[%s172 + $0x1b58] sm:$0xff]
                %683 = vst [vmem:[%s173 + $0x7f0] sm:$0xff] %v682
                %v684 = vld [vmem:[%s172 + $0x1b60] sm:$0xff]
                %685 = vst [vmem:[%s173 + $0x7f8] sm:$0xff] %v684
                %v686 = vld [vmem:[%s172 + $0x1b68] sm:$0xff]
                %687 = vst [vmem:[%s173 + $0x800] sm:$0xff] %v686
                %v688 = vld [vmem:[%s172 + $0x1b70] sm:$0xff]
                %689 = vst [vmem:[%s173 + $0x808] sm:$0xff] %v688
                %v690 = vld [vmem:[%s172 + $0x1b78] sm:$0xff]
                %691 = vst [vmem:[%s173 + $0x810] sm:$0xff] %v690
                %v692 = vld [vmem:[%s172 + $0x1b80] sm:$0xff]
                %693 = vst [vmem:[%s173 + $0x818] sm:$0xff] %v692
                %v694 = vld [vmem:[%s172 + $0x1b88] sm:$0xff]
                %695 = vst [vmem:[%s173 + $0x820] sm:$0xff] %v694
                %v696 = vld [vmem:[%s172 + $0x1b90] sm:$0xff]
                %697 = vst [vmem:[%s173 + $0x828] sm:$0xff] %v696
                %v698 = vld [vmem:[%s172 + $0x1b98] sm:$0xff]
                %699 = vst [vmem:[%s173 + $0x830] sm:$0xff] %v698
                %v700 = vld [vmem:[%s172 + $0x1ba0] sm:$0xff]
                %701 = vst [vmem:[%s173 + $0x838] sm:$0xff] %v700
                %v702 = vld [vmem:[%s172 + $0x1ba8] sm:$0xff]
                %703 = vst [vmem:[%s173 + $0x840] sm:$0xff] %v702
                %v704 = vld [vmem:[%s172 + $0x1bb0] sm:$0xff]
                %705 = vst [vmem:[%s173 + $0x848] sm:$0xff] %v704
                %v706 = vld [vmem:[%s172 + $0x1bb8] sm:$0xff]
                %707 = vst [vmem:[%s173 + $0x850] sm:$0xff] %v706
                %v708 = vld [vmem:[%s172 + $0x1bc0] sm:$0xff]
                %709 = vst [vmem:[%s173 + $0x858] sm:$0xff] %v708
                %v710 = vld [vmem:[%s172 + $0x1bc8] sm:$0xff]
                %711 = vst [vmem:[%s173 + $0x860] sm:$0xff] %v710
                %v712 = vld [vmem:[%s172 + $0x1bd0] sm:$0xff]
                %713 = vst [vmem:[%s173 + $0x868] sm:$0xff] %v712
                %v714 = vld [vmem:[%s172 + $0x1bd8] sm:$0xff]
                %715 = vst [vmem:[%s173 + $0x870] sm:$0xff] %v714
                %v716 = vld [vmem:[%s172 + $0x1be0] sm:$0xff]
                %717 = vst [vmem:[%s173 + $0x878] sm:$0xff] %v716
                %v718 = vld [vmem:[%s172 + $0x1be8] sm:$0xff]
                %719 = vst [vmem:[%s173 + $0x880] sm:$0xff] %v718
                %v720 = vld [vmem:[%s172 + $0x1bf0] sm:$0xff]
                %721 = vst [vmem:[%s173 + $0x888] sm:$0xff] %v720
                %v722 = vld [vmem:[%s172 + $0x1bf8] sm:$0xff]
                %723 = vst [vmem:[%s173 + $0x890] sm:$0xff] %v722
                %v724 = vld [vmem:[%s172 + $0x1c00] sm:$0xff]
                %725 = vst [vmem:[%s173 + $0x898] sm:$0xff] %v724
              $region37: #{tpu_custom_call.1} parent=31 // loop_footer
                %s171 = sadd.s32 1, %s167
              $region38: #{tpu_custom_call.1} parent=31 // loop_footer_branch
                %166 = sbr.rel target = $region34
              $region39: #{tpu_custom_call.1} parent=31 // loop_exit
                _
            $region32: #{tpu_custom_call.1} parent=23 // pred_fallthru
              _
          $region24: #{tpu_custom_call.1} parent=19 // pred_fallthru
            _
          %1290 = vnop
        $region20: #{tpu_custom_call.1} parent=15 // pred_fallthru
          _
        // Predicated region
        $region55: #{tpu_custom_call.1} parent=15 // pred_check
          %p1291 = pneg %p72
        $region56: #{tpu_custom_call.1} parent=15 // pred_check_branch
          %1293 = sbr.rel (%p1291) target = $region58
        $region57: #{tpu_custom_call.1} parent=15 // pred_region
          %s1294 = sand.u32 %s62, 1
          %s1295 = sand.u32 %s62, 1
          %s1296 = smul.addr %s1295, 552
          %s1297 = scalar_lea.vmem [#allocation4], %s1296
          %s1298 = smul.u32 69, %s20
          %s1299 = smul.addr %s1298, 2
          %s1300 = sadd.s32 %s19, %s1299
          %s1301 = smul.addr %s1300, 8
          %s1302 = scalar_lea.vmem %s1, %s1301
          // Predicated region
          $region59: #{tpu_custom_call.1} parent=57 // pred_check
            _
          $region60: #{tpu_custom_call.1} parent=57 // pred_check_branch
            %1304 = sbr.rel (0) target = $region62
          $region61: #{tpu_custom_call.1} parent=57 // pred_region
            // Predicated region
            $region63: #{tpu_custom_call.1} parent=61 // pred_check
              _
            $region64: #{tpu_custom_call.1} parent=61 // pred_check_branch
              %1306 = sbr.rel (0) target = $region66
            $region65: #{tpu_custom_call.1} parent=61 // pred_region
              // Predicated region
              $region78: #{tpu_custom_call.1} parent=65 // pred_check
                _
              $region79: #{tpu_custom_call.1} parent=65 // pred_check_branch
                %1457 = sbr.rel (0) target = $region81
              $region80: #{tpu_custom_call.1} parent=65 // pred_region
                loop: start=0, step=1, limit=1
                $region82: #{tpu_custom_call.1} parent=80 // loop_pre_header
                  _
                $region83: #{tpu_custom_call.1} parent=80 // loop_header
                  %s1459 = sphi 0, %s1463
                  %p1460 = scmp.ge.s32.totalorder %s1459, 1
                  %s1464 = sphi %s1302, %s1302
                  %s1465 = sphi %s1297, %s1297
                $region84: #{tpu_custom_call.1} parent=80 // loop_header_branch
                  %1462 = sbr.rel (%p1460) target = $region88
                $region85: #{tpu_custom_call.1} parent=80 // loop_body
                  %v1466 = vld [vmem:[%s1464] sm:$0xff]
                  %1467 = vst [vmem:[%s1465] sm:$0xff] %v1466
                  %v1468 = vld [vmem:[%s1464 + $0x10] sm:$0xff]
                  %1469 = vst [vmem:[%s1465 + $0x8] sm:$0xff] %v1468
                  %v1470 = vld [vmem:[%s1464 + $0x20] sm:$0xff]
                  %1471 = vst [vmem:[%s1465 + $0x10] sm:$0xff] %v1470
                  %v1472 = vld [vmem:[%s1464 + $0x30] sm:$0xff]
                  %1473 = vst [vmem:[%s1465 + $0x18] sm:$0xff] %v1472
                  %v1474 = vld [vmem:[%s1464 + $0x40] sm:$0xff]
                  %1475 = vst [vmem:[%s1465 + $0x20] sm:$0xff] %v1474
                  %v1476 = vld [vmem:[%s1464 + $0x50] sm:$0xff]
                  %1477 = vst [vmem:[%s1465 + $0x28] sm:$0xff] %v1476
                  %v1478 = vld [vmem:[%s1464 + $0x60] sm:$0xff]
                  %1479 = vst [vmem:[%s1465 + $0x30] sm:$0xff] %v1478
                  %v1480 = vld [vmem:[%s1464 + $0x70] sm:$0xff]
                  %1481 = vst [vmem:[%s1465 + $0x38] sm:$0xff] %v1480
                  %v1482 = vld [vmem:[%s1464 + $0x80] sm:$0xff]
                  %1483 = vst [vmem:[%s1465 + $0x40] sm:$0xff] %v1482
                  %v1484 = vld [vmem:[%s1464 + $0x90] sm:$0xff]
                  %1485 = vst [vmem:[%s1465 + $0x48] sm:$0xff] %v1484
                  %v1486 = vld [vmem:[%s1464 + $0xa0] sm:$0xff]
                  %1487 = vst [vmem:[%s1465 + $0x50] sm:$0xff] %v1486
                  %v1488 = vld [vmem:[%s1464 + $0xb0] sm:$0xff]
                  %1489 = vst [vmem:[%s1465 + $0x58] sm:$0xff] %v1488
                  %v1490 = vld [vmem:[%s1464 + $0xc0] sm:$0xff]
                  %1491 = vst [vmem:[%s1465 + $0x60] sm:$0xff] %v1490
                  %v1492 = vld [vmem:[%s1464 + $0xd0] sm:$0xff]
                  %1493 = vst [vmem:[%s1465 + $0x68] sm:$0xff] %v1492
                  %v1494 = vld [vmem:[%s1464 + $0xe0] sm:$0xff]
                  %1495 = vst [vmem:[%s1465 + $0x70] sm:$0xff] %v1494
                  %v1496 = vld [vmem:[%s1464 + $0xf0] sm:$0xff]
                  %1497 = vst [vmem:[%s1465 + $0x78] sm:$0xff] %v1496
                  %v1498 = vld [vmem:[%s1464 + $0x100] sm:$0xff]
                  %1499 = vst [vmem:[%s1465 + $0x80] sm:$0xff] %v1498
                  %v1500 = vld [vmem:[%s1464 + $0x110] sm:$0xff]
                  %1501 = vst [vmem:[%s1465 + $0x88] sm:$0xff] %v1500
                  %v1502 = vld [vmem:[%s1464 + $0x120] sm:$0xff]
                  %1503 = vst [vmem:[%s1465 + $0x90] sm:$0xff] %v1502
                  %v1504 = vld [vmem:[%s1464 + $0x130] sm:$0xff]
                  %1505 = vst [vmem:[%s1465 + $0x98] sm:$0xff] %v1504
                  %v1506 = vld [vmem:[%s1464 + $0x140] sm:$0xff]
                  %1507 = vst [vmem:[%s1465 + $0xa0] sm:$0xff] %v1506
                  %v1508 = vld [vmem:[%s1464 + $0x150] sm:$0xff]
                  %1509 = vst [vmem:[%s1465 + $0xa8] sm:$0xff] %v1508
                  %v1510 = vld [vmem:[%s1464 + $0x160] sm:$0xff]
                  %1511 = vst [vmem:[%s1465 + $0xb0] sm:$0xff] %v1510
                  %v1512 = vld [vmem:[%s1464 + $0x170] sm:$0xff]
                  %1513 = vst [vmem:[%s1465 + $0xb8] sm:$0xff] %v1512
                  %v1514 = vld [vmem:[%s1464 + $0x180] sm:$0xff]
                  %1515 = vst [vmem:[%s1465 + $0xc0] sm:$0xff] %v1514
                  %v1516 = vld [vmem:[%s1464 + $0x190] sm:$0xff]
                  %1517 = vst [vmem:[%s1465 + $0xc8] sm:$0xff] %v1516
                  %v1518 = vld [vmem:[%s1464 + $0x1a0] sm:$0xff]
                  %1519 = vst [vmem:[%s1465 + $0xd0] sm:$0xff] %v1518
                  %v1520 = vld [vmem:[%s1464 + $0x1b0] sm:$0xff]
                  %1521 = vst [vmem:[%s1465 + $0xd8] sm:$0xff] %v1520
                  %v1522 = vld [vmem:[%s1464 + $0x1c0] sm:$0xff]
                  %1523 = vst [vmem:[%s1465 + $0xe0] sm:$0xff] %v1522
                  %v1524 = vld [vmem:[%s1464 + $0x1d0] sm:$0xff]
                  %1525 = vst [vmem:[%s1465 + $0xe8] sm:$0xff] %v1524
                  %v1526 = vld [vmem:[%s1464 + $0x1e0] sm:$0xff]
                  %1527 = vst [vmem:[%s1465 + $0xf0] sm:$0xff] %v1526
                  %v1528 = vld [vmem:[%s1464 + $0x1f0] sm:$0xff]
                  %1529 = vst [vmem:[%s1465 + $0xf8] sm:$0xff] %v1528
                  %v1530 = vld [vmem:[%s1464 + $0x200] sm:$0xff]
                  %1531 = vst [vmem:[%s1465 + $0x100] sm:$0xff] %v1530
                  %v1532 = vld [vmem:[%s1464 + $0x210] sm:$0xff]
                  %1533 = vst [vmem:[%s1465 + $0x108] sm:$0xff] %v1532
                  %v1534 = vld [vmem:[%s1464 + $0x220] sm:$0xff]
                  %1535 = vst [vmem:[%s1465 + $0x110] sm:$0xff] %v1534
                  %v1536 = vld [vmem:[%s1464 + $0x230] sm:$0xff]
                  %1537 = vst [vmem:[%s1465 + $0x118] sm:$0xff] %v1536
                  %v1538 = vld [vmem:[%s1464 + $0x240] sm:$0xff]
                  %1539 = vst [vmem:[%s1465 + $0x120] sm:$0xff] %v1538
                  %v1540 = vld [vmem:[%s1464 + $0x250] sm:$0xff]
                  %1541 = vst [vmem:[%s1465 + $0x128] sm:$0xff] %v1540
                  %v1542 = vld [vmem:[%s1464 + $0x260] sm:$0xff]
                  %1543 = vst [vmem:[%s1465 + $0x130] sm:$0xff] %v1542
                  %v1544 = vld [vmem:[%s1464 + $0x270] sm:$0xff]
                  %1545 = vst [vmem:[%s1465 + $0x138] sm:$0xff] %v1544
                  %v1546 = vld [vmem:[%s1464 + $0x280] sm:$0xff]
                  %1547 = vst [vmem:[%s1465 + $0x140] sm:$0xff] %v1546
                  %v1548 = vld [vmem:[%s1464 + $0x290] sm:$0xff]
                  %1549 = vst [vmem:[%s1465 + $0x148] sm:$0xff] %v1548
                  %v1550 = vld [vmem:[%s1464 + $0x2a0] sm:$0xff]
                  %1551 = vst [vmem:[%s1465 + $0x150] sm:$0xff] %v1550
                  %v1552 = vld [vmem:[%s1464 + $0x2b0] sm:$0xff]
                  %1553 = vst [vmem:[%s1465 + $0x158] sm:$0xff] %v1552
                  %v1554 = vld [vmem:[%s1464 + $0x2c0] sm:$0xff]
                  %1555 = vst [vmem:[%s1465 + $0x160] sm:$0xff] %v1554
                  %v1556 = vld [vmem:[%s1464 + $0x2d0] sm:$0xff]
                  %1557 = vst [vmem:[%s1465 + $0x168] sm:$0xff] %v1556
                  %v1558 = vld [vmem:[%s1464 + $0x2e0] sm:$0xff]
                  %1559 = vst [vmem:[%s1465 + $0x170] sm:$0xff] %v1558
                  %v1560 = vld [vmem:[%s1464 + $0x2f0] sm:$0xff]
                  %1561 = vst [vmem:[%s1465 + $0x178] sm:$0xff] %v1560
                  %v1562 = vld [vmem:[%s1464 + $0x300] sm:$0xff]
                  %1563 = vst [vmem:[%s1465 + $0x180] sm:$0xff] %v1562
                  %v1564 = vld [vmem:[%s1464 + $0x310] sm:$0xff]
                  %1565 = vst [vmem:[%s1465 + $0x188] sm:$0xff] %v1564
                  %v1566 = vld [vmem:[%s1464 + $0x320] sm:$0xff]
                  %1567 = vst [vmem:[%s1465 + $0x190] sm:$0xff] %v1566
                  %v1568 = vld [vmem:[%s1464 + $0x330] sm:$0xff]
                  %1569 = vst [vmem:[%s1465 + $0x198] sm:$0xff] %v1568
                  %v1570 = vld [vmem:[%s1464 + $0x340] sm:$0xff]
                  %1571 = vst [vmem:[%s1465 + $0x1a0] sm:$0xff] %v1570
                  %v1572 = vld [vmem:[%s1464 + $0x350] sm:$0xff]
                  %1573 = vst [vmem:[%s1465 + $0x1a8] sm:$0xff] %v1572
                  %v1574 = vld [vmem:[%s1464 + $0x360] sm:$0xff]
                  %1575 = vst [vmem:[%s1465 + $0x1b0] sm:$0xff] %v1574
                  %v1576 = vld [vmem:[%s1464 + $0x370] sm:$0xff]
                  %1577 = vst [vmem:[%s1465 + $0x1b8] sm:$0xff] %v1576
                  %v1578 = vld [vmem:[%s1464 + $0x380] sm:$0xff]
                  %1579 = vst [vmem:[%s1465 + $0x1c0] sm:$0xff] %v1578
                  %v1580 = vld [vmem:[%s1464 + $0x390] sm:$0xff]
                  %1581 = vst [vmem:[%s1465 + $0x1c8] sm:$0xff] %v1580
                  %v1582 = vld [vmem:[%s1464 + $0x3a0] sm:$0xff]
                  %1583 = vst [vmem:[%s1465 + $0x1d0] sm:$0xff] %v1582
                  %v1584 = vld [vmem:[%s1464 + $0x3b0] sm:$0xff]
                  %1585 = vst [vmem:[%s1465 + $0x1d8] sm:$0xff] %v1584
                  %v1586 = vld [vmem:[%s1464 + $0x3c0] sm:$0xff]
                  %1587 = vst [vmem:[%s1465 + $0x1e0] sm:$0xff] %v1586
                  %v1588 = vld [vmem:[%s1464 + $0x3d0] sm:$0xff]
                  %1589 = vst [vmem:[%s1465 + $0x1e8] sm:$0xff] %v1588
                  %v1590 = vld [vmem:[%s1464 + $0x3e0] sm:$0xff]
                  %1591 = vst [vmem:[%s1465 + $0x1f0] sm:$0xff] %v1590
                  %v1592 = vld [vmem:[%s1464 + $0x3f0] sm:$0xff]
                  %1593 = vst [vmem:[%s1465 + $0x1f8] sm:$0xff] %v1592
                  %v1594 = vld [vmem:[%s1464 + $0x400] sm:$0xff]
                  %1595 = vst [vmem:[%s1465 + $0x200] sm:$0xff] %v1594
                  %v1596 = vld [vmem:[%s1464 + $0x410] sm:$0xff]
                  %1597 = vst [vmem:[%s1465 + $0x208] sm:$0xff] %v1596
                  %v1598 = vld [vmem:[%s1464 + $0x420] sm:$0xff]
                  %1599 = vst [vmem:[%s1465 + $0x210] sm:$0xff] %v1598
                  %v1600 = vld [vmem:[%s1464 + $0x430] sm:$0xff]
                  %1601 = vst [vmem:[%s1465 + $0x218] sm:$0xff] %v1600
                  %v1602 = vld [vmem:[%s1464 + $0x440] sm:$0xff]
                  %1603 = vst [vmem:[%s1465 + $0x220] sm:$0xff] %v1602
                $region86: #{tpu_custom_call.1} parent=80 // loop_footer
                  %s1463 = sadd.s32 1, %s1459
                $region87: #{tpu_custom_call.1} parent=80 // loop_footer_branch
                  %1458 = sbr.rel target = $region83
                $region88: #{tpu_custom_call.1} parent=80 // loop_exit
                  _
              $region81: #{tpu_custom_call.1} parent=65 // pred_fallthru
                _
              // Predicated region
              $region89: #{tpu_custom_call.1} parent=65 // pred_check
                _
              $region90: #{tpu_custom_call.1} parent=65 // pred_check_branch
                %1605 = sbr.rel target = $region92
              $region91: #{tpu_custom_call.1} parent=65 // pred_region
                _
              $region92: #{tpu_custom_call.1} parent=65 // pred_fallthru
                _
            $region66: #{tpu_custom_call.1} parent=61 // pred_fallthru
              _
            // Predicated region
            $region67: #{tpu_custom_call.1} parent=61 // pred_check
              _
            $region68: #{tpu_custom_call.1} parent=61 // pred_check_branch
              %1308 = sbr.rel target = $region70
            $region69: #{tpu_custom_call.1} parent=61 // pred_region
              loop: start=0, step=1, limit=1
              $region71: #{tpu_custom_call.1} parent=69 // loop_pre_header
                _
              $region72: #{tpu_custom_call.1} parent=69 // loop_header
                %s1311 = sphi 0, %s1315
                %p1312 = scmp.ge.s32.totalorder %s1311, 1
                %s1316 = sphi %s1302, %s1302
                %s1317 = sphi %s1297, %s1297
              $region73: #{tpu_custom_call.1} parent=69 // loop_header_branch
                %1314 = sbr.rel (%p1312) target = $region77
              $region74: #{tpu_custom_call.1} parent=69 // loop_body
                %v1318 = vld [vmem:[%s1316] sm:$0xff]
                %1319 = vst [vmem:[%s1317] sm:$0xff] %v1318
                %v1320 = vld [vmem:[%s1316 + $0x10] sm:$0xff]
                %1321 = vst [vmem:[%s1317 + $0x8] sm:$0xff] %v1320
                %v1322 = vld [vmem:[%s1316 + $0x20] sm:$0xff]
                %1323 = vst [vmem:[%s1317 + $0x10] sm:$0xff] %v1322
                %v1324 = vld [vmem:[%s1316 + $0x30] sm:$0xff]
                %1325 = vst [vmem:[%s1317 + $0x18] sm:$0xff] %v1324
                %v1326 = vld [vmem:[%s1316 + $0x40] sm:$0xff]
                %1327 = vst [vmem:[%s1317 + $0x20] sm:$0xff] %v1326
                %v1328 = vld [vmem:[%s1316 + $0x50] sm:$0xff]
                %1329 = vst [vmem:[%s1317 + $0x28] sm:$0xff] %v1328
                %v1330 = vld [vmem:[%s1316 + $0x60] sm:$0xff]
                %1331 = vst [vmem:[%s1317 + $0x30] sm:$0xff] %v1330
                %v1332 = vld [vmem:[%s1316 + $0x70] sm:$0xff]
                %1333 = vst [vmem:[%s1317 + $0x38] sm:$0xff] %v1332
                %v1334 = vld [vmem:[%s1316 + $0x80] sm:$0xff]
                %1335 = vst [vmem:[%s1317 + $0x40] sm:$0xff] %v1334
                %v1336 = vld [vmem:[%s1316 + $0x90] sm:$0xff]
                %1337 = vst [vmem:[%s1317 + $0x48] sm:$0xff] %v1336
                %v1338 = vld [vmem:[%s1316 + $0xa0] sm:$0xff]
                %1339 = vst [vmem:[%s1317 + $0x50] sm:$0xff] %v1338
                %v1340 = vld [vmem:[%s1316 + $0xb0] sm:$0xff]
                %1341 = vst [vmem:[%s1317 + $0x58] sm:$0xff] %v1340
                %v1342 = vld [vmem:[%s1316 + $0xc0] sm:$0xff]
                %1343 = vst [vmem:[%s1317 + $0x60] sm:$0xff] %v1342
                %v1344 = vld [vmem:[%s1316 + $0xd0] sm:$0xff]
                %1345 = vst [vmem:[%s1317 + $0x68] sm:$0xff] %v1344
                %v1346 = vld [vmem:[%s1316 + $0xe0] sm:$0xff]
                %1347 = vst [vmem:[%s1317 + $0x70] sm:$0xff] %v1346
                %v1348 = vld [vmem:[%s1316 + $0xf0] sm:$0xff]
                %1349 = vst [vmem:[%s1317 + $0x78] sm:$0xff] %v1348
                %v1350 = vld [vmem:[%s1316 + $0x100] sm:$0xff]
                %1351 = vst [vmem:[%s1317 + $0x80] sm:$0xff] %v1350
                %v1352 = vld [vmem:[%s1316 + $0x110] sm:$0xff]
                %1353 = vst [vmem:[%s1317 + $0x88] sm:$0xff] %v1352
                %v1354 = vld [vmem:[%s1316 + $0x120] sm:$0xff]
                %1355 = vst [vmem:[%s1317 + $0x90] sm:$0xff] %v1354
                %v1356 = vld [vmem:[%s1316 + $0x130] sm:$0xff]
                %1357 = vst [vmem:[%s1317 + $0x98] sm:$0xff] %v1356
                %v1358 = vld [vmem:[%s1316 + $0x140] sm:$0xff]
                %1359 = vst [vmem:[%s1317 + $0xa0] sm:$0xff] %v1358
                %v1360 = vld [vmem:[%s1316 + $0x150] sm:$0xff]
                %1361 = vst [vmem:[%s1317 + $0xa8] sm:$0xff] %v1360
                %v1362 = vld [vmem:[%s1316 + $0x160] sm:$0xff]
                %1363 = vst [vmem:[%s1317 + $0xb0] sm:$0xff] %v1362
                %v1364 = vld [vmem:[%s1316 + $0x170] sm:$0xff]
                %1365 = vst [vmem:[%s1317 + $0xb8] sm:$0xff] %v1364
                %v1366 = vld [vmem:[%s1316 + $0x180] sm:$0xff]
                %1367 = vst [vmem:[%s1317 + $0xc0] sm:$0xff] %v1366
                %v1368 = vld [vmem:[%s1316 + $0x190] sm:$0xff]
                %1369 = vst [vmem:[%s1317 + $0xc8] sm:$0xff] %v1368
                %v1370 = vld [vmem:[%s1316 + $0x1a0] sm:$0xff]
                %1371 = vst [vmem:[%s1317 + $0xd0] sm:$0xff] %v1370
                %v1372 = vld [vmem:[%s1316 + $0x1b0] sm:$0xff]
                %1373 = vst [vmem:[%s1317 + $0xd8] sm:$0xff] %v1372
                %v1374 = vld [vmem:[%s1316 + $0x1c0] sm:$0xff]
                %1375 = vst [vmem:[%s1317 + $0xe0] sm:$0xff] %v1374
                %v1376 = vld [vmem:[%s1316 + $0x1d0] sm:$0xff]
                %1377 = vst [vmem:[%s1317 + $0xe8] sm:$0xff] %v1376
                %v1378 = vld [vmem:[%s1316 + $0x1e0] sm:$0xff]
                %1379 = vst [vmem:[%s1317 + $0xf0] sm:$0xff] %v1378
                %v1380 = vld [vmem:[%s1316 + $0x1f0] sm:$0xff]
                %1381 = vst [vmem:[%s1317 + $0xf8] sm:$0xff] %v1380
                %v1382 = vld [vmem:[%s1316 + $0x200] sm:$0xff]
                %1383 = vst [vmem:[%s1317 + $0x100] sm:$0xff] %v1382
                %v1384 = vld [vmem:[%s1316 + $0x210] sm:$0xff]
                %1385 = vst [vmem:[%s1317 + $0x108] sm:$0xff] %v1384
                %v1386 = vld [vmem:[%s1316 + $0x220] sm:$0xff]
                %1387 = vst [vmem:[%s1317 + $0x110] sm:$0xff] %v1386
                %v1388 = vld [vmem:[%s1316 + $0x230] sm:$0xff]
                %1389 = vst [vmem:[%s1317 + $0x118] sm:$0xff] %v1388
                %v1390 = vld [vmem:[%s1316 + $0x240] sm:$0xff]
                %1391 = vst [vmem:[%s1317 + $0x120] sm:$0xff] %v1390
                %v1392 = vld [vmem:[%s1316 + $0x250] sm:$0xff]
                %1393 = vst [vmem:[%s1317 + $0x128] sm:$0xff] %v1392
                %v1394 = vld [vmem:[%s1316 + $0x260] sm:$0xff]
                %1395 = vst [vmem:[%s1317 + $0x130] sm:$0xff] %v1394
                %v1396 = vld [vmem:[%s1316 + $0x270] sm:$0xff]
                %1397 = vst [vmem:[%s1317 + $0x138] sm:$0xff] %v1396
                %v1398 = vld [vmem:[%s1316 + $0x280] sm:$0xff]
                %1399 = vst [vmem:[%s1317 + $0x140] sm:$0xff] %v1398
                %v1400 = vld [vmem:[%s1316 + $0x290] sm:$0xff]
                %1401 = vst [vmem:[%s1317 + $0x148] sm:$0xff] %v1400
                %v1402 = vld [vmem:[%s1316 + $0x2a0] sm:$0xff]
                %1403 = vst [vmem:[%s1317 + $0x150] sm:$0xff] %v1402
                %v1404 = vld [vmem:[%s1316 + $0x2b0] sm:$0xff]
                %1405 = vst [vmem:[%s1317 + $0x158] sm:$0xff] %v1404
                %v1406 = vld [vmem:[%s1316 + $0x2c0] sm:$0xff]
                %1407 = vst [vmem:[%s1317 + $0x160] sm:$0xff] %v1406
                %v1408 = vld [vmem:[%s1316 + $0x2d0] sm:$0xff]
                %1409 = vst [vmem:[%s1317 + $0x168] sm:$0xff] %v1408
                %v1410 = vld [vmem:[%s1316 + $0x2e0] sm:$0xff]
                %1411 = vst [vmem:[%s1317 + $0x170] sm:$0xff] %v1410
                %v1412 = vld [vmem:[%s1316 + $0x2f0] sm:$0xff]
                %1413 = vst [vmem:[%s1317 + $0x178] sm:$0xff] %v1412
                %v1414 = vld [vmem:[%s1316 + $0x300] sm:$0xff]
                %1415 = vst [vmem:[%s1317 + $0x180] sm:$0xff] %v1414
                %v1416 = vld [vmem:[%s1316 + $0x310] sm:$0xff]
                %1417 = vst [vmem:[%s1317 + $0x188] sm:$0xff] %v1416
                %v1418 = vld [vmem:[%s1316 + $0x320] sm:$0xff]
                %1419 = vst [vmem:[%s1317 + $0x190] sm:$0xff] %v1418
                %v1420 = vld [vmem:[%s1316 + $0x330] sm:$0xff]
                %1421 = vst [vmem:[%s1317 + $0x198] sm:$0xff] %v1420
                %v1422 = vld [vmem:[%s1316 + $0x340] sm:$0xff]
                %1423 = vst [vmem:[%s1317 + $0x1a0] sm:$0xff] %v1422
                %v1424 = vld [vmem:[%s1316 + $0x350] sm:$0xff]
                %1425 = vst [vmem:[%s1317 + $0x1a8] sm:$0xff] %v1424
                %v1426 = vld [vmem:[%s1316 + $0x360] sm:$0xff]
                %1427 = vst [vmem:[%s1317 + $0x1b0] sm:$0xff] %v1426
                %v1428 = vld [vmem:[%s1316 + $0x370] sm:$0xff]
                %1429 = vst [vmem:[%s1317 + $0x1b8] sm:$0xff] %v1428
                %v1430 = vld [vmem:[%s1316 + $0x380] sm:$0xff]
                %1431 = vst [vmem:[%s1317 + $0x1c0] sm:$0xff] %v1430
                %v1432 = vld [vmem:[%s1316 + $0x390] sm:$0xff]
                %1433 = vst [vmem:[%s1317 + $0x1c8] sm:$0xff] %v1432
                %v1434 = vld [vmem:[%s1316 + $0x3a0] sm:$0xff]
                %1435 = vst [vmem:[%s1317 + $0x1d0] sm:$0xff] %v1434
                %v1436 = vld [vmem:[%s1316 + $0x3b0] sm:$0xff]
                %1437 = vst [vmem:[%s1317 + $0x1d8] sm:$0xff] %v1436
                %v1438 = vld [vmem:[%s1316 + $0x3c0] sm:$0xff]
                %1439 = vst [vmem:[%s1317 + $0x1e0] sm:$0xff] %v1438
                %v1440 = vld [vmem:[%s1316 + $0x3d0] sm:$0xff]
                %1441 = vst [vmem:[%s1317 + $0x1e8] sm:$0xff] %v1440
                %v1442 = vld [vmem:[%s1316 + $0x3e0] sm:$0xff]
                %1443 = vst [vmem:[%s1317 + $0x1f0] sm:$0xff] %v1442
                %v1444 = vld [vmem:[%s1316 + $0x3f0] sm:$0xff]
                %1445 = vst [vmem:[%s1317 + $0x1f8] sm:$0xff] %v1444
                %v1446 = vld [vmem:[%s1316 + $0x400] sm:$0xff]
                %1447 = vst [vmem:[%s1317 + $0x200] sm:$0xff] %v1446
                %v1448 = vld [vmem:[%s1316 + $0x410] sm:$0xff]
                %1449 = vst [vmem:[%s1317 + $0x208] sm:$0xff] %v1448
                %v1450 = vld [vmem:[%s1316 + $0x420] sm:$0xff]
                %1451 = vst [vmem:[%s1317 + $0x210] sm:$0xff] %v1450
                %v1452 = vld [vmem:[%s1316 + $0x430] sm:$0xff]
                %1453 = vst [vmem:[%s1317 + $0x218] sm:$0xff] %v1452
                %v1454 = vld [vmem:[%s1316 + $0x440] sm:$0xff]
                %1455 = vst [vmem:[%s1317 + $0x220] sm:$0xff] %v1454
              $region75: #{tpu_custom_call.1} parent=69 // loop_footer
                %s1315 = sadd.s32 1, %s1311
              $region76: #{tpu_custom_call.1} parent=69 // loop_footer_branch
                %1310 = sbr.rel target = $region72
              $region77: #{tpu_custom_call.1} parent=69 // loop_exit
                _
            $region70: #{tpu_custom_call.1} parent=61 // pred_fallthru
              _
          $region62: #{tpu_custom_call.1} parent=57 // pred_fallthru
            _
          %1606 = vnop
        $region58: #{tpu_custom_call.1} parent=15 // pred_fallthru
          _
        // Predicated region
        $region93: #{tpu_custom_call.1} parent=15 // pred_check
          %p1607 = pneg %p98
        $region94: #{tpu_custom_call.1} parent=15 // pred_check_branch
          %1609 = sbr.rel (%p1607) target = $region96
        $region95: #{tpu_custom_call.1} parent=15 // pred_region
          %p1610 = scmp.lt.s32.totalorder %s19, 1
          %s1611 = scalar_select %p1610, %s19, 1
          %s1612 = scalar_lea.vmem %s2, %s1611
        $region96: #{tpu_custom_call.1} parent=15 // pred_fallthru
          _
      $region16: #{tpu_custom_call.1} parent=5 // pred_fallthru
        _
      %p1613 = scmp.le.s32.totalorder 1, %s12
      %p1614 = scmp.lt.s32.totalorder %s12, 9
      %p1615 = pnand %p1613, %p1614
      %p1616 = pneg %p1615
      // Predicated region
      $region97: #{tpu_custom_call.1} parent=5 // pred_check
        _
      $region98: #{tpu_custom_call.1} parent=5 // pred_check_branch
        %1618 = sbr.rel (%p1615) target = $region100
      $region99: #{tpu_custom_call.1} parent=5 // pred_region
        %s1619 = ssub.s32 %s12, 1
        %s1620 = sand.u32 %s37, 1
        %s1621 = sand.u32 %s37, 1
        %s1622 = smul.addr %s1621, 2208
        %s1623 = scalar_lea.vmem [#allocation3], %s1622
        // Predicated region
        $region101: #{tpu_custom_call.1} parent=99 // pred_check
          %p1624 = pneg %p50
        $region102: #{tpu_custom_call.1} parent=99 // pred_check_branch
          %1626 = sbr.rel (%p1624) target = $region104
        $region103: #{tpu_custom_call.1} parent=99 // pred_region
          _
        $region104: #{tpu_custom_call.1} parent=99 // pred_fallthru
          _
        %s1627 = sand.u32 %s65, 1
        %s1628 = sand.u32 %s65, 1
        %s1629 = smul.addr %s1628, 552
        %s1630 = scalar_lea.vmem [#allocation4], %s1629
        // Predicated region
        $region105: #{tpu_custom_call.1} parent=99 // pred_check
          %p1631 = pneg %p78
        $region106: #{tpu_custom_call.1} parent=99 // pred_check_branch
          %1633 = sbr.rel (%p1631) target = $region108
        $region107: #{tpu_custom_call.1} parent=99 // pred_region
          _
        $region108: #{tpu_custom_call.1} parent=99 // pred_fallthru
          _
        %s1634 = sand.u32 %s37, 1
        %s1635 = sand.u32 %s37, 1
        %s1636 = smul.addr %s1635, 2208
        %s1637 = scalar_lea.vmem [#allocation3], %s1636
        %p1638 = pneg %p50
        %p1639 = pneg %p47
        %s1640 = sand.u32 %s65, 1
        %s1641 = sand.u32 %s65, 1
        %s1642 = smul.addr %s1641, 552
        %s1643 = scalar_lea.vmem [#allocation4], %s1642
        %p1644 = pneg %p78
        %p1645 = pneg %p75
        %p1646 = scmp.lt.s32.totalorder %s21, 1
        %s1647 = scalar_select %p1646, %s21, 1
        %s1648 = scalar_lea.vmem %s2, %s1647
        %p1649 = pneg %p104
        %p1650 = pneg %p101
        %p1651 = pneg %p130
        %p1652 = pneg %p127
        %s1653 = sand.u32 %s117, 1
        %s1654 = scalar_lea.sflag [#allocation6], %s1653
        %s1655 = sand.u32 %s117, 1
        %s1656 = smul.addr %s1655, 4
        %s1657 = scalar_lea.vmem [#allocation5], %s1656
        %s1658 = smul.u32 69, %s22
        %s1659 = smul.u32 69, %s22
        %p1660 = scmp.lt.s32.totalorder %s21, 1
        %s1661 = scalar_select %p1660, %s21, 1
        %s1662 = scalar_lea.vmem %s2, %s1661
        %p1663 = scmp.eq.s32.totalorder %s22, 0
        // Predicated region
        $region109: #{tpu_custom_call.1} parent=99 // pred_check
          %p1664 = pneg %p1663
        $region110: #{tpu_custom_call.1} parent=99 // pred_check_branch
          %1666 = sbr.rel (%p1664) target = $region112
        $region111: #{tpu_custom_call.1} parent=99 // pred_region
          %1667 = vst [vmem:[#allocation2] sm:$0xf] 0.0
        $region112: #{tpu_custom_call.1} parent=99 // pred_fallthru
          _
        %v1668 = vld [vmem:[%s1623] sm:$0xff]
        %v1669 = vld [vmem:[%s1623 + $0x8] sm:$0xff]
        %v1670 = vld [vmem:[%s1623 + $0x10] sm:$0xff]
        %v1671 = vld [vmem:[%s1623 + $0x18] sm:$0xff]
        %v1672 = vld [vmem:[%s1623 + $0x20] sm:$0xff]
        %v1673 = vld [vmem:[%s1623 + $0x28] sm:$0xff]
        %v1674 = vld [vmem:[%s1623 + $0x30] sm:$0xff]
        %v1675 = vld [vmem:[%s1623 + $0x38] sm:$0xff]
        %v1676 = vld [vmem:[%s1623 + $0x40] sm:$0xff]
        %v1677 = vld [vmem:[%s1623 + $0x48] sm:$0xff]
        %v1678 = vld [vmem:[%s1623 + $0x50] sm:$0xff]
        %v1679 = vld [vmem:[%s1623 + $0x58] sm:$0xff]
        %v1680 = vld [vmem:[%s1623 + $0x60] sm:$0xff]
        %v1681 = vld [vmem:[%s1623 + $0x68] sm:$0xff]
        %v1682 = vld [vmem:[%s1623 + $0x70] sm:$0xff]
        %v1683 = vld [vmem:[%s1623 + $0x78] sm:$0xff]
        %v1684 = vld [vmem:[%s1623 + $0x80] sm:$0xff]
        %v1685 = vld [vmem:[%s1623 + $0x88] sm:$0xff]
        %v1686 = vld [vmem:[%s1623 + $0x90] sm:$0xff]
        %v1687 = vld [vmem:[%s1623 + $0x98] sm:$0xff]
        %v1688 = vld [vmem:[%s1623 + $0xa0] sm:$0xff]
        %v1689 = vld [vmem:[%s1623 + $0xa8] sm:$0xff]
        %v1690 = vld [vmem:[%s1623 + $0xb0] sm:$0xff]
        %v1691 = vld [vmem:[%s1623 + $0xb8] sm:$0xff]
        %v1692 = vld [vmem:[%s1623 + $0xc0] sm:$0xff]
        %v1693 = vld [vmem:[%s1623 + $0xc8] sm:$0xff]
        %v1694 = vld [vmem:[%s1623 + $0xd0] sm:$0xff]
        %v1695 = vld [vmem:[%s1623 + $0xd8] sm:$0xff]
        %v1696 = vld [vmem:[%s1623 + $0xe0] sm:$0xff]
        %v1697 = vld [vmem:[%s1623 + $0xe8] sm:$0xff]
        %v1698 = vld [vmem:[%s1623 + $0xf0] sm:$0xff]
        %v1699 = vld [vmem:[%s1623 + $0xf8] sm:$0xff]
        %v1700 = vld [vmem:[%s1623 + $0x100] sm:$0xff]
        %v1701 = vld [vmem:[%s1623 + $0x108] sm:$0xff]
        %v1702 = vld [vmem:[%s1623 + $0x110] sm:$0xff]
        %v1703 = vld [vmem:[%s1623 + $0x118] sm:$0xff]
        %v1704 = vld [vmem:[%s1623 + $0x120] sm:$0xff]
        %v1705 = vld [vmem:[%s1623 + $0x128] sm:$0xff]
        %v1706 = vld [vmem:[%s1623 + $0x130] sm:$0xff]
        %v1707 = vld [vmem:[%s1623 + $0x138] sm:$0xff]
        %v1708 = vld [vmem:[%s1623 + $0x140] sm:$0xff]
        %v1709 = vld [vmem:[%s1623 + $0x148] sm:$0xff]
        %v1710 = vld [vmem:[%s1623 + $0x150] sm:$0xff]
        %v1711 = vld [vmem:[%s1623 + $0x158] sm:$0xff]
        %v1712 = vld [vmem:[%s1623 + $0x160] sm:$0xff]
        %v1713 = vld [vmem:[%s1623 + $0x168] sm:$0xff]
        %v1714 = vld [vmem:[%s1623 + $0x170] sm:$0xff]
        %v1715 = vld [vmem:[%s1623 + $0x178] sm:$0xff]
        %v1716 = vld [vmem:[%s1623 + $0x180] sm:$0xff]
        %v1717 = vld [vmem:[%s1623 + $0x188] sm:$0xff]
        %v1718 = vld [vmem:[%s1623 + $0x190] sm:$0xff]
        %v1719 = vld [vmem:[%s1623 + $0x198] sm:$0xff]
        %v1720 = vld [vmem:[%s1623 + $0x1a0] sm:$0xff]
        %v1721 = vld [vmem:[%s1623 + $0x1a8] sm:$0xff]
        %v1722 = vld [vmem:[%s1623 + $0x1b0] sm:$0xff]
        %v1723 = vld [vmem:[%s1623 + $0x1b8] sm:$0xff]
        %v1724 = vld [vmem:[%s1623 + $0x1c0] sm:$0xff]
        %v1725 = vld [vmem:[%s1623 + $0x1c8] sm:$0xff]
        %v1726 = vld [vmem:[%s1623 + $0x1d0] sm:$0xff]
        %v1727 = vld [vmem:[%s1623 + $0x1d8] sm:$0xff]
        %v1728 = vld [vmem:[%s1623 + $0x1e0] sm:$0xff]
        %v1729 = vld [vmem:[%s1623 + $0x1e8] sm:$0xff]
        %v1730 = vld [vmem:[%s1623 + $0x1f0] sm:$0xff]
        %v1731 = vld [vmem:[%s1623 + $0x1f8] sm:$0xff]
        %v1732 = vld [vmem:[%s1623 + $0x200] sm:$0xff]
        %v1733 = vld [vmem:[%s1623 + $0x208] sm:$0xff]
        %v1734 = vld [vmem:[%s1623 + $0x210] sm:$0xff]
        %v1735 = vld [vmem:[%s1623 + $0x218] sm:$0xff]
        %v1736 = vld [vmem:[%s1623 + $0x220] sm:$0xff]
        %v1737 = vld [vmem:[%s1623 + $0x228] sm:$0xff]
        %v1738 = vld [vmem:[%s1623 + $0x230] sm:$0xff]
        %v1739 = vld [vmem:[%s1623 + $0x238] sm:$0xff]
        %v1740 = vld [vmem:[%s1623 + $0x240] sm:$0xff]
        %v1741 = vld [vmem:[%s1623 + $0x248] sm:$0xff]
        %v1742 = vld [vmem:[%s1623 + $0x250] sm:$0xff]
        %v1743 = vld [vmem:[%s1623 + $0x258] sm:$0xff]
        %v1744 = vld [vmem:[%s1623 + $0x260] sm:$0xff]
        %v1745 = vld [vmem:[%s1623 + $0x268] sm:$0xff]
        %v1746 = vld [vmem:[%s1623 + $0x270] sm:$0xff]
        %v1747 = vld [vmem:[%s1623 + $0x278] sm:$0xff]
        %v1748 = vld [vmem:[%s1623 + $0x280] sm:$0xff]
        %v1749 = vld [vmem:[%s1623 + $0x288] sm:$0xff]
        %v1750 = vld [vmem:[%s1623 + $0x290] sm:$0xff]
        %v1751 = vld [vmem:[%s1623 + $0x298] sm:$0xff]
        %v1752 = vld [vmem:[%s1623 + $0x2a0] sm:$0xff]
        %v1753 = vld [vmem:[%s1623 + $0x2a8] sm:$0xff]
        %v1754 = vld [vmem:[%s1623 + $0x2b0] sm:$0xff]
        %v1755 = vld [vmem:[%s1623 + $0x2b8] sm:$0xff]
        %v1756 = vld [vmem:[%s1623 + $0x2c0] sm:$0xff]
        %v1757 = vld [vmem:[%s1623 + $0x2c8] sm:$0xff]
        %v1758 = vld [vmem:[%s1623 + $0x2d0] sm:$0xff]
        %v1759 = vld [vmem:[%s1623 + $0x2d8] sm:$0xff]
        %v1760 = vld [vmem:[%s1623 + $0x2e0] sm:$0xff]
        %v1761 = vld [vmem:[%s1623 + $0x2e8] sm:$0xff]
        %v1762 = vld [vmem:[%s1623 + $0x2f0] sm:$0xff]
        %v1763 = vld [vmem:[%s1623 + $0x2f8] sm:$0xff]
        %v1764 = vld [vmem:[%s1623 + $0x300] sm:$0xff]
        %v1765 = vld [vmem:[%s1623 + $0x308] sm:$0xff]
        %v1766 = vld [vmem:[%s1623 + $0x310] sm:$0xff]
        %v1767 = vld [vmem:[%s1623 + $0x318] sm:$0xff]
        %v1768 = vld [vmem:[%s1623 + $0x320] sm:$0xff]
        %v1769 = vld [vmem:[%s1623 + $0x328] sm:$0xff]
        %v1770 = vld [vmem:[%s1623 + $0x330] sm:$0xff]
        %v1771 = vld [vmem:[%s1623 + $0x338] sm:$0xff]
        %v1772 = vld [vmem:[%s1623 + $0x340] sm:$0xff]
        %v1773 = vld [vmem:[%s1623 + $0x348] sm:$0xff]
        %v1774 = vld [vmem:[%s1623 + $0x350] sm:$0xff]
        %v1775 = vld [vmem:[%s1623 + $0x358] sm:$0xff]
        %v1776 = vld [vmem:[%s1623 + $0x360] sm:$0xff]
        %v1777 = vld [vmem:[%s1623 + $0x368] sm:$0xff]
        %v1778 = vld [vmem:[%s1623 + $0x370] sm:$0xff]
        %v1779 = vld [vmem:[%s1623 + $0x378] sm:$0xff]
        %v1780 = vld [vmem:[%s1623 + $0x380] sm:$0xff]
        %v1781 = vld [vmem:[%s1623 + $0x388] sm:$0xff]
        %v1782 = vld [vmem:[%s1623 + $0x390] sm:$0xff]
        %v1783 = vld [vmem:[%s1623 + $0x398] sm:$0xff]
        %v1784 = vld [vmem:[%s1623 + $0x3a0] sm:$0xff]
        %v1785 = vld [vmem:[%s1623 + $0x3a8] sm:$0xff]
        %v1786 = vld [vmem:[%s1623 + $0x3b0] sm:$0xff]
        %v1787 = vld [vmem:[%s1623 + $0x3b8] sm:$0xff]
        %v1788 = vld [vmem:[%s1623 + $0x3c0] sm:$0xff]
        %v1789 = vld [vmem:[%s1623 + $0x3c8] sm:$0xff]
        %v1790 = vld [vmem:[%s1623 + $0x3d0] sm:$0xff]
        %v1791 = vld [vmem:[%s1623 + $0x3d8] sm:$0xff]
        %v1792 = vld [vmem:[%s1623 + $0x3e0] sm:$0xff]
        %v1793 = vld [vmem:[%s1623 + $0x3e8] sm:$0xff]
        %v1794 = vld [vmem:[%s1623 + $0x3f0] sm:$0xff]
        %v1795 = vld [vmem:[%s1623 + $0x3f8] sm:$0xff]
        %v1796 = vld [vmem:[%s1623 + $0x400] sm:$0xff]
        %v1797 = vld [vmem:[%s1623 + $0x408] sm:$0xff]
        %v1798 = vld [vmem:[%s1623 + $0x410] sm:$0xff]
        %v1799 = vld [vmem:[%s1623 + $0x418] sm:$0xff]
        %v1800 = vld [vmem:[%s1623 + $0x420] sm:$0xff]
        %v1801 = vld [vmem:[%s1623 + $0x428] sm:$0xff]
        %v1802 = vld [vmem:[%s1623 + $0x430] sm:$0xff]
        %v1803 = vld [vmem:[%s1623 + $0x438] sm:$0xff]
        %v1804 = vld [vmem:[%s1623 + $0x440] sm:$0xff]
        %v1805 = vld [vmem:[%s1623 + $0x448] sm:$0xff]
        %v1806 = vld [vmem:[%s1623 + $0x450] sm:$0xff]
        %v1807 = vld [vmem:[%s1623 + $0x458] sm:$0xff]
        %v1808 = vld [vmem:[%s1623 + $0x460] sm:$0xff]
        %v1809 = vld [vmem:[%s1623 + $0x468] sm:$0xff]
        %v1810 = vld [vmem:[%s1623 + $0x470] sm:$0xff]
        %v1811 = vld [vmem:[%s1623 + $0x478] sm:$0xff]
        %v1812 = vld [vmem:[%s1623 + $0x480] sm:$0xff]
        %v1813 = vld [vmem:[%s1623 + $0x488] sm:$0xff]
        %v1814 = vld [vmem:[%s1623 + $0x490] sm:$0xff]
        %v1815 = vld [vmem:[%s1623 + $0x498] sm:$0xff]
        %v1816 = vld [vmem:[%s1623 + $0x4a0] sm:$0xff]
        %v1817 = vld [vmem:[%s1623 + $0x4a8] sm:$0xff]
        %v1818 = vld [vmem:[%s1623 + $0x4b0] sm:$0xff]
        %v1819 = vld [vmem:[%s1623 + $0x4b8] sm:$0xff]
        %v1820 = vld [vmem:[%s1623 + $0x4c0] sm:$0xff]
        %v1821 = vld [vmem:[%s1623 + $0x4c8] sm:$0xff]
        %v1822 = vld [vmem:[%s1623 + $0x4d0] sm:$0xff]
        %v1823 = vld [vmem:[%s1623 + $0x4d8] sm:$0xff]
        %v1824 = vld [vmem:[%s1623 + $0x4e0] sm:$0xff]
        %v1825 = vld [vmem:[%s1623 + $0x4e8] sm:$0xff]
        %v1826 = vld [vmem:[%s1623 + $0x4f0] sm:$0xff]
        %v1827 = vld [vmem:[%s1623 + $0x4f8] sm:$0xff]
        %v1828 = vld [vmem:[%s1623 + $0x500] sm:$0xff]
        %v1829 = vld [vmem:[%s1623 + $0x508] sm:$0xff]
        %v1830 = vld [vmem:[%s1623 + $0x510] sm:$0xff]
        %v1831 = vld [vmem:[%s1623 + $0x518] sm:$0xff]
        %v1832 = vld [vmem:[%s1623 + $0x520] sm:$0xff]
        %v1833 = vld [vmem:[%s1623 + $0x528] sm:$0xff]
        %v1834 = vld [vmem:[%s1623 + $0x530] sm:$0xff]
        %v1835 = vld [vmem:[%s1623 + $0x538] sm:$0xff]
        %v1836 = vld [vmem:[%s1623 + $0x540] sm:$0xff]
        %v1837 = vld [vmem:[%s1623 + $0x548] sm:$0xff]
        %v1838 = vld [vmem:[%s1623 + $0x550] sm:$0xff]
        %v1839 = vld [vmem:[%s1623 + $0x558] sm:$0xff]
        %v1840 = vld [vmem:[%s1623 + $0x560] sm:$0xff]
        %v1841 = vld [vmem:[%s1623 + $0x568] sm:$0xff]
        %v1842 = vld [vmem:[%s1623 + $0x570] sm:$0xff]
        %v1843 = vld [vmem:[%s1623 + $0x578] sm:$0xff]
        %v1844 = vld [vmem:[%s1623 + $0x580] sm:$0xff]
        %v1845 = vld [vmem:[%s1623 + $0x588] sm:$0xff]
        %v1846 = vld [vmem:[%s1623 + $0x590] sm:$0xff]
        %v1847 = vld [vmem:[%s1623 + $0x598] sm:$0xff]
        %v1848 = vld [vmem:[%s1623 + $0x5a0] sm:$0xff]
        %v1849 = vld [vmem:[%s1623 + $0x5a8] sm:$0xff]
        %v1850 = vld [vmem:[%s1623 + $0x5b0] sm:$0xff]
        %v1851 = vld [vmem:[%s1623 + $0x5b8] sm:$0xff]
        %v1852 = vld [vmem:[%s1623 + $0x5c0] sm:$0xff]
        %v1853 = vld [vmem:[%s1623 + $0x5c8] sm:$0xff]
        %v1854 = vld [vmem:[%s1623 + $0x5d0] sm:$0xff]
        %v1855 = vld [vmem:[%s1623 + $0x5d8] sm:$0xff]
        %v1856 = vld [vmem:[%s1623 + $0x5e0] sm:$0xff]
        %v1857 = vld [vmem:[%s1623 + $0x5e8] sm:$0xff]
        %v1858 = vld [vmem:[%s1623 + $0x5f0] sm:$0xff]
        %v1859 = vld [vmem:[%s1623 + $0x5f8] sm:$0xff]
        %v1860 = vld [vmem:[%s1623 + $0x600] sm:$0xff]
        %v1861 = vld [vmem:[%s1623 + $0x608] sm:$0xff]
        %v1862 = vld [vmem:[%s1623 + $0x610] sm:$0xff]
        %v1863 = vld [vmem:[%s1623 + $0x618] sm:$0xff]
        %v1864 = vld [vmem:[%s1623 + $0x620] sm:$0xff]
        %v1865 = vld [vmem:[%s1623 + $0x628] sm:$0xff]
        %v1866 = vld [vmem:[%s1623 + $0x630] sm:$0xff]
        %v1867 = vld [vmem:[%s1623 + $0x638] sm:$0xff]
        %v1868 = vld [vmem:[%s1623 + $0x640] sm:$0xff]
        %v1869 = vld [vmem:[%s1623 + $0x648] sm:$0xff]
        %v1870 = vld [vmem:[%s1623 + $0x650] sm:$0xff]
        %v1871 = vld [vmem:[%s1623 + $0x658] sm:$0xff]
        %v1872 = vld [vmem:[%s1623 + $0x660] sm:$0xff]
        %v1873 = vld [vmem:[%s1623 + $0x668] sm:$0xff]
        %v1874 = vld [vmem:[%s1623 + $0x670] sm:$0xff]
        %v1875 = vld [vmem:[%s1623 + $0x678] sm:$0xff]
        %v1876 = vld [vmem:[%s1623 + $0x680] sm:$0xff]
        %v1877 = vld [vmem:[%s1623 + $0x688] sm:$0xff]
        %v1878 = vld [vmem:[%s1623 + $0x690] sm:$0xff]
        %v1879 = vld [vmem:[%s1623 + $0x698] sm:$0xff]
        %v1880 = vld [vmem:[%s1623 + $0x6a0] sm:$0xff]
        %v1881 = vld [vmem:[%s1623 + $0x6a8] sm:$0xff]
        %v1882 = vld [vmem:[%s1623 + $0x6b0] sm:$0xff]
        %v1883 = vld [vmem:[%s1623 + $0x6b8] sm:$0xff]
        %v1884 = vld [vmem:[%s1623 + $0x6c0] sm:$0xff]
        %v1885 = vld [vmem:[%s1623 + $0x6c8] sm:$0xff]
        %v1886 = vld [vmem:[%s1623 + $0x6d0] sm:$0xff]
        %v1887 = vld [vmem:[%s1623 + $0x6d8] sm:$0xff]
        %v1888 = vld [vmem:[%s1623 + $0x6e0] sm:$0xff]
        %v1889 = vld [vmem:[%s1623 + $0x6e8] sm:$0xff]
        %v1890 = vld [vmem:[%s1623 + $0x6f0] sm:$0xff]
        %v1891 = vld [vmem:[%s1623 + $0x6f8] sm:$0xff]
        %v1892 = vld [vmem:[%s1623 + $0x700] sm:$0xff]
        %v1893 = vld [vmem:[%s1623 + $0x708] sm:$0xff]
        %v1894 = vld [vmem:[%s1623 + $0x710] sm:$0xff]
        %v1895 = vld [vmem:[%s1623 + $0x718] sm:$0xff]
        %v1896 = vld [vmem:[%s1623 + $0x720] sm:$0xff]
        %v1897 = vld [vmem:[%s1623 + $0x728] sm:$0xff]
        %v1898 = vld [vmem:[%s1623 + $0x730] sm:$0xff]
        %v1899 = vld [vmem:[%s1623 + $0x738] sm:$0xff]
        %v1900 = vld [vmem:[%s1623 + $0x740] sm:$0xff]
        %v1901 = vld [vmem:[%s1623 + $0x748] sm:$0xff]
        %v1902 = vld [vmem:[%s1623 + $0x750] sm:$0xff]
        %v1903 = vld [vmem:[%s1623 + $0x758] sm:$0xff]
        %v1904 = vld [vmem:[%s1623 + $0x760] sm:$0xff]
        %v1905 = vld [vmem:[%s1623 + $0x768] sm:$0xff]
        %v1906 = vld [vmem:[%s1623 + $0x770] sm:$0xff]
        %v1907 = vld [vmem:[%s1623 + $0x778] sm:$0xff]
        %v1908 = vld [vmem:[%s1623 + $0x780] sm:$0xff]
        %v1909 = vld [vmem:[%s1623 + $0x788] sm:$0xff]
        %v1910 = vld [vmem:[%s1623 + $0x790] sm:$0xff]
        %v1911 = vld [vmem:[%s1623 + $0x798] sm:$0xff]
        %v1912 = vld [vmem:[%s1623 + $0x7a0] sm:$0xff]
        %v1913 = vld [vmem:[%s1623 + $0x7a8] sm:$0xff]
        %v1914 = vld [vmem:[%s1623 + $0x7b0] sm:$0xff]
        %v1915 = vld [vmem:[%s1623 + $0x7b8] sm:$0xff]
        %v1916 = vld [vmem:[%s1623 + $0x7c0] sm:$0xff]
        %v1917 = vld [vmem:[%s1623 + $0x7c8] sm:$0xff]
        %v1918 = vld [vmem:[%s1623 + $0x7d0] sm:$0xff]
        %v1919 = vld [vmem:[%s1623 + $0x7d8] sm:$0xff]
        %v1920 = vld [vmem:[%s1623 + $0x7e0] sm:$0xff]
        %v1921 = vld [vmem:[%s1623 + $0x7e8] sm:$0xff]
        %v1922 = vld [vmem:[%s1623 + $0x7f0] sm:$0xff]
        %v1923 = vld [vmem:[%s1623 + $0x7f8] sm:$0xff]
        %v1924 = vld [vmem:[%s1623 + $0x800] sm:$0xff]
        %v1925 = vld [vmem:[%s1623 + $0x808] sm:$0xff]
        %v1926 = vld [vmem:[%s1623 + $0x810] sm:$0xff]
        %v1927 = vld [vmem:[%s1623 + $0x818] sm:$0xff]
        %v1928 = vld [vmem:[%s1623 + $0x820] sm:$0xff]
        %v1929 = vld [vmem:[%s1623 + $0x828] sm:$0xff]
        %v1930 = vld [vmem:[%s1623 + $0x830] sm:$0xff]
        %v1931 = vld [vmem:[%s1623 + $0x838] sm:$0xff]
        %v1932 = vld [vmem:[%s1623 + $0x840] sm:$0xff]
        %v1933 = vld [vmem:[%s1623 + $0x848] sm:$0xff]
        %v1934 = vld [vmem:[%s1623 + $0x850] sm:$0xff]
        %v1935 = vld [vmem:[%s1623 + $0x858] sm:$0xff]
        %v1936 = vld [vmem:[%s1623 + $0x860] sm:$0xff]
        %v1937 = vld [vmem:[%s1623 + $0x868] sm:$0xff]
        %v1938 = vld [vmem:[%s1623 + $0x870] sm:$0xff]
        %v1939 = vld [vmem:[%s1623 + $0x878] sm:$0xff]
        %v1940 = vld [vmem:[%s1623 + $0x880] sm:$0xff]
        %v1941 = vld [vmem:[%s1623 + $0x888] sm:$0xff]
        %v1942 = vld [vmem:[%s1623 + $0x890] sm:$0xff]
        %v1943 = vld [vmem:[%s1623 + $0x898] sm:$0xff]
        %v1944 = vmax.f32 %v1668, 0.0
        %v1945 = vmax.f32 %v1669, 0.0
        %v1946 = vmax.f32 %v1670, 0.0
        %v1947 = vmax.f32 %v1671, 0.0
        %v1948 = vmax.f32 %v1672, 0.0
        %v1949 = vmax.f32 %v1673, 0.0
        %v1950 = vmax.f32 %v1674, 0.0
        %v1951 = vmax.f32 %v1675, 0.0
        %v1952 = vmax.f32 %v1676, 0.0
        %v1953 = vmax.f32 %v1677, 0.0
        %v1954 = vmax.f32 %v1678, 0.0
        %v1955 = vmax.f32 %v1679, 0.0
        %v1956 = vmax.f32 %v1680, 0.0
        %v1957 = vmax.f32 %v1681, 0.0
        %v1958 = vmax.f32 %v1682, 0.0
        %v1959 = vmax.f32 %v1683, 0.0
        %v1960 = vmax.f32 %v1684, 0.0
        %v1961 = vmax.f32 %v1685, 0.0
        %v1962 = vmax.f32 %v1686, 0.0
        %v1963 = vmax.f32 %v1687, 0.0
        %v1964 = vmax.f32 %v1688, 0.0
        %v1965 = vmax.f32 %v1689, 0.0
        %v1966 = vmax.f32 %v1690, 0.0
        %v1967 = vmax.f32 %v1691, 0.0
        %v1968 = vmax.f32 %v1692, 0.0
        %v1969 = vmax.f32 %v1693, 0.0
        %v1970 = vmax.f32 %v1694, 0.0
        %v1971 = vmax.f32 %v1695, 0.0
        %v1972 = vmax.f32 %v1696, 0.0
        %v1973 = vmax.f32 %v1697, 0.0
        %v1974 = vmax.f32 %v1698, 0.0
        %v1975 = vmax.f32 %v1699, 0.0
        %v1976 = vmax.f32 %v1700, 0.0
        %v1977 = vmax.f32 %v1701, 0.0
        %v1978 = vmax.f32 %v1702, 0.0
        %v1979 = vmax.f32 %v1703, 0.0
        %v1980 = vmax.f32 %v1704, 0.0
        %v1981 = vmax.f32 %v1705, 0.0
        %v1982 = vmax.f32 %v1706, 0.0
        %v1983 = vmax.f32 %v1707, 0.0
        %v1984 = vmax.f32 %v1708, 0.0
        %v1985 = vmax.f32 %v1709, 0.0
        %v1986 = vmax.f32 %v1710, 0.0
        %v1987 = vmax.f32 %v1711, 0.0
        %v1988 = vmax.f32 %v1712, 0.0
        %v1989 = vmax.f32 %v1713, 0.0
        %v1990 = vmax.f32 %v1714, 0.0
        %v1991 = vmax.f32 %v1715, 0.0
        %v1992 = vmax.f32 %v1716, 0.0
        %v1993 = vmax.f32 %v1717, 0.0
        %v1994 = vmax.f32 %v1718, 0.0
        %v1995 = vmax.f32 %v1719, 0.0
        %v1996 = vmax.f32 %v1720, 0.0
        %v1997 = vmax.f32 %v1721, 0.0
        %v1998 = vmax.f32 %v1722, 0.0
        %v1999 = vmax.f32 %v1723, 0.0
        %v2000 = vmax.f32 %v1724, 0.0
        %v2001 = vmax.f32 %v1725, 0.0
        %v2002 = vmax.f32 %v1726, 0.0
        %v2003 = vmax.f32 %v1727, 0.0
        %v2004 = vmax.f32 %v1728, 0.0
        %v2005 = vmax.f32 %v1729, 0.0
        %v2006 = vmax.f32 %v1730, 0.0
        %v2007 = vmax.f32 %v1731, 0.0
        %v2008 = vmax.f32 %v1732, 0.0
        %v2009 = vmax.f32 %v1733, 0.0
        %v2010 = vmax.f32 %v1734, 0.0
        %v2011 = vmax.f32 %v1735, 0.0
        %v2012 = vmax.f32 %v1736, 0.0
        %v2013 = vmax.f32 %v1737, 0.0
        %v2014 = vmax.f32 %v1738, 0.0
        %v2015 = vmax.f32 %v1739, 0.0
        %v2016 = vmax.f32 %v1740, 0.0
        %v2017 = vmax.f32 %v1741, 0.0
        %v2018 = vmax.f32 %v1742, 0.0
        %v2019 = vmax.f32 %v1743, 0.0
        %v2020 = vmax.f32 %v1744, 0.0
        %v2021 = vmax.f32 %v1745, 0.0
        %v2022 = vmax.f32 %v1746, 0.0
        %v2023 = vmax.f32 %v1747, 0.0
        %v2024 = vmax.f32 %v1748, 0.0
        %v2025 = vmax.f32 %v1749, 0.0
        %v2026 = vmax.f32 %v1750, 0.0
        %v2027 = vmax.f32 %v1751, 0.0
        %v2028 = vmax.f32 %v1752, 0.0
        %v2029 = vmax.f32 %v1753, 0.0
        %v2030 = vmax.f32 %v1754, 0.0
        %v2031 = vmax.f32 %v1755, 0.0
        %v2032 = vmax.f32 %v1756, 0.0
        %v2033 = vmax.f32 %v1757, 0.0
        %v2034 = vmax.f32 %v1758, 0.0
        %v2035 = vmax.f32 %v1759, 0.0
        %v2036 = vmax.f32 %v1760, 0.0
        %v2037 = vmax.f32 %v1761, 0.0
        %v2038 = vmax.f32 %v1762, 0.0
        %v2039 = vmax.f32 %v1763, 0.0
        %v2040 = vmax.f32 %v1764, 0.0
        %v2041 = vmax.f32 %v1765, 0.0
        %v2042 = vmax.f32 %v1766, 0.0
        %v2043 = vmax.f32 %v1767, 0.0
        %v2044 = vmax.f32 %v1768, 0.0
        %v2045 = vmax.f32 %v1769, 0.0
        %v2046 = vmax.f32 %v1770, 0.0
        %v2047 = vmax.f32 %v1771, 0.0
        %v2048 = vmax.f32 %v1772, 0.0
        %v2049 = vmax.f32 %v1773, 0.0
        %v2050 = vmax.f32 %v1774, 0.0
        %v2051 = vmax.f32 %v1775, 0.0
        %v2052 = vmax.f32 %v1776, 0.0
        %v2053 = vmax.f32 %v1777, 0.0
        %v2054 = vmax.f32 %v1778, 0.0
        %v2055 = vmax.f32 %v1779, 0.0
        %v2056 = vmax.f32 %v1780, 0.0
        %v2057 = vmax.f32 %v1781, 0.0
        %v2058 = vmax.f32 %v1782, 0.0
        %v2059 = vmax.f32 %v1783, 0.0
        %v2060 = vmax.f32 %v1784, 0.0
        %v2061 = vmax.f32 %v1785, 0.0
        %v2062 = vmax.f32 %v1786, 0.0
        %v2063 = vmax.f32 %v1787, 0.0
        %v2064 = vmax.f32 %v1788, 0.0
        %v2065 = vmax.f32 %v1789, 0.0
        %v2066 = vmax.f32 %v1790, 0.0
        %v2067 = vmax.f32 %v1791, 0.0
        %v2068 = vmax.f32 %v1792, 0.0
        %v2069 = vmax.f32 %v1793, 0.0
        %v2070 = vmax.f32 %v1794, 0.0
        %v2071 = vmax.f32 %v1795, 0.0
        %v2072 = vmax.f32 %v1796, 0.0
        %v2073 = vmax.f32 %v1797, 0.0
        %v2074 = vmax.f32 %v1798, 0.0
        %v2075 = vmax.f32 %v1799, 0.0
        %v2076 = vmax.f32 %v1800, 0.0
        %v2077 = vmax.f32 %v1801, 0.0
        %v2078 = vmax.f32 %v1802, 0.0
        %v2079 = vmax.f32 %v1803, 0.0
        %v2080 = vmax.f32 %v1804, 0.0
        %v2081 = vmax.f32 %v1805, 0.0
        %v2082 = vmax.f32 %v1806, 0.0
        %v2083 = vmax.f32 %v1807, 0.0
        %v2084 = vmax.f32 %v1808, 0.0
        %v2085 = vmax.f32 %v1809, 0.0
        %v2086 = vmax.f32 %v1810, 0.0
        %v2087 = vmax.f32 %v1811, 0.0
        %v2088 = vmax.f32 %v1812, 0.0
        %v2089 = vmax.f32 %v1813, 0.0
        %v2090 = vmax.f32 %v1814, 0.0
        %v2091 = vmax.f32 %v1815, 0.0
        %v2092 = vmax.f32 %v1816, 0.0
        %v2093 = vmax.f32 %v1817, 0.0
        %v2094 = vmax.f32 %v1818, 0.0
        %v2095 = vmax.f32 %v1819, 0.0
        %v2096 = vmax.f32 %v1820, 0.0
        %v2097 = vmax.f32 %v1821, 0.0
        %v2098 = vmax.f32 %v1822, 0.0
        %v2099 = vmax.f32 %v1823, 0.0
        %v2100 = vmax.f32 %v1824, 0.0
        %v2101 = vmax.f32 %v1825, 0.0
        %v2102 = vmax.f32 %v1826, 0.0
        %v2103 = vmax.f32 %v1827, 0.0
        %v2104 = vmax.f32 %v1828, 0.0
        %v2105 = vmax.f32 %v1829, 0.0
        %v2106 = vmax.f32 %v1830, 0.0
        %v2107 = vmax.f32 %v1831, 0.0
        %v2108 = vmax.f32 %v1832, 0.0
        %v2109 = vmax.f32 %v1833, 0.0
        %v2110 = vmax.f32 %v1834, 0.0
        %v2111 = vmax.f32 %v1835, 0.0
        %v2112 = vmax.f32 %v1836, 0.0
        %v2113 = vmax.f32 %v1837, 0.0
        %v2114 = vmax.f32 %v1838, 0.0
        %v2115 = vmax.f32 %v1839, 0.0
        %v2116 = vmax.f32 %v1840, 0.0
        %v2117 = vmax.f32 %v1841, 0.0
        %v2118 = vmax.f32 %v1842, 0.0
        %v2119 = vmax.f32 %v1843, 0.0
        %v2120 = vmax.f32 %v1844, 0.0
        %v2121 = vmax.f32 %v1845, 0.0
        %v2122 = vmax.f32 %v1846, 0.0
        %v2123 = vmax.f32 %v1847, 0.0
        %v2124 = vmax.f32 %v1848, 0.0
        %v2125 = vmax.f32 %v1849, 0.0
        %v2126 = vmax.f32 %v1850, 0.0
        %v2127 = vmax.f32 %v1851, 0.0
        %v2128 = vmax.f32 %v1852, 0.0
        %v2129 = vmax.f32 %v1853, 0.0
        %v2130 = vmax.f32 %v1854, 0.0
        %v2131 = vmax.f32 %v1855, 0.0
        %v2132 = vmax.f32 %v1856, 0.0
        %v2133 = vmax.f32 %v1857, 0.0
        %v2134 = vmax.f32 %v1858, 0.0
        %v2135 = vmax.f32 %v1859, 0.0
        %v2136 = vmax.f32 %v1860, 0.0
        %v2137 = vmax.f32 %v1861, 0.0
        %v2138 = vmax.f32 %v1862, 0.0
        %v2139 = vmax.f32 %v1863, 0.0
        %v2140 = vmax.f32 %v1864, 0.0
        %v2141 = vmax.f32 %v1865, 0.0
        %v2142 = vmax.f32 %v1866, 0.0
        %v2143 = vmax.f32 %v1867, 0.0
        %v2144 = vmax.f32 %v1868, 0.0
        %v2145 = vmax.f32 %v1869, 0.0
        %v2146 = vmax.f32 %v1870, 0.0
        %v2147 = vmax.f32 %v1871, 0.0
        %v2148 = vmax.f32 %v1872, 0.0
        %v2149 = vmax.f32 %v1873, 0.0
        %v2150 = vmax.f32 %v1874, 0.0
        %v2151 = vmax.f32 %v1875, 0.0
        %v2152 = vmax.f32 %v1876, 0.0
        %v2153 = vmax.f32 %v1877, 0.0
        %v2154 = vmax.f32 %v1878, 0.0
        %v2155 = vmax.f32 %v1879, 0.0
        %v2156 = vmax.f32 %v1880, 0.0
        %v2157 = vmax.f32 %v1881, 0.0
        %v2158 = vmax.f32 %v1882, 0.0
        %v2159 = vmax.f32 %v1883, 0.0
        %v2160 = vmax.f32 %v1884, 0.0
        %v2161 = vmax.f32 %v1885, 0.0
        %v2162 = vmax.f32 %v1886, 0.0
        %v2163 = vmax.f32 %v1887, 0.0
        %v2164 = vmax.f32 %v1888, 0.0
        %v2165 = vmax.f32 %v1889, 0.0
        %v2166 = vmax.f32 %v1890, 0.0
        %v2167 = vmax.f32 %v1891, 0.0
        %v2168 = vmax.f32 %v1892, 0.0
        %v2169 = vmax.f32 %v1893, 0.0
        %v2170 = vmax.f32 %v1894, 0.0
        %v2171 = vmax.f32 %v1895, 0.0
        %v2172 = vmax.f32 %v1896, 0.0
        %v2173 = vmax.f32 %v1897, 0.0
        %v2174 = vmax.f32 %v1898, 0.0
        %v2175 = vmax.f32 %v1899, 0.0
        %v2176 = vmax.f32 %v1900, 0.0
        %v2177 = vmax.f32 %v1901, 0.0
        %v2178 = vmax.f32 %v1902, 0.0
        %v2179 = vmax.f32 %v1903, 0.0
        %v2180 = vmax.f32 %v1904, 0.0
        %v2181 = vmax.f32 %v1905, 0.0
        %v2182 = vmax.f32 %v1906, 0.0
        %v2183 = vmax.f32 %v1907, 0.0
        %v2184 = vmax.f32 %v1908, 0.0
        %v2185 = vmax.f32 %v1909, 0.0
        %v2186 = vmax.f32 %v1910, 0.0
        %v2187 = vmax.f32 %v1911, 0.0
        %v2188 = vmax.f32 %v1912, 0.0
        %v2189 = vmax.f32 %v1913, 0.0
        %v2190 = vmax.f32 %v1914, 0.0
        %v2191 = vmax.f32 %v1915, 0.0
        %v2192 = vmax.f32 %v1916, 0.0
        %v2193 = vmax.f32 %v1917, 0.0
        %v2194 = vmax.f32 %v1918, 0.0
        %v2195 = vmax.f32 %v1919, 0.0
        %v2196 = vmax.f32 %v1920, 0.0
        %v2197 = vmax.f32 %v1921, 0.0
        %v2198 = vmax.f32 %v1922, 0.0
        %v2199 = vmax.f32 %v1923, 0.0
        %v2200 = vmax.f32 %v1924, 0.0
        %v2201 = vmax.f32 %v1925, 0.0
        %v2202 = vmax.f32 %v1926, 0.0
        %v2203 = vmax.f32 %v1927, 0.0
        %v2204 = vmax.f32 %v1928, 0.0
        %v2205 = vmax.f32 %v1929, 0.0
        %v2206 = vmax.f32 %v1930, 0.0
        %v2207 = vmax.f32 %v1931, 0.0
        %v2208 = vmax.f32 %v1932, 0.0
        %v2209 = vmax.f32 %v1933, 0.0
        %v2210 = vmax.f32 %v1934, 0.0
        %v2211 = vmax.f32 %v1935, 0.0
        %v2212 = vmax.f32 %v1936, 0.0
        %v2213 = vmax.f32 %v1937, 0.0
        %v2214 = vmax.f32 %v1938, 0.0
        %v2215 = vmax.f32 %v1939, 0.0
        %v2216 = vmax.f32 %v1940, 0.0
        %v2217 = vmax.f32 %v1941, 0.0
        %v2218 = vmax.f32 %v1942, 0.0
        %v2219 = vmax.f32 %v1943, 0.0
        %vm2220 = vcmask 400384
        %v2221 = vsel %vm2220, %v1944, 0.0
        %2222 = vadd.xlane.f32.xlu0 %v2221
        %v2223 = vpop.xlane.xlu0 %2222
        %v2224 = vsel %vm2220, %v1945, 0.0
        %2225 = vadd.xlane.f32.xlu0 %v2224
        %v2226 = vpop.xlane.xlu0 %2225
        %v2227 = vsel %vm2220, %v1946, 0.0
        %2228 = vadd.xlane.f32.xlu0 %v2227
        %v2229 = vpop.xlane.xlu0 %2228
        %v2230 = vsel %vm2220, %v1947, 0.0
        %2231 = vadd.xlane.f32.xlu0 %v2230
        %v2232 = vpop.xlane.xlu0 %2231
        %v2233 = vsel %vm2220, %v1948, 0.0
        %2234 = vadd.xlane.f32.xlu0 %v2233
        %v2235 = vpop.xlane.xlu0 %2234
        %v2236 = vsel %vm2220, %v1949, 0.0
        %2237 = vadd.xlane.f32.xlu0 %v2236
        %v2238 = vpop.xlane.xlu0 %2237
        %v2239 = vsel %vm2220, %v1950, 0.0
        %2240 = vadd.xlane.f32.xlu0 %v2239
        %v2241 = vpop.xlane.xlu0 %2240
        %v2242 = vsel %vm2220, %v1951, 0.0
        %2243 = vadd.xlane.f32.xlu0 %v2242
        %v2244 = vpop.xlane.xlu0 %2243
        %v2245 = vsel %vm2220, %v1952, 0.0
        %2246 = vadd.xlane.f32.xlu0 %v2245
        %v2247 = vpop.xlane.xlu0 %2246
        %v2248 = vsel %vm2220, %v1953, 0.0
        %2249 = vadd.xlane.f32.xlu0 %v2248
        %v2250 = vpop.xlane.xlu0 %2249
        %v2251 = vsel %vm2220, %v1954, 0.0
        %2252 = vadd.xlane.f32.xlu0 %v2251
        %v2253 = vpop.xlane.xlu0 %2252
        %v2254 = vsel %vm2220, %v1955, 0.0
        %2255 = vadd.xlane.f32.xlu0 %v2254
        %v2256 = vpop.xlane.xlu0 %2255
        %v2257 = vsel %vm2220, %v1956, 0.0
        %2258 = vadd.xlane.f32.xlu0 %v2257
        %v2259 = vpop.xlane.xlu0 %2258
        %v2260 = vsel %vm2220, %v1957, 0.0
        %2261 = vadd.xlane.f32.xlu0 %v2260
        %v2262 = vpop.xlane.xlu0 %2261
        %v2263 = vsel %vm2220, %v1958, 0.0
        %2264 = vadd.xlane.f32.xlu0 %v2263
        %v2265 = vpop.xlane.xlu0 %2264
        %v2266 = vsel %vm2220, %v1959, 0.0
        %2267 = vadd.xlane.f32.xlu0 %v2266
        %v2268 = vpop.xlane.xlu0 %2267
        %v2269 = vsel %vm2220, %v1960, 0.0
        %2270 = vadd.xlane.f32.xlu0 %v2269
        %v2271 = vpop.xlane.xlu0 %2270
        %v2272 = vsel %vm2220, %v1961, 0.0
        %2273 = vadd.xlane.f32.xlu0 %v2272
        %v2274 = vpop.xlane.xlu0 %2273
        %v2275 = vsel %vm2220, %v1962, 0.0
        %2276 = vadd.xlane.f32.xlu0 %v2275
        %v2277 = vpop.xlane.xlu0 %2276
        %v2278 = vsel %vm2220, %v1963, 0.0
        %2279 = vadd.xlane.f32.xlu0 %v2278
        %v2280 = vpop.xlane.xlu0 %2279
        %v2281 = vsel %vm2220, %v1964, 0.0
        %2282 = vadd.xlane.f32.xlu0 %v2281
        %v2283 = vpop.xlane.xlu0 %2282
        %v2284 = vsel %vm2220, %v1965, 0.0
        %2285 = vadd.xlane.f32.xlu0 %v2284
        %v2286 = vpop.xlane.xlu0 %2285
        %v2287 = vsel %vm2220, %v1966, 0.0
        %2288 = vadd.xlane.f32.xlu0 %v2287
        %v2289 = vpop.xlane.xlu0 %2288
        %v2290 = vsel %vm2220, %v1967, 0.0
        %2291 = vadd.xlane.f32.xlu0 %v2290
        %v2292 = vpop.xlane.xlu0 %2291
        %v2293 = vsel %vm2220, %v1968, 0.0
        %2294 = vadd.xlane.f32.xlu0 %v2293
        %v2295 = vpop.xlane.xlu0 %2294
        %v2296 = vsel %vm2220, %v1969, 0.0
        %2297 = vadd.xlane.f32.xlu0 %v2296
        %v2298 = vpop.xlane.xlu0 %2297
        %v2299 = vsel %vm2220, %v1970, 0.0
        %2300 = vadd.xlane.f32.xlu0 %v2299
        %v2301 = vpop.xlane.xlu0 %2300
        %v2302 = vsel %vm2220, %v1971, 0.0
        %2303 = vadd.xlane.f32.xlu0 %v2302
        %v2304 = vpop.xlane.xlu0 %2303
        %v2305 = vsel %vm2220, %v1972, 0.0
        %2306 = vadd.xlane.f32.xlu0 %v2305
        %v2307 = vpop.xlane.xlu0 %2306
        %v2308 = vsel %vm2220, %v1973, 0.0
        %2309 = vadd.xlane.f32.xlu0 %v2308
        %v2310 = vpop.xlane.xlu0 %2309
        %v2311 = vsel %vm2220, %v1974, 0.0
        %2312 = vadd.xlane.f32.xlu0 %v2311
        %v2313 = vpop.xlane.xlu0 %2312
        %v2314 = vsel %vm2220, %v1975, 0.0
        %2315 = vadd.xlane.f32.xlu0 %v2314
        %v2316 = vpop.xlane.xlu0 %2315
        %v2317 = vsel %vm2220, %v1976, 0.0
        %2318 = vadd.xlane.f32.xlu0 %v2317
        %v2319 = vpop.xlane.xlu0 %2318
        %v2320 = vsel %vm2220, %v1977, 0.0
        %2321 = vadd.xlane.f32.xlu0 %v2320
        %v2322 = vpop.xlane.xlu0 %2321
        %v2323 = vsel %vm2220, %v1978, 0.0
        %2324 = vadd.xlane.f32.xlu0 %v2323
        %v2325 = vpop.xlane.xlu0 %2324
        %v2326 = vsel %vm2220, %v1979, 0.0
        %2327 = vadd.xlane.f32.xlu0 %v2326
        %v2328 = vpop.xlane.xlu0 %2327
        %v2329 = vsel %vm2220, %v1980, 0.0
        %2330 = vadd.xlane.f32.xlu0 %v2329
        %v2331 = vpop.xlane.xlu0 %2330
        %v2332 = vsel %vm2220, %v1981, 0.0
        %2333 = vadd.xlane.f32.xlu0 %v2332
        %v2334 = vpop.xlane.xlu0 %2333
        %v2335 = vsel %vm2220, %v1982, 0.0
        %2336 = vadd.xlane.f32.xlu0 %v2335
        %v2337 = vpop.xlane.xlu0 %2336
        %v2338 = vsel %vm2220, %v1983, 0.0
        %2339 = vadd.xlane.f32.xlu0 %v2338
        %v2340 = vpop.xlane.xlu0 %2339
        %v2341 = vsel %vm2220, %v1984, 0.0
        %2342 = vadd.xlane.f32.xlu0 %v2341
        %v2343 = vpop.xlane.xlu0 %2342
        %v2344 = vsel %vm2220, %v1985, 0.0
        %2345 = vadd.xlane.f32.xlu0 %v2344
        %v2346 = vpop.xlane.xlu0 %2345
        %v2347 = vsel %vm2220, %v1986, 0.0
        %2348 = vadd.xlane.f32.xlu0 %v2347
        %v2349 = vpop.xlane.xlu0 %2348
        %v2350 = vsel %vm2220, %v1987, 0.0
        %2351 = vadd.xlane.f32.xlu0 %v2350
        %v2352 = vpop.xlane.xlu0 %2351
        %v2353 = vsel %vm2220, %v1988, 0.0
        %2354 = vadd.xlane.f32.xlu0 %v2353
        %v2355 = vpop.xlane.xlu0 %2354
        %v2356 = vsel %vm2220, %v1989, 0.0
        %2357 = vadd.xlane.f32.xlu0 %v2356
        %v2358 = vpop.xlane.xlu0 %2357
        %v2359 = vsel %vm2220, %v1990, 0.0
        %2360 = vadd.xlane.f32.xlu0 %v2359
        %v2361 = vpop.xlane.xlu0 %2360
        %v2362 = vsel %vm2220, %v1991, 0.0
        %2363 = vadd.xlane.f32.xlu0 %v2362
        %v2364 = vpop.xlane.xlu0 %2363
        %v2365 = vsel %vm2220, %v1992, 0.0
        %2366 = vadd.xlane.f32.xlu0 %v2365
        %v2367 = vpop.xlane.xlu0 %2366
        %v2368 = vsel %vm2220, %v1993, 0.0
        %2369 = vadd.xlane.f32.xlu0 %v2368
        %v2370 = vpop.xlane.xlu0 %2369
        %v2371 = vsel %vm2220, %v1994, 0.0
        %2372 = vadd.xlane.f32.xlu0 %v2371
        %v2373 = vpop.xlane.xlu0 %2372
        %v2374 = vsel %vm2220, %v1995, 0.0
        %2375 = vadd.xlane.f32.xlu0 %v2374
        %v2376 = vpop.xlane.xlu0 %2375
        %v2377 = vsel %vm2220, %v1996, 0.0
        %2378 = vadd.xlane.f32.xlu0 %v2377
        %v2379 = vpop.xlane.xlu0 %2378
        %v2380 = vsel %vm2220, %v1997, 0.0
        %2381 = vadd.xlane.f32.xlu0 %v2380
        %v2382 = vpop.xlane.xlu0 %2381
        %v2383 = vsel %vm2220, %v1998, 0.0
        %2384 = vadd.xlane.f32.xlu0 %v2383
        %v2385 = vpop.xlane.xlu0 %2384
        %v2386 = vsel %vm2220, %v1999, 0.0
        %2387 = vadd.xlane.f32.xlu0 %v2386
        %v2388 = vpop.xlane.xlu0 %2387
        %v2389 = vsel %vm2220, %v2000, 0.0
        %2390 = vadd.xlane.f32.xlu0 %v2389
        %v2391 = vpop.xlane.xlu0 %2390
        %v2392 = vsel %vm2220, %v2001, 0.0
        %2393 = vadd.xlane.f32.xlu0 %v2392
        %v2394 = vpop.xlane.xlu0 %2393
        %v2395 = vsel %vm2220, %v2002, 0.0
        %2396 = vadd.xlane.f32.xlu0 %v2395
        %v2397 = vpop.xlane.xlu0 %2396
        %v2398 = vsel %vm2220, %v2003, 0.0
        %2399 = vadd.xlane.f32.xlu0 %v2398
        %v2400 = vpop.xlane.xlu0 %2399
        %v2401 = vsel %vm2220, %v2004, 0.0
        %2402 = vadd.xlane.f32.xlu0 %v2401
        %v2403 = vpop.xlane.xlu0 %2402
        %v2404 = vsel %vm2220, %v2005, 0.0
        %2405 = vadd.xlane.f32.xlu0 %v2404
        %v2406 = vpop.xlane.xlu0 %2405
        %v2407 = vsel %vm2220, %v2006, 0.0
        %2408 = vadd.xlane.f32.xlu0 %v2407
        %v2409 = vpop.xlane.xlu0 %2408
        %v2410 = vsel %vm2220, %v2007, 0.0
        %2411 = vadd.xlane.f32.xlu0 %v2410
        %v2412 = vpop.xlane.xlu0 %2411
        %v2413 = vsel %vm2220, %v2008, 0.0
        %2414 = vadd.xlane.f32.xlu0 %v2413
        %v2415 = vpop.xlane.xlu0 %2414
        %v2416 = vsel %vm2220, %v2009, 0.0
        %2417 = vadd.xlane.f32.xlu0 %v2416
        %v2418 = vpop.xlane.xlu0 %2417
        %v2419 = vsel %vm2220, %v2010, 0.0
        %2420 = vadd.xlane.f32.xlu0 %v2419
        %v2421 = vpop.xlane.xlu0 %2420
        %v2422 = vsel %vm2220, %v2011, 0.0
        %2423 = vadd.xlane.f32.xlu0 %v2422
        %v2424 = vpop.xlane.xlu0 %2423
        %v2425 = vsel %vm2220, %v2012, 0.0
        %2426 = vadd.xlane.f32.xlu0 %v2425
        %v2427 = vpop.xlane.xlu0 %2426
        %v2428 = vsel %vm2220, %v2013, 0.0
        %2429 = vadd.xlane.f32.xlu0 %v2428
        %v2430 = vpop.xlane.xlu0 %2429
        %v2431 = vsel %vm2220, %v2014, 0.0
        %2432 = vadd.xlane.f32.xlu0 %v2431
        %v2433 = vpop.xlane.xlu0 %2432
        %v2434 = vsel %vm2220, %v2015, 0.0
        %2435 = vadd.xlane.f32.xlu0 %v2434
        %v2436 = vpop.xlane.xlu0 %2435
        %v2437 = vsel %vm2220, %v2016, 0.0
        %2438 = vadd.xlane.f32.xlu0 %v2437
        %v2439 = vpop.xlane.xlu0 %2438
        %v2440 = vsel %vm2220, %v2017, 0.0
        %2441 = vadd.xlane.f32.xlu0 %v2440
        %v2442 = vpop.xlane.xlu0 %2441
        %v2443 = vsel %vm2220, %v2018, 0.0
        %2444 = vadd.xlane.f32.xlu0 %v2443
        %v2445 = vpop.xlane.xlu0 %2444
        %v2446 = vsel %vm2220, %v2019, 0.0
        %2447 = vadd.xlane.f32.xlu0 %v2446
        %v2448 = vpop.xlane.xlu0 %2447
        %v2449 = vsel %vm2220, %v2020, 0.0
        %2450 = vadd.xlane.f32.xlu0 %v2449
        %v2451 = vpop.xlane.xlu0 %2450
        %v2452 = vsel %vm2220, %v2021, 0.0
        %2453 = vadd.xlane.f32.xlu0 %v2452
        %v2454 = vpop.xlane.xlu0 %2453
        %v2455 = vsel %vm2220, %v2022, 0.0
        %2456 = vadd.xlane.f32.xlu0 %v2455
        %v2457 = vpop.xlane.xlu0 %2456
        %v2458 = vsel %vm2220, %v2023, 0.0
        %2459 = vadd.xlane.f32.xlu0 %v2458
        %v2460 = vpop.xlane.xlu0 %2459
        %v2461 = vsel %vm2220, %v2024, 0.0
        %2462 = vadd.xlane.f32.xlu0 %v2461
        %v2463 = vpop.xlane.xlu0 %2462
        %v2464 = vsel %vm2220, %v2025, 0.0
        %2465 = vadd.xlane.f32.xlu0 %v2464
        %v2466 = vpop.xlane.xlu0 %2465
        %v2467 = vsel %vm2220, %v2026, 0.0
        %2468 = vadd.xlane.f32.xlu0 %v2467
        %v2469 = vpop.xlane.xlu0 %2468
        %v2470 = vsel %vm2220, %v2027, 0.0
        %2471 = vadd.xlane.f32.xlu0 %v2470
        %v2472 = vpop.xlane.xlu0 %2471
        %v2473 = vsel %vm2220, %v2028, 0.0
        %2474 = vadd.xlane.f32.xlu0 %v2473
        %v2475 = vpop.xlane.xlu0 %2474
        %v2476 = vsel %vm2220, %v2029, 0.0
        %2477 = vadd.xlane.f32.xlu0 %v2476
        %v2478 = vpop.xlane.xlu0 %2477
        %v2479 = vsel %vm2220, %v2030, 0.0
        %2480 = vadd.xlane.f32.xlu0 %v2479
        %v2481 = vpop.xlane.xlu0 %2480
        %v2482 = vsel %vm2220, %v2031, 0.0
        %2483 = vadd.xlane.f32.xlu0 %v2482
        %v2484 = vpop.xlane.xlu0 %2483
        %v2485 = vsel %vm2220, %v2032, 0.0
        %2486 = vadd.xlane.f32.xlu0 %v2485
        %v2487 = vpop.xlane.xlu0 %2486
        %v2488 = vsel %vm2220, %v2033, 0.0
        %2489 = vadd.xlane.f32.xlu0 %v2488
        %v2490 = vpop.xlane.xlu0 %2489
        %v2491 = vsel %vm2220, %v2034, 0.0
        %2492 = vadd.xlane.f32.xlu0 %v2491
        %v2493 = vpop.xlane.xlu0 %2492
        %v2494 = vsel %vm2220, %v2035, 0.0
        %2495 = vadd.xlane.f32.xlu0 %v2494
        %v2496 = vpop.xlane.xlu0 %2495
        %v2497 = vsel %vm2220, %v2036, 0.0
        %2498 = vadd.xlane.f32.xlu0 %v2497
        %v2499 = vpop.xlane.xlu0 %2498
        %v2500 = vsel %vm2220, %v2037, 0.0
        %2501 = vadd.xlane.f32.xlu0 %v2500
        %v2502 = vpop.xlane.xlu0 %2501
        %v2503 = vsel %vm2220, %v2038, 0.0
        %2504 = vadd.xlane.f32.xlu0 %v2503
        %v2505 = vpop.xlane.xlu0 %2504
        %v2506 = vsel %vm2220, %v2039, 0.0
        %2507 = vadd.xlane.f32.xlu0 %v2506
        %v2508 = vpop.xlane.xlu0 %2507
        %v2509 = vsel %vm2220, %v2040, 0.0
        %2510 = vadd.xlane.f32.xlu0 %v2509
        %v2511 = vpop.xlane.xlu0 %2510
        %v2512 = vsel %vm2220, %v2041, 0.0
        %2513 = vadd.xlane.f32.xlu0 %v2512
        %v2514 = vpop.xlane.xlu0 %2513
        %v2515 = vsel %vm2220, %v2042, 0.0
        %2516 = vadd.xlane.f32.xlu0 %v2515
        %v2517 = vpop.xlane.xlu0 %2516
        %v2518 = vsel %vm2220, %v2043, 0.0
        %2519 = vadd.xlane.f32.xlu0 %v2518
        %v2520 = vpop.xlane.xlu0 %2519
        %v2521 = vsel %vm2220, %v2044, 0.0
        %2522 = vadd.xlane.f32.xlu0 %v2521
        %v2523 = vpop.xlane.xlu0 %2522
        %v2524 = vsel %vm2220, %v2045, 0.0
        %2525 = vadd.xlane.f32.xlu0 %v2524
        %v2526 = vpop.xlane.xlu0 %2525
        %v2527 = vsel %vm2220, %v2046, 0.0
        %2528 = vadd.xlane.f32.xlu0 %v2527
        %v2529 = vpop.xlane.xlu0 %2528
        %v2530 = vsel %vm2220, %v2047, 0.0
        %2531 = vadd.xlane.f32.xlu0 %v2530
        %v2532 = vpop.xlane.xlu0 %2531
        %v2533 = vsel %vm2220, %v2048, 0.0
        %2534 = vadd.xlane.f32.xlu0 %v2533
        %v2535 = vpop.xlane.xlu0 %2534
        %v2536 = vsel %vm2220, %v2049, 0.0
        %2537 = vadd.xlane.f32.xlu0 %v2536
        %v2538 = vpop.xlane.xlu0 %2537
        %v2539 = vsel %vm2220, %v2050, 0.0
        %2540 = vadd.xlane.f32.xlu0 %v2539
        %v2541 = vpop.xlane.xlu0 %2540
        %v2542 = vsel %vm2220, %v2051, 0.0
        %2543 = vadd.xlane.f32.xlu0 %v2542
        %v2544 = vpop.xlane.xlu0 %2543
        %v2545 = vsel %vm2220, %v2052, 0.0
        %2546 = vadd.xlane.f32.xlu0 %v2545
        %v2547 = vpop.xlane.xlu0 %2546
        %v2548 = vsel %vm2220, %v2053, 0.0
        %2549 = vadd.xlane.f32.xlu0 %v2548
        %v2550 = vpop.xlane.xlu0 %2549
        %v2551 = vsel %vm2220, %v2054, 0.0
        %2552 = vadd.xlane.f32.xlu0 %v2551
        %v2553 = vpop.xlane.xlu0 %2552
        %v2554 = vsel %vm2220, %v2055, 0.0
        %2555 = vadd.xlane.f32.xlu0 %v2554
        %v2556 = vpop.xlane.xlu0 %2555
        %v2557 = vsel %vm2220, %v2056, 0.0
        %2558 = vadd.xlane.f32.xlu0 %v2557
        %v2559 = vpop.xlane.xlu0 %2558
        %v2560 = vsel %vm2220, %v2057, 0.0
        %2561 = vadd.xlane.f32.xlu0 %v2560
        %v2562 = vpop.xlane.xlu0 %2561
        %v2563 = vsel %vm2220, %v2058, 0.0
        %2564 = vadd.xlane.f32.xlu0 %v2563
        %v2565 = vpop.xlane.xlu0 %2564
        %v2566 = vsel %vm2220, %v2059, 0.0
        %2567 = vadd.xlane.f32.xlu0 %v2566
        %v2568 = vpop.xlane.xlu0 %2567
        %v2569 = vsel %vm2220, %v2060, 0.0
        %2570 = vadd.xlane.f32.xlu0 %v2569
        %v2571 = vpop.xlane.xlu0 %2570
        %v2572 = vsel %vm2220, %v2061, 0.0
        %2573 = vadd.xlane.f32.xlu0 %v2572
        %v2574 = vpop.xlane.xlu0 %2573
        %v2575 = vsel %vm2220, %v2062, 0.0
        %2576 = vadd.xlane.f32.xlu0 %v2575
        %v2577 = vpop.xlane.xlu0 %2576
        %v2578 = vsel %vm2220, %v2063, 0.0
        %2579 = vadd.xlane.f32.xlu0 %v2578
        %v2580 = vpop.xlane.xlu0 %2579
        %v2581 = vsel %vm2220, %v2064, 0.0
        %2582 = vadd.xlane.f32.xlu0 %v2581
        %v2583 = vpop.xlane.xlu0 %2582
        %v2584 = vsel %vm2220, %v2065, 0.0
        %2585 = vadd.xlane.f32.xlu0 %v2584
        %v2586 = vpop.xlane.xlu0 %2585
        %v2587 = vsel %vm2220, %v2066, 0.0
        %2588 = vadd.xlane.f32.xlu0 %v2587
        %v2589 = vpop.xlane.xlu0 %2588
        %v2590 = vsel %vm2220, %v2067, 0.0
        %2591 = vadd.xlane.f32.xlu0 %v2590
        %v2592 = vpop.xlane.xlu0 %2591
        %v2593 = vsel %vm2220, %v2068, 0.0
        %2594 = vadd.xlane.f32.xlu0 %v2593
        %v2595 = vpop.xlane.xlu0 %2594
        %v2596 = vsel %vm2220, %v2069, 0.0
        %2597 = vadd.xlane.f32.xlu0 %v2596
        %v2598 = vpop.xlane.xlu0 %2597
        %v2599 = vsel %vm2220, %v2070, 0.0
        %2600 = vadd.xlane.f32.xlu0 %v2599
        %v2601 = vpop.xlane.xlu0 %2600
        %v2602 = vsel %vm2220, %v2071, 0.0
        %2603 = vadd.xlane.f32.xlu0 %v2602
        %v2604 = vpop.xlane.xlu0 %2603
        %v2605 = vsel %vm2220, %v2072, 0.0
        %2606 = vadd.xlane.f32.xlu0 %v2605
        %v2607 = vpop.xlane.xlu0 %2606
        %v2608 = vsel %vm2220, %v2073, 0.0
        %2609 = vadd.xlane.f32.xlu0 %v2608
        %v2610 = vpop.xlane.xlu0 %2609
        %v2611 = vsel %vm2220, %v2074, 0.0
        %2612 = vadd.xlane.f32.xlu0 %v2611
        %v2613 = vpop.xlane.xlu0 %2612
        %v2614 = vsel %vm2220, %v2075, 0.0
        %2615 = vadd.xlane.f32.xlu0 %v2614
        %v2616 = vpop.xlane.xlu0 %2615
        %v2617 = vsel %vm2220, %v2076, 0.0
        %2618 = vadd.xlane.f32.xlu0 %v2617
        %v2619 = vpop.xlane.xlu0 %2618
        %v2620 = vsel %vm2220, %v2077, 0.0
        %2621 = vadd.xlane.f32.xlu0 %v2620
        %v2622 = vpop.xlane.xlu0 %2621
        %v2623 = vsel %vm2220, %v2078, 0.0
        %2624 = vadd.xlane.f32.xlu0 %v2623
        %v2625 = vpop.xlane.xlu0 %2624
        %v2626 = vsel %vm2220, %v2079, 0.0
        %2627 = vadd.xlane.f32.xlu0 %v2626
        %v2628 = vpop.xlane.xlu0 %2627
        %v2629 = vsel %vm2220, %v2080, 0.0
        %2630 = vadd.xlane.f32.xlu0 %v2629
        %v2631 = vpop.xlane.xlu0 %2630
        %v2632 = vsel %vm2220, %v2081, 0.0
        %2633 = vadd.xlane.f32.xlu0 %v2632
        %v2634 = vpop.xlane.xlu0 %2633
        %v2635 = vsel %vm2220, %v2082, 0.0
        %2636 = vadd.xlane.f32.xlu0 %v2635
        %v2637 = vpop.xlane.xlu0 %2636
        %v2638 = vsel %vm2220, %v2083, 0.0
        %2639 = vadd.xlane.f32.xlu0 %v2638
        %v2640 = vpop.xlane.xlu0 %2639
        %v2641 = vsel %vm2220, %v2084, 0.0
        %2642 = vadd.xlane.f32.xlu0 %v2641
        %v2643 = vpop.xlane.xlu0 %2642
        %v2644 = vsel %vm2220, %v2085, 0.0
        %2645 = vadd.xlane.f32.xlu0 %v2644
        %v2646 = vpop.xlane.xlu0 %2645
        %v2647 = vsel %vm2220, %v2086, 0.0
        %2648 = vadd.xlane.f32.xlu0 %v2647
        %v2649 = vpop.xlane.xlu0 %2648
        %v2650 = vsel %vm2220, %v2087, 0.0
        %2651 = vadd.xlane.f32.xlu0 %v2650
        %v2652 = vpop.xlane.xlu0 %2651
        %v2653 = vsel %vm2220, %v2088, 0.0
        %2654 = vadd.xlane.f32.xlu0 %v2653
        %v2655 = vpop.xlane.xlu0 %2654
        %v2656 = vsel %vm2220, %v2089, 0.0
        %2657 = vadd.xlane.f32.xlu0 %v2656
        %v2658 = vpop.xlane.xlu0 %2657
        %v2659 = vsel %vm2220, %v2090, 0.0
        %2660 = vadd.xlane.f32.xlu0 %v2659
        %v2661 = vpop.xlane.xlu0 %2660
        %v2662 = vsel %vm2220, %v2091, 0.0
        %2663 = vadd.xlane.f32.xlu0 %v2662
        %v2664 = vpop.xlane.xlu0 %2663
        %v2665 = vsel %vm2220, %v2092, 0.0
        %2666 = vadd.xlane.f32.xlu0 %v2665
        %v2667 = vpop.xlane.xlu0 %2666
        %v2668 = vsel %vm2220, %v2093, 0.0
        %2669 = vadd.xlane.f32.xlu0 %v2668
        %v2670 = vpop.xlane.xlu0 %2669
        %v2671 = vsel %vm2220, %v2094, 0.0
        %2672 = vadd.xlane.f32.xlu0 %v2671
        %v2673 = vpop.xlane.xlu0 %2672
        %v2674 = vsel %vm2220, %v2095, 0.0
        %2675 = vadd.xlane.f32.xlu0 %v2674
        %v2676 = vpop.xlane.xlu0 %2675
        %v2677 = vsel %vm2220, %v2096, 0.0
        %2678 = vadd.xlane.f32.xlu0 %v2677
        %v2679 = vpop.xlane.xlu0 %2678
        %v2680 = vsel %vm2220, %v2097, 0.0
        %2681 = vadd.xlane.f32.xlu0 %v2680
        %v2682 = vpop.xlane.xlu0 %2681
        %v2683 = vsel %vm2220, %v2098, 0.0
        %2684 = vadd.xlane.f32.xlu0 %v2683
        %v2685 = vpop.xlane.xlu0 %2684
        %v2686 = vsel %vm2220, %v2099, 0.0
        %2687 = vadd.xlane.f32.xlu0 %v2686
        %v2688 = vpop.xlane.xlu0 %2687
        %v2689 = vsel %vm2220, %v2100, 0.0
        %2690 = vadd.xlane.f32.xlu0 %v2689
        %v2691 = vpop.xlane.xlu0 %2690
        %v2692 = vsel %vm2220, %v2101, 0.0
        %2693 = vadd.xlane.f32.xlu0 %v2692
        %v2694 = vpop.xlane.xlu0 %2693
        %v2695 = vsel %vm2220, %v2102, 0.0
        %2696 = vadd.xlane.f32.xlu0 %v2695
        %v2697 = vpop.xlane.xlu0 %2696
        %v2698 = vsel %vm2220, %v2103, 0.0
        %2699 = vadd.xlane.f32.xlu0 %v2698
        %v2700 = vpop.xlane.xlu0 %2699
        %v2701 = vsel %vm2220, %v2104, 0.0
        %2702 = vadd.xlane.f32.xlu0 %v2701
        %v2703 = vpop.xlane.xlu0 %2702
        %v2704 = vsel %vm2220, %v2105, 0.0
        %2705 = vadd.xlane.f32.xlu0 %v2704
        %v2706 = vpop.xlane.xlu0 %2705
        %v2707 = vsel %vm2220, %v2106, 0.0
        %2708 = vadd.xlane.f32.xlu0 %v2707
        %v2709 = vpop.xlane.xlu0 %2708
        %v2710 = vsel %vm2220, %v2107, 0.0
        %2711 = vadd.xlane.f32.xlu0 %v2710
        %v2712 = vpop.xlane.xlu0 %2711
        %v2713 = vsel %vm2220, %v2108, 0.0
        %2714 = vadd.xlane.f32.xlu0 %v2713
        %v2715 = vpop.xlane.xlu0 %2714
        %v2716 = vsel %vm2220, %v2109, 0.0
        %2717 = vadd.xlane.f32.xlu0 %v2716
        %v2718 = vpop.xlane.xlu0 %2717
        %v2719 = vsel %vm2220, %v2110, 0.0
        %2720 = vadd.xlane.f32.xlu0 %v2719
        %v2721 = vpop.xlane.xlu0 %2720
        %v2722 = vsel %vm2220, %v2111, 0.0
        %2723 = vadd.xlane.f32.xlu0 %v2722
        %v2724 = vpop.xlane.xlu0 %2723
        %v2725 = vsel %vm2220, %v2112, 0.0
        %2726 = vadd.xlane.f32.xlu0 %v2725
        %v2727 = vpop.xlane.xlu0 %2726
        %v2728 = vsel %vm2220, %v2113, 0.0
        %2729 = vadd.xlane.f32.xlu0 %v2728
        %v2730 = vpop.xlane.xlu0 %2729
        %v2731 = vsel %vm2220, %v2114, 0.0
        %2732 = vadd.xlane.f32.xlu0 %v2731
        %v2733 = vpop.xlane.xlu0 %2732
        %v2734 = vsel %vm2220, %v2115, 0.0
        %2735 = vadd.xlane.f32.xlu0 %v2734
        %v2736 = vpop.xlane.xlu0 %2735
        %v2737 = vsel %vm2220, %v2116, 0.0
        %2738 = vadd.xlane.f32.xlu0 %v2737
        %v2739 = vpop.xlane.xlu0 %2738
        %v2740 = vsel %vm2220, %v2117, 0.0
        %2741 = vadd.xlane.f32.xlu0 %v2740
        %v2742 = vpop.xlane.xlu0 %2741
        %v2743 = vsel %vm2220, %v2118, 0.0
        %2744 = vadd.xlane.f32.xlu0 %v2743
        %v2745 = vpop.xlane.xlu0 %2744
        %v2746 = vsel %vm2220, %v2119, 0.0
        %2747 = vadd.xlane.f32.xlu0 %v2746
        %v2748 = vpop.xlane.xlu0 %2747
        %v2749 = vsel %vm2220, %v2120, 0.0
        %2750 = vadd.xlane.f32.xlu0 %v2749
        %v2751 = vpop.xlane.xlu0 %2750
        %v2752 = vsel %vm2220, %v2121, 0.0
        %2753 = vadd.xlane.f32.xlu0 %v2752
        %v2754 = vpop.xlane.xlu0 %2753
        %v2755 = vsel %vm2220, %v2122, 0.0
        %2756 = vadd.xlane.f32.xlu0 %v2755
        %v2757 = vpop.xlane.xlu0 %2756
        %v2758 = vsel %vm2220, %v2123, 0.0
        %2759 = vadd.xlane.f32.xlu0 %v2758
        %v2760 = vpop.xlane.xlu0 %2759
        %v2761 = vsel %vm2220, %v2124, 0.0
        %2762 = vadd.xlane.f32.xlu0 %v2761
        %v2763 = vpop.xlane.xlu0 %2762
        %v2764 = vsel %vm2220, %v2125, 0.0
        %2765 = vadd.xlane.f32.xlu0 %v2764
        %v2766 = vpop.xlane.xlu0 %2765
        %v2767 = vsel %vm2220, %v2126, 0.0
        %2768 = vadd.xlane.f32.xlu0 %v2767
        %v2769 = vpop.xlane.xlu0 %2768
        %v2770 = vsel %vm2220, %v2127, 0.0
        %2771 = vadd.xlane.f32.xlu0 %v2770
        %v2772 = vpop.xlane.xlu0 %2771
        %v2773 = vsel %vm2220, %v2128, 0.0
        %2774 = vadd.xlane.f32.xlu0 %v2773
        %v2775 = vpop.xlane.xlu0 %2774
        %v2776 = vsel %vm2220, %v2129, 0.0
        %2777 = vadd.xlane.f32.xlu0 %v2776
        %v2778 = vpop.xlane.xlu0 %2777
        %v2779 = vsel %vm2220, %v2130, 0.0
        %2780 = vadd.xlane.f32.xlu0 %v2779
        %v2781 = vpop.xlane.xlu0 %2780
        %v2782 = vsel %vm2220, %v2131, 0.0
        %2783 = vadd.xlane.f32.xlu0 %v2782
        %v2784 = vpop.xlane.xlu0 %2783
        %v2785 = vsel %vm2220, %v2132, 0.0
        %2786 = vadd.xlane.f32.xlu0 %v2785
        %v2787 = vpop.xlane.xlu0 %2786
        %v2788 = vsel %vm2220, %v2133, 0.0
        %2789 = vadd.xlane.f32.xlu0 %v2788
        %v2790 = vpop.xlane.xlu0 %2789
        %v2791 = vsel %vm2220, %v2134, 0.0
        %2792 = vadd.xlane.f32.xlu0 %v2791
        %v2793 = vpop.xlane.xlu0 %2792
        %v2794 = vsel %vm2220, %v2135, 0.0
        %2795 = vadd.xlane.f32.xlu0 %v2794
        %v2796 = vpop.xlane.xlu0 %2795
        %v2797 = vsel %vm2220, %v2136, 0.0
        %2798 = vadd.xlane.f32.xlu0 %v2797
        %v2799 = vpop.xlane.xlu0 %2798
        %v2800 = vsel %vm2220, %v2137, 0.0
        %2801 = vadd.xlane.f32.xlu0 %v2800
        %v2802 = vpop.xlane.xlu0 %2801
        %v2803 = vsel %vm2220, %v2138, 0.0
        %2804 = vadd.xlane.f32.xlu0 %v2803
        %v2805 = vpop.xlane.xlu0 %2804
        %v2806 = vsel %vm2220, %v2139, 0.0
        %2807 = vadd.xlane.f32.xlu0 %v2806
        %v2808 = vpop.xlane.xlu0 %2807
        %v2809 = vsel %vm2220, %v2140, 0.0
        %2810 = vadd.xlane.f32.xlu0 %v2809
        %v2811 = vpop.xlane.xlu0 %2810
        %v2812 = vsel %vm2220, %v2141, 0.0
        %2813 = vadd.xlane.f32.xlu0 %v2812
        %v2814 = vpop.xlane.xlu0 %2813
        %v2815 = vsel %vm2220, %v2142, 0.0
        %2816 = vadd.xlane.f32.xlu0 %v2815
        %v2817 = vpop.xlane.xlu0 %2816
        %v2818 = vsel %vm2220, %v2143, 0.0
        %2819 = vadd.xlane.f32.xlu0 %v2818
        %v2820 = vpop.xlane.xlu0 %2819
        %v2821 = vsel %vm2220, %v2144, 0.0
        %2822 = vadd.xlane.f32.xlu0 %v2821
        %v2823 = vpop.xlane.xlu0 %2822
        %v2824 = vsel %vm2220, %v2145, 0.0
        %2825 = vadd.xlane.f32.xlu0 %v2824
        %v2826 = vpop.xlane.xlu0 %2825
        %v2827 = vsel %vm2220, %v2146, 0.0
        %2828 = vadd.xlane.f32.xlu0 %v2827
        %v2829 = vpop.xlane.xlu0 %2828
        %v2830 = vsel %vm2220, %v2147, 0.0
        %2831 = vadd.xlane.f32.xlu0 %v2830
        %v2832 = vpop.xlane.xlu0 %2831
        %v2833 = vsel %vm2220, %v2148, 0.0
        %2834 = vadd.xlane.f32.xlu0 %v2833
        %v2835 = vpop.xlane.xlu0 %2834
        %v2836 = vsel %vm2220, %v2149, 0.0
        %2837 = vadd.xlane.f32.xlu0 %v2836
        %v2838 = vpop.xlane.xlu0 %2837
        %v2839 = vsel %vm2220, %v2150, 0.0
        %2840 = vadd.xlane.f32.xlu0 %v2839
        %v2841 = vpop.xlane.xlu0 %2840
        %v2842 = vsel %vm2220, %v2151, 0.0
        %2843 = vadd.xlane.f32.xlu0 %v2842
        %v2844 = vpop.xlane.xlu0 %2843
        %v2845 = vsel %vm2220, %v2152, 0.0
        %2846 = vadd.xlane.f32.xlu0 %v2845
        %v2847 = vpop.xlane.xlu0 %2846
        %v2848 = vsel %vm2220, %v2153, 0.0
        %2849 = vadd.xlane.f32.xlu0 %v2848
        %v2850 = vpop.xlane.xlu0 %2849
        %v2851 = vsel %vm2220, %v2154, 0.0
        %2852 = vadd.xlane.f32.xlu0 %v2851
        %v2853 = vpop.xlane.xlu0 %2852
        %v2854 = vsel %vm2220, %v2155, 0.0
        %2855 = vadd.xlane.f32.xlu0 %v2854
        %v2856 = vpop.xlane.xlu0 %2855
        %v2857 = vsel %vm2220, %v2156, 0.0
        %2858 = vadd.xlane.f32.xlu0 %v2857
        %v2859 = vpop.xlane.xlu0 %2858
        %v2860 = vsel %vm2220, %v2157, 0.0
        %2861 = vadd.xlane.f32.xlu0 %v2860
        %v2862 = vpop.xlane.xlu0 %2861
        %v2863 = vsel %vm2220, %v2158, 0.0
        %2864 = vadd.xlane.f32.xlu0 %v2863
        %v2865 = vpop.xlane.xlu0 %2864
        %v2866 = vsel %vm2220, %v2159, 0.0
        %2867 = vadd.xlane.f32.xlu0 %v2866
        %v2868 = vpop.xlane.xlu0 %2867
        %v2869 = vsel %vm2220, %v2160, 0.0
        %2870 = vadd.xlane.f32.xlu0 %v2869
        %v2871 = vpop.xlane.xlu0 %2870
        %v2872 = vsel %vm2220, %v2161, 0.0
        %2873 = vadd.xlane.f32.xlu0 %v2872
        %v2874 = vpop.xlane.xlu0 %2873
        %v2875 = vsel %vm2220, %v2162, 0.0
        %2876 = vadd.xlane.f32.xlu0 %v2875
        %v2877 = vpop.xlane.xlu0 %2876
        %v2878 = vsel %vm2220, %v2163, 0.0
        %2879 = vadd.xlane.f32.xlu0 %v2878
        %v2880 = vpop.xlane.xlu0 %2879
        %v2881 = vsel %vm2220, %v2164, 0.0
        %2882 = vadd.xlane.f32.xlu0 %v2881
        %v2883 = vpop.xlane.xlu0 %2882
        %v2884 = vsel %vm2220, %v2165, 0.0
        %2885 = vadd.xlane.f32.xlu0 %v2884
        %v2886 = vpop.xlane.xlu0 %2885
        %v2887 = vsel %vm2220, %v2166, 0.0
        %2888 = vadd.xlane.f32.xlu0 %v2887
        %v2889 = vpop.xlane.xlu0 %2888
        %v2890 = vsel %vm2220, %v2167, 0.0
        %2891 = vadd.xlane.f32.xlu0 %v2890
        %v2892 = vpop.xlane.xlu0 %2891
        %v2893 = vsel %vm2220, %v2168, 0.0
        %2894 = vadd.xlane.f32.xlu0 %v2893
        %v2895 = vpop.xlane.xlu0 %2894
        %v2896 = vsel %vm2220, %v2169, 0.0
        %2897 = vadd.xlane.f32.xlu0 %v2896
        %v2898 = vpop.xlane.xlu0 %2897
        %v2899 = vsel %vm2220, %v2170, 0.0
        %2900 = vadd.xlane.f32.xlu0 %v2899
        %v2901 = vpop.xlane.xlu0 %2900
        %v2902 = vsel %vm2220, %v2171, 0.0
        %2903 = vadd.xlane.f32.xlu0 %v2902
        %v2904 = vpop.xlane.xlu0 %2903
        %v2905 = vsel %vm2220, %v2172, 0.0
        %2906 = vadd.xlane.f32.xlu0 %v2905
        %v2907 = vpop.xlane.xlu0 %2906
        %v2908 = vsel %vm2220, %v2173, 0.0
        %2909 = vadd.xlane.f32.xlu0 %v2908
        %v2910 = vpop.xlane.xlu0 %2909
        %v2911 = vsel %vm2220, %v2174, 0.0
        %2912 = vadd.xlane.f32.xlu0 %v2911
        %v2913 = vpop.xlane.xlu0 %2912
        %v2914 = vsel %vm2220, %v2175, 0.0
        %2915 = vadd.xlane.f32.xlu0 %v2914
        %v2916 = vpop.xlane.xlu0 %2915
        %v2917 = vsel %vm2220, %v2176, 0.0
        %2918 = vadd.xlane.f32.xlu0 %v2917
        %v2919 = vpop.xlane.xlu0 %2918
        %v2920 = vsel %vm2220, %v2177, 0.0
        %2921 = vadd.xlane.f32.xlu0 %v2920
        %v2922 = vpop.xlane.xlu0 %2921
        %v2923 = vsel %vm2220, %v2178, 0.0
        %2924 = vadd.xlane.f32.xlu0 %v2923
        %v2925 = vpop.xlane.xlu0 %2924
        %v2926 = vsel %vm2220, %v2179, 0.0
        %2927 = vadd.xlane.f32.xlu0 %v2926
        %v2928 = vpop.xlane.xlu0 %2927
        %v2929 = vsel %vm2220, %v2180, 0.0
        %2930 = vadd.xlane.f32.xlu0 %v2929
        %v2931 = vpop.xlane.xlu0 %2930
        %v2932 = vsel %vm2220, %v2181, 0.0
        %2933 = vadd.xlane.f32.xlu0 %v2932
        %v2934 = vpop.xlane.xlu0 %2933
        %v2935 = vsel %vm2220, %v2182, 0.0
        %2936 = vadd.xlane.f32.xlu0 %v2935
        %v2937 = vpop.xlane.xlu0 %2936
        %v2938 = vsel %vm2220, %v2183, 0.0
        %2939 = vadd.xlane.f32.xlu0 %v2938
        %v2940 = vpop.xlane.xlu0 %2939
        %v2941 = vsel %vm2220, %v2184, 0.0
        %2942 = vadd.xlane.f32.xlu0 %v2941
        %v2943 = vpop.xlane.xlu0 %2942
        %v2944 = vsel %vm2220, %v2185, 0.0
        %2945 = vadd.xlane.f32.xlu0 %v2944
        %v2946 = vpop.xlane.xlu0 %2945
        %v2947 = vsel %vm2220, %v2186, 0.0
        %2948 = vadd.xlane.f32.xlu0 %v2947
        %v2949 = vpop.xlane.xlu0 %2948
        %v2950 = vsel %vm2220, %v2187, 0.0
        %2951 = vadd.xlane.f32.xlu0 %v2950
        %v2952 = vpop.xlane.xlu0 %2951
        %v2953 = vsel %vm2220, %v2188, 0.0
        %2954 = vadd.xlane.f32.xlu0 %v2953
        %v2955 = vpop.xlane.xlu0 %2954
        %v2956 = vsel %vm2220, %v2189, 0.0
        %2957 = vadd.xlane.f32.xlu0 %v2956
        %v2958 = vpop.xlane.xlu0 %2957
        %v2959 = vsel %vm2220, %v2190, 0.0
        %2960 = vadd.xlane.f32.xlu0 %v2959
        %v2961 = vpop.xlane.xlu0 %2960
        %v2962 = vsel %vm2220, %v2191, 0.0
        %2963 = vadd.xlane.f32.xlu0 %v2962
        %v2964 = vpop.xlane.xlu0 %2963
        %v2965 = vsel %vm2220, %v2192, 0.0
        %2966 = vadd.xlane.f32.xlu0 %v2965
        %v2967 = vpop.xlane.xlu0 %2966
        %v2968 = vsel %vm2220, %v2193, 0.0
        %2969 = vadd.xlane.f32.xlu0 %v2968
        %v2970 = vpop.xlane.xlu0 %2969
        %v2971 = vsel %vm2220, %v2194, 0.0
        %2972 = vadd.xlane.f32.xlu0 %v2971
        %v2973 = vpop.xlane.xlu0 %2972
        %v2974 = vsel %vm2220, %v2195, 0.0
        %2975 = vadd.xlane.f32.xlu0 %v2974
        %v2976 = vpop.xlane.xlu0 %2975
        %v2977 = vsel %vm2220, %v2196, 0.0
        %2978 = vadd.xlane.f32.xlu0 %v2977
        %v2979 = vpop.xlane.xlu0 %2978
        %v2980 = vsel %vm2220, %v2197, 0.0
        %2981 = vadd.xlane.f32.xlu0 %v2980
        %v2982 = vpop.xlane.xlu0 %2981
        %v2983 = vsel %vm2220, %v2198, 0.0
        %2984 = vadd.xlane.f32.xlu0 %v2983
        %v2985 = vpop.xlane.xlu0 %2984
        %v2986 = vsel %vm2220, %v2199, 0.0
        %2987 = vadd.xlane.f32.xlu0 %v2986
        %v2988 = vpop.xlane.xlu0 %2987
        %v2989 = vsel %vm2220, %v2200, 0.0
        %2990 = vadd.xlane.f32.xlu0 %v2989
        %v2991 = vpop.xlane.xlu0 %2990
        %v2992 = vsel %vm2220, %v2201, 0.0
        %2993 = vadd.xlane.f32.xlu0 %v2992
        %v2994 = vpop.xlane.xlu0 %2993
        %v2995 = vsel %vm2220, %v2202, 0.0
        %2996 = vadd.xlane.f32.xlu0 %v2995
        %v2997 = vpop.xlane.xlu0 %2996
        %v2998 = vsel %vm2220, %v2203, 0.0
        %2999 = vadd.xlane.f32.xlu0 %v2998
        %v3000 = vpop.xlane.xlu0 %2999
        %v3001 = vsel %vm2220, %v2204, 0.0
        %3002 = vadd.xlane.f32.xlu0 %v3001
        %v3003 = vpop.xlane.xlu0 %3002
        %v3004 = vsel %vm2220, %v2205, 0.0
        %3005 = vadd.xlane.f32.xlu0 %v3004
        %v3006 = vpop.xlane.xlu0 %3005
        %v3007 = vsel %vm2220, %v2206, 0.0
        %3008 = vadd.xlane.f32.xlu0 %v3007
        %v3009 = vpop.xlane.xlu0 %3008
        %v3010 = vsel %vm2220, %v2207, 0.0
        %3011 = vadd.xlane.f32.xlu0 %v3010
        %v3012 = vpop.xlane.xlu0 %3011
        %v3013 = vsel %vm2220, %v2208, 0.0
        %3014 = vadd.xlane.f32.xlu0 %v3013
        %v3015 = vpop.xlane.xlu0 %3014
        %v3016 = vsel %vm2220, %v2209, 0.0
        %3017 = vadd.xlane.f32.xlu0 %v3016
        %v3018 = vpop.xlane.xlu0 %3017
        %v3019 = vsel %vm2220, %v2210, 0.0
        %3020 = vadd.xlane.f32.xlu0 %v3019
        %v3021 = vpop.xlane.xlu0 %3020
        %v3022 = vsel %vm2220, %v2211, 0.0
        %3023 = vadd.xlane.f32.xlu0 %v3022
        %v3024 = vpop.xlane.xlu0 %3023
        %v3025 = vsel %vm2220, %v2212, 0.0
        %3026 = vadd.xlane.f32.xlu0 %v3025
        %v3027 = vpop.xlane.xlu0 %3026
        %v3028 = vsel %vm2220, %v2213, 0.0
        %3029 = vadd.xlane.f32.xlu0 %v3028
        %v3030 = vpop.xlane.xlu0 %3029
        %v3031 = vsel %vm2220, %v2214, 0.0
        %3032 = vadd.xlane.f32.xlu0 %v3031
        %v3033 = vpop.xlane.xlu0 %3032
        %v3034 = vsel %vm2220, %v2215, 0.0
        %3035 = vadd.xlane.f32.xlu0 %v3034
        %v3036 = vpop.xlane.xlu0 %3035
        %v3037 = vsel %vm2220, %v2216, 0.0
        %3038 = vadd.xlane.f32.xlu0 %v3037
        %v3039 = vpop.xlane.xlu0 %3038
        %v3040 = vsel %vm2220, %v2217, 0.0
        %3041 = vadd.xlane.f32.xlu0 %v3040
        %v3042 = vpop.xlane.xlu0 %3041
        %v3043 = vsel %vm2220, %v2218, 0.0
        %3044 = vadd.xlane.f32.xlu0 %v3043
        %v3045 = vpop.xlane.xlu0 %3044
        %v3046 = vsel %vm2220, %v2219, 0.0
        %3047 = vadd.xlane.f32.xlu0 %v3046
        %v3048 = vpop.xlane.xlu0 %3047
        %v3049 = vmul.f32 %v2223, 0.020408163
        %v3050 = vmul.f32 %v2226, 0.020408163
        %v3051 = vmul.f32 %v2229, 0.020408163
        %v3052 = vmul.f32 %v2232, 0.020408163
        %v3053 = vmul.f32 %v2235, 0.020408163
        %v3054 = vmul.f32 %v2238, 0.020408163
        %v3055 = vmul.f32 %v2241, 0.020408163
        %v3056 = vmul.f32 %v2244, 0.020408163
        %v3057 = vmul.f32 %v2247, 0.020408163
        %v3058 = vmul.f32 %v2250, 0.020408163
        %v3059 = vmul.f32 %v2253, 0.020408163
        %v3060 = vmul.f32 %v2256, 0.020408163
        %v3061 = vmul.f32 %v2259, 0.020408163
        %v3062 = vmul.f32 %v2262, 0.020408163
        %v3063 = vmul.f32 %v2265, 0.020408163
        %v3064 = vmul.f32 %v2268, 0.020408163
        %v3065 = vmul.f32 %v2271, 0.020408163
        %v3066 = vmul.f32 %v2274, 0.020408163
        %v3067 = vmul.f32 %v2277, 0.020408163
        %v3068 = vmul.f32 %v2280, 0.020408163
        %v3069 = vmul.f32 %v2283, 0.020408163
        %v3070 = vmul.f32 %v2286, 0.020408163
        %v3071 = vmul.f32 %v2289, 0.020408163
        %v3072 = vmul.f32 %v2292, 0.020408163
        %v3073 = vmul.f32 %v2295, 0.020408163
        %v3074 = vmul.f32 %v2298, 0.020408163
        %v3075 = vmul.f32 %v2301, 0.020408163
        %v3076 = vmul.f32 %v2304, 0.020408163
        %v3077 = vmul.f32 %v2307, 0.020408163
        %v3078 = vmul.f32 %v2310, 0.020408163
        %v3079 = vmul.f32 %v2313, 0.020408163
        %v3080 = vmul.f32 %v2316, 0.020408163
        %v3081 = vmul.f32 %v2319, 0.020408163
        %v3082 = vmul.f32 %v2322, 0.020408163
        %v3083 = vmul.f32 %v2325, 0.020408163
        %v3084 = vmul.f32 %v2328, 0.020408163
        %v3085 = vmul.f32 %v2331, 0.020408163
        %v3086 = vmul.f32 %v2334, 0.020408163
        %v3087 = vmul.f32 %v2337, 0.020408163
        %v3088 = vmul.f32 %v2340, 0.020408163
        %v3089 = vmul.f32 %v2343, 0.020408163
        %v3090 = vmul.f32 %v2346, 0.020408163
        %v3091 = vmul.f32 %v2349, 0.020408163
        %v3092 = vmul.f32 %v2352, 0.020408163
        %v3093 = vmul.f32 %v2355, 0.020408163
        %v3094 = vmul.f32 %v2358, 0.020408163
        %v3095 = vmul.f32 %v2361, 0.020408163
        %v3096 = vmul.f32 %v2364, 0.020408163
        %v3097 = vmul.f32 %v2367, 0.020408163
        %v3098 = vmul.f32 %v2370, 0.020408163
        %v3099 = vmul.f32 %v2373, 0.020408163
        %v3100 = vmul.f32 %v2376, 0.020408163
        %v3101 = vmul.f32 %v2379, 0.020408163
        %v3102 = vmul.f32 %v2382, 0.020408163
        %v3103 = vmul.f32 %v2385, 0.020408163
        %v3104 = vmul.f32 %v2388, 0.020408163
        %v3105 = vmul.f32 %v2391, 0.020408163
        %v3106 = vmul.f32 %v2394, 0.020408163
        %v3107 = vmul.f32 %v2397, 0.020408163
        %v3108 = vmul.f32 %v2400, 0.020408163
        %v3109 = vmul.f32 %v2403, 0.020408163
        %v3110 = vmul.f32 %v2406, 0.020408163
        %v3111 = vmul.f32 %v2409, 0.020408163
        %v3112 = vmul.f32 %v2412, 0.020408163
        %v3113 = vmul.f32 %v2415, 0.020408163
        %v3114 = vmul.f32 %v2418, 0.020408163
        %v3115 = vmul.f32 %v2421, 0.020408163
        %v3116 = vmul.f32 %v2424, 0.020408163
        %v3117 = vmul.f32 %v2427, 0.020408163
        %v3118 = vmul.f32 %v2430, 0.020408163
        %v3119 = vmul.f32 %v2433, 0.020408163
        %v3120 = vmul.f32 %v2436, 0.020408163
        %v3121 = vmul.f32 %v2439, 0.020408163
        %v3122 = vmul.f32 %v2442, 0.020408163
        %v3123 = vmul.f32 %v2445, 0.020408163
        %v3124 = vmul.f32 %v2448, 0.020408163
        %v3125 = vmul.f32 %v2451, 0.020408163
        %v3126 = vmul.f32 %v2454, 0.020408163
        %v3127 = vmul.f32 %v2457, 0.020408163
        %v3128 = vmul.f32 %v2460, 0.020408163
        %v3129 = vmul.f32 %v2463, 0.020408163
        %v3130 = vmul.f32 %v2466, 0.020408163
        %v3131 = vmul.f32 %v2469, 0.020408163
        %v3132 = vmul.f32 %v2472, 0.020408163
        %v3133 = vmul.f32 %v2475, 0.020408163
        %v3134 = vmul.f32 %v2478, 0.020408163
        %v3135 = vmul.f32 %v2481, 0.020408163
        %v3136 = vmul.f32 %v2484, 0.020408163
        %v3137 = vmul.f32 %v2487, 0.020408163
        %v3138 = vmul.f32 %v2490, 0.020408163
        %v3139 = vmul.f32 %v2493, 0.020408163
        %v3140 = vmul.f32 %v2496, 0.020408163
        %v3141 = vmul.f32 %v2499, 0.020408163
        %v3142 = vmul.f32 %v2502, 0.020408163
        %v3143 = vmul.f32 %v2505, 0.020408163
        %v3144 = vmul.f32 %v2508, 0.020408163
        %v3145 = vmul.f32 %v2511, 0.020408163
        %v3146 = vmul.f32 %v2514, 0.020408163
        %v3147 = vmul.f32 %v2517, 0.020408163
        %v3148 = vmul.f32 %v2520, 0.020408163
        %v3149 = vmul.f32 %v2523, 0.020408163
        %v3150 = vmul.f32 %v2526, 0.020408163
        %v3151 = vmul.f32 %v2529, 0.020408163
        %v3152 = vmul.f32 %v2532, 0.020408163
        %v3153 = vmul.f32 %v2535, 0.020408163
        %v3154 = vmul.f32 %v2538, 0.020408163
        %v3155 = vmul.f32 %v2541, 0.020408163
        %v3156 = vmul.f32 %v2544, 0.020408163
        %v3157 = vmul.f32 %v2547, 0.020408163
        %v3158 = vmul.f32 %v2550, 0.020408163
        %v3159 = vmul.f32 %v2553, 0.020408163
        %v3160 = vmul.f32 %v2556, 0.020408163
        %v3161 = vmul.f32 %v2559, 0.020408163
        %v3162 = vmul.f32 %v2562, 0.020408163
        %v3163 = vmul.f32 %v2565, 0.020408163
        %v3164 = vmul.f32 %v2568, 0.020408163
        %v3165 = vmul.f32 %v2571, 0.020408163
        %v3166 = vmul.f32 %v2574, 0.020408163
        %v3167 = vmul.f32 %v2577, 0.020408163
        %v3168 = vmul.f32 %v2580, 0.020408163
        %v3169 = vmul.f32 %v2583, 0.020408163
        %v3170 = vmul.f32 %v2586, 0.020408163
        %v3171 = vmul.f32 %v2589, 0.020408163
        %v3172 = vmul.f32 %v2592, 0.020408163
        %v3173 = vmul.f32 %v2595, 0.020408163
        %v3174 = vmul.f32 %v2598, 0.020408163
        %v3175 = vmul.f32 %v2601, 0.020408163
        %v3176 = vmul.f32 %v2604, 0.020408163
        %v3177 = vmul.f32 %v2607, 0.020408163
        %v3178 = vmul.f32 %v2610, 0.020408163
        %v3179 = vmul.f32 %v2613, 0.020408163
        %v3180 = vmul.f32 %v2616, 0.020408163
        %v3181 = vmul.f32 %v2619, 0.020408163
        %v3182 = vmul.f32 %v2622, 0.020408163
        %v3183 = vmul.f32 %v2625, 0.020408163
        %v3184 = vmul.f32 %v2628, 0.020408163
        %v3185 = vmul.f32 %v2631, 0.020408163
        %v3186 = vmul.f32 %v2634, 0.020408163
        %v3187 = vmul.f32 %v2637, 0.020408163
        %v3188 = vmul.f32 %v2640, 0.020408163
        %v3189 = vmul.f32 %v2643, 0.020408163
        %v3190 = vmul.f32 %v2646, 0.020408163
        %v3191 = vmul.f32 %v2649, 0.020408163
        %v3192 = vmul.f32 %v2652, 0.020408163
        %v3193 = vmul.f32 %v2655, 0.020408163
        %v3194 = vmul.f32 %v2658, 0.020408163
        %v3195 = vmul.f32 %v2661, 0.020408163
        %v3196 = vmul.f32 %v2664, 0.020408163
        %v3197 = vmul.f32 %v2667, 0.020408163
        %v3198 = vmul.f32 %v2670, 0.020408163
        %v3199 = vmul.f32 %v2673, 0.020408163
        %v3200 = vmul.f32 %v2676, 0.020408163
        %v3201 = vmul.f32 %v2679, 0.020408163
        %v3202 = vmul.f32 %v2682, 0.020408163
        %v3203 = vmul.f32 %v2685, 0.020408163
        %v3204 = vmul.f32 %v2688, 0.020408163
        %v3205 = vmul.f32 %v2691, 0.020408163
        %v3206 = vmul.f32 %v2694, 0.020408163
        %v3207 = vmul.f32 %v2697, 0.020408163
        %v3208 = vmul.f32 %v2700, 0.020408163
        %v3209 = vmul.f32 %v2703, 0.020408163
        %v3210 = vmul.f32 %v2706, 0.020408163
        %v3211 = vmul.f32 %v2709, 0.020408163
        %v3212 = vmul.f32 %v2712, 0.020408163
        %v3213 = vmul.f32 %v2715, 0.020408163
        %v3214 = vmul.f32 %v2718, 0.020408163
        %v3215 = vmul.f32 %v2721, 0.020408163
        %v3216 = vmul.f32 %v2724, 0.020408163
        %v3217 = vmul.f32 %v2727, 0.020408163
        %v3218 = vmul.f32 %v2730, 0.020408163
        %v3219 = vmul.f32 %v2733, 0.020408163
        %v3220 = vmul.f32 %v2736, 0.020408163
        %v3221 = vmul.f32 %v2739, 0.020408163
        %v3222 = vmul.f32 %v2742, 0.020408163
        %v3223 = vmul.f32 %v2745, 0.020408163
        %v3224 = vmul.f32 %v2748, 0.020408163
        %v3225 = vmul.f32 %v2751, 0.020408163
        %v3226 = vmul.f32 %v2754, 0.020408163
        %v3227 = vmul.f32 %v2757, 0.020408163
        %v3228 = vmul.f32 %v2760, 0.020408163
        %v3229 = vmul.f32 %v2763, 0.020408163
        %v3230 = vmul.f32 %v2766, 0.020408163
        %v3231 = vmul.f32 %v2769, 0.020408163
        %v3232 = vmul.f32 %v2772, 0.020408163
        %v3233 = vmul.f32 %v2775, 0.020408163
        %v3234 = vmul.f32 %v2778, 0.020408163
        %v3235 = vmul.f32 %v2781, 0.020408163
        %v3236 = vmul.f32 %v2784, 0.020408163
        %v3237 = vmul.f32 %v2787, 0.020408163
        %v3238 = vmul.f32 %v2790, 0.020408163
        %v3239 = vmul.f32 %v2793, 0.020408163
        %v3240 = vmul.f32 %v2796, 0.020408163
        %v3241 = vmul.f32 %v2799, 0.020408163
        %v3242 = vmul.f32 %v2802, 0.020408163
        %v3243 = vmul.f32 %v2805, 0.020408163
        %v3244 = vmul.f32 %v2808, 0.020408163
        %v3245 = vmul.f32 %v2811, 0.020408163
        %v3246 = vmul.f32 %v2814, 0.020408163
        %v3247 = vmul.f32 %v2817, 0.020408163
        %v3248 = vmul.f32 %v2820, 0.020408163
        %v3249 = vmul.f32 %v2823, 0.020408163
        %v3250 = vmul.f32 %v2826, 0.020408163
        %v3251 = vmul.f32 %v2829, 0.020408163
        %v3252 = vmul.f32 %v2832, 0.020408163
        %v3253 = vmul.f32 %v2835, 0.020408163
        %v3254 = vmul.f32 %v2838, 0.020408163
        %v3255 = vmul.f32 %v2841, 0.020408163
        %v3256 = vmul.f32 %v2844, 0.020408163
        %v3257 = vmul.f32 %v2847, 0.020408163
        %v3258 = vmul.f32 %v2850, 0.020408163
        %v3259 = vmul.f32 %v2853, 0.020408163
        %v3260 = vmul.f32 %v2856, 0.020408163
        %v3261 = vmul.f32 %v2859, 0.020408163
        %v3262 = vmul.f32 %v2862, 0.020408163
        %v3263 = vmul.f32 %v2865, 0.020408163
        %v3264 = vmul.f32 %v2868, 0.020408163
        %v3265 = vmul.f32 %v2871, 0.020408163
        %v3266 = vmul.f32 %v2874, 0.020408163
        %v3267 = vmul.f32 %v2877, 0.020408163
        %v3268 = vmul.f32 %v2880, 0.020408163
        %v3269 = vmul.f32 %v2883, 0.020408163
        %v3270 = vmul.f32 %v2886, 0.020408163
        %v3271 = vmul.f32 %v2889, 0.020408163
        %v3272 = vmul.f32 %v2892, 0.020408163
        %v3273 = vmul.f32 %v2895, 0.020408163
        %v3274 = vmul.f32 %v2898, 0.020408163
        %v3275 = vmul.f32 %v2901, 0.020408163
        %v3276 = vmul.f32 %v2904, 0.020408163
        %v3277 = vmul.f32 %v2907, 0.020408163
        %v3278 = vmul.f32 %v2910, 0.020408163
        %v3279 = vmul.f32 %v2913, 0.020408163
        %v3280 = vmul.f32 %v2916, 0.020408163
        %v3281 = vmul.f32 %v2919, 0.020408163
        %v3282 = vmul.f32 %v2922, 0.020408163
        %v3283 = vmul.f32 %v2925, 0.020408163
        %v3284 = vmul.f32 %v2928, 0.020408163
        %v3285 = vmul.f32 %v2931, 0.020408163
        %v3286 = vmul.f32 %v2934, 0.020408163
        %v3287 = vmul.f32 %v2937, 0.020408163
        %v3288 = vmul.f32 %v2940, 0.020408163
        %v3289 = vmul.f32 %v2943, 0.020408163
        %v3290 = vmul.f32 %v2946, 0.020408163
        %v3291 = vmul.f32 %v2949, 0.020408163
        %v3292 = vmul.f32 %v2952, 0.020408163
        %v3293 = vmul.f32 %v2955, 0.020408163
        %v3294 = vmul.f32 %v2958, 0.020408163
        %v3295 = vmul.f32 %v2961, 0.020408163
        %v3296 = vmul.f32 %v2964, 0.020408163
        %v3297 = vmul.f32 %v2967, 0.020408163
        %v3298 = vmul.f32 %v2970, 0.020408163
        %v3299 = vmul.f32 %v2973, 0.020408163
        %v3300 = vmul.f32 %v2976, 0.020408163
        %v3301 = vmul.f32 %v2979, 0.020408163
        %v3302 = vmul.f32 %v2982, 0.020408163
        %v3303 = vmul.f32 %v2985, 0.020408163
        %v3304 = vmul.f32 %v2988, 0.020408163
        %v3305 = vmul.f32 %v2991, 0.020408163
        %v3306 = vmul.f32 %v2994, 0.020408163
        %v3307 = vmul.f32 %v2997, 0.020408163
        %v3308 = vmul.f32 %v3000, 0.020408163
        %v3309 = vmul.f32 %v3003, 0.020408163
        %v3310 = vmul.f32 %v3006, 0.020408163
        %v3311 = vmul.f32 %v3009, 0.020408163
        %v3312 = vmul.f32 %v3012, 0.020408163
        %v3313 = vmul.f32 %v3015, 0.020408163
        %v3314 = vmul.f32 %v3018, 0.020408163
        %v3315 = vmul.f32 %v3021, 0.020408163
        %v3316 = vmul.f32 %v3024, 0.020408163
        %v3317 = vmul.f32 %v3027, 0.020408163
        %v3318 = vmul.f32 %v3030, 0.020408163
        %v3319 = vmul.f32 %v3033, 0.020408163
        %v3320 = vmul.f32 %v3036, 0.020408163
        %v3321 = vmul.f32 %v3039, 0.020408163
        %v3322 = vmul.f32 %v3042, 0.020408163
        %v3323 = vmul.f32 %v3045, 0.020408163
        %v3324 = vmul.f32 %v3048, 0.020408163
        %v3325 = vld [vmem:[#allocation2] sm:$0xf]
        %v3326 = vld [vmem:[%s1630] sm:$0xff]
        %v3327 = vld [vmem:[%s1630 + $0x8] sm:$0xff]
        %v3328 = vld [vmem:[%s1630 + $0x10] sm:$0xff]
        %v3329 = vld [vmem:[%s1630 + $0x18] sm:$0xff]
        %v3330 = vld [vmem:[%s1630 + $0x20] sm:$0xff]
        %v3331 = vld [vmem:[%s1630 + $0x28] sm:$0xff]
        %v3332 = vld [vmem:[%s1630 + $0x30] sm:$0xff]
        %v3333 = vld [vmem:[%s1630 + $0x38] sm:$0xff]
        %v3334 = vld [vmem:[%s1630 + $0x40] sm:$0xff]
        %v3335 = vld [vmem:[%s1630 + $0x48] sm:$0xff]
        %v3336 = vld [vmem:[%s1630 + $0x50] sm:$0xff]
        %v3337 = vld [vmem:[%s1630 + $0x58] sm:$0xff]
        %v3338 = vld [vmem:[%s1630 + $0x60] sm:$0xff]
        %v3339 = vld [vmem:[%s1630 + $0x68] sm:$0xff]
        %v3340 = vld [vmem:[%s1630 + $0x70] sm:$0xff]
        %v3341 = vld [vmem:[%s1630 + $0x78] sm:$0xff]
        %v3342 = vld [vmem:[%s1630 + $0x80] sm:$0xff]
        %v3343 = vld [vmem:[%s1630 + $0x88] sm:$0xff]
        %v3344 = vld [vmem:[%s1630 + $0x90] sm:$0xff]
        %v3345 = vld [vmem:[%s1630 + $0x98] sm:$0xff]
        %v3346 = vld [vmem:[%s1630 + $0xa0] sm:$0xff]
        %v3347 = vld [vmem:[%s1630 + $0xa8] sm:$0xff]
        %v3348 = vld [vmem:[%s1630 + $0xb0] sm:$0xff]
        %v3349 = vld [vmem:[%s1630 + $0xb8] sm:$0xff]
        %v3350 = vld [vmem:[%s1630 + $0xc0] sm:$0xff]
        %v3351 = vld [vmem:[%s1630 + $0xc8] sm:$0xff]
        %v3352 = vld [vmem:[%s1630 + $0xd0] sm:$0xff]
        %v3353 = vld [vmem:[%s1630 + $0xd8] sm:$0xff]
        %v3354 = vld [vmem:[%s1630 + $0xe0] sm:$0xff]
        %v3355 = vld [vmem:[%s1630 + $0xe8] sm:$0xff]
        %v3356 = vld [vmem:[%s1630 + $0xf0] sm:$0xff]
        %v3357 = vld [vmem:[%s1630 + $0xf8] sm:$0xff]
        %v3358 = vld [vmem:[%s1630 + $0x100] sm:$0xff]
        %v3359 = vld [vmem:[%s1630 + $0x108] sm:$0xff]
        %v3360 = vld [vmem:[%s1630 + $0x110] sm:$0xff]
        %v3361 = vld [vmem:[%s1630 + $0x118] sm:$0xff]
        %v3362 = vld [vmem:[%s1630 + $0x120] sm:$0xff]
        %v3363 = vld [vmem:[%s1630 + $0x128] sm:$0xff]
        %v3364 = vld [vmem:[%s1630 + $0x130] sm:$0xff]
        %v3365 = vld [vmem:[%s1630 + $0x138] sm:$0xff]
        %v3366 = vld [vmem:[%s1630 + $0x140] sm:$0xff]
        %v3367 = vld [vmem:[%s1630 + $0x148] sm:$0xff]
        %v3368 = vld [vmem:[%s1630 + $0x150] sm:$0xff]
        %v3369 = vld [vmem:[%s1630 + $0x158] sm:$0xff]
        %v3370 = vld [vmem:[%s1630 + $0x160] sm:$0xff]
        %v3371 = vld [vmem:[%s1630 + $0x168] sm:$0xff]
        %v3372 = vld [vmem:[%s1630 + $0x170] sm:$0xff]
        %v3373 = vld [vmem:[%s1630 + $0x178] sm:$0xff]
        %v3374 = vld [vmem:[%s1630 + $0x180] sm:$0xff]
        %v3375 = vld [vmem:[%s1630 + $0x188] sm:$0xff]
        %v3376 = vld [vmem:[%s1630 + $0x190] sm:$0xff]
        %v3377 = vld [vmem:[%s1630 + $0x198] sm:$0xff]
        %v3378 = vld [vmem:[%s1630 + $0x1a0] sm:$0xff]
        %v3379 = vld [vmem:[%s1630 + $0x1a8] sm:$0xff]
        %v3380 = vld [vmem:[%s1630 + $0x1b0] sm:$0xff]
        %v3381 = vld [vmem:[%s1630 + $0x1b8] sm:$0xff]
        %v3382 = vld [vmem:[%s1630 + $0x1c0] sm:$0xff]
        %v3383 = vld [vmem:[%s1630 + $0x1c8] sm:$0xff]
        %v3384 = vld [vmem:[%s1630 + $0x1d0] sm:$0xff]
        %v3385 = vld [vmem:[%s1630 + $0x1d8] sm:$0xff]
        %v3386 = vld [vmem:[%s1630 + $0x1e0] sm:$0xff]
        %v3387 = vld [vmem:[%s1630 + $0x1e8] sm:$0xff]
        %v3388 = vld [vmem:[%s1630 + $0x1f0] sm:$0xff]
        %v3389 = vld [vmem:[%s1630 + $0x1f8] sm:$0xff]
        %v3390 = vld [vmem:[%s1630 + $0x200] sm:$0xff]
        %v3391 = vld [vmem:[%s1630 + $0x208] sm:$0xff]
        %v3392 = vld [vmem:[%s1630 + $0x210] sm:$0xff]
        %v3393 = vld [vmem:[%s1630 + $0x218] sm:$0xff]
        %v3394 = vld [vmem:[%s1630 + $0x220] sm:$0xff]
        %v3671 = vlaneseq
        %v3672 = vand.u32 %v3671, 127
        %v3673 = vlaneseq
        %v3674 = vshrl.u32 %v3673, 7
        %v3675 = vsub.s32 %v3672, %v3674
        %v3676 = vrot.slane %v3049, %v3675
        %v3677 = vadd.s32 %v3672, 4294967288
        %v3678 = vlaneseq
        %v3679 = vshrl.u32 %v3678, 7
        %v3680 = vsub.s32 %v3677, %v3679
        %v3681 = vrot.slane %v3050, %v3680
        %vm3682 = vcmask 130112
        %v3683 = vsel %vm3682, %v3681, %v3676
        %v3684 = vadd.s32 %v3672, 4294967280
        %v3685 = vlaneseq
        %v3686 = vshrl.u32 %v3685, 7
        %v3687 = vsub.s32 %v3684, %v3686
        %v3688 = vrot.slane %v3051, %v3687
        %vm3689 = vcmask 195712
        %v3690 = vsel %vm3689, %v3688, %v3683
        %v3691 = vadd.s32 %v3672, 4294967272
        %v3692 = vlaneseq
        %v3693 = vshrl.u32 %v3692, 7
        %v3694 = vsub.s32 %v3691, %v3693
        %v3695 = vrot.slane %v3052, %v3694
        %vm3696 = vcmask 261312
        %v3697 = vsel %vm3696, %v3695, %v3690
        %v3698 = vadd.s32 %v3672, 4294967264
        %v3699 = vlaneseq
        %v3700 = vshrl.u32 %v3699, 7
        %v3701 = vsub.s32 %v3698, %v3700
        %v3702 = vrot.slane %v3053, %v3701
        %vm3703 = vcmask 326912
        %v3704 = vsel %vm3703, %v3702, %v3697
        %v3705 = vadd.s32 %v3672, 4294967256
        %v3706 = vlaneseq
        %v3707 = vshrl.u32 %v3706, 7
        %v3708 = vsub.s32 %v3705, %v3707
        %v3709 = vrot.slane %v3054, %v3708
        %vm3710 = vcmask 392512
        %v3711 = vsel %vm3710, %v3709, %v3704
        %v3712 = vadd.s32 %v3672, 4294967248
        %v3713 = vlaneseq
        %v3714 = vshrl.u32 %v3713, 7
        %v3715 = vsub.s32 %v3712, %v3714
        %v3716 = vrot.slane %v3055, %v3715
        %vm3717 = vcmask 458112
        %v3718 = vsel %vm3717, %v3716, %v3711
        %v3719 = vadd.s32 %v3672, 4294967240
        %v3720 = vlaneseq
        %v3721 = vshrl.u32 %v3720, 7
        %v3722 = vsub.s32 %v3719, %v3721
        %v3723 = vrot.slane %v3056, %v3722
        %vm3724 = vcmask 523712
        %v3725 = vsel %vm3724, %v3723, %v3718
        %v3726 = vadd.s32 %v3672, 4294967232
        %v3727 = vlaneseq
        %v3728 = vshrl.u32 %v3727, 7
        %v3729 = vsub.s32 %v3726, %v3728
        %v3730 = vrot.slane %v3057, %v3729
        %vm3731 = vcmask 589312
        %v3732 = vsel %vm3731, %v3730, %v3725
        %v3733 = vadd.s32 %v3672, 4294967224
        %v3734 = vlaneseq
        %v3735 = vshrl.u32 %v3734, 7
        %v3736 = vsub.s32 %v3733, %v3735
        %v3737 = vrot.slane %v3058, %v3736
        %vm3738 = vcmask 654912
        %v3739 = vsel %vm3738, %v3737, %v3732
        %v3740 = vadd.s32 %v3672, 4294967216
        %v3741 = vlaneseq
        %v3742 = vshrl.u32 %v3741, 7
        %v3743 = vsub.s32 %v3740, %v3742
        %v3744 = vrot.slane %v3059, %v3743
        %vm3745 = vcmask 720512
        %v3746 = vsel %vm3745, %v3744, %v3739
        %v3747 = vadd.s32 %v3672, 4294967208
        %v3748 = vlaneseq
        %v3749 = vshrl.u32 %v3748, 7
        %v3750 = vsub.s32 %v3747, %v3749
        %v3751 = vrot.slane %v3060, %v3750
        %vm3752 = vcmask 786112
        %v3753 = vsel %vm3752, %v3751, %v3746
        %v3754 = vadd.s32 %v3672, 4294967200
        %v3755 = vlaneseq
        %v3756 = vshrl.u32 %v3755, 7
        %v3757 = vsub.s32 %v3754, %v3756
        %v3758 = vrot.slane %v3061, %v3757
        %vm3759 = vcmask 851712
        %v3760 = vsel %vm3759, %v3758, %v3753
        %v3761 = vadd.s32 %v3672, 4294967192
        %v3762 = vlaneseq
        %v3763 = vshrl.u32 %v3762, 7
        %v3764 = vsub.s32 %v3761, %v3763
        %v3765 = vrot.slane %v3062, %v3764
        %vm3766 = vcmask 917312
        %v3767 = vsel %vm3766, %v3765, %v3760
        %v3768 = vadd.s32 %v3672, 4294967184
        %v3769 = vlaneseq
        %v3770 = vshrl.u32 %v3769, 7
        %v3771 = vsub.s32 %v3768, %v3770
        %v3772 = vrot.slane %v3063, %v3771
        %vm3773 = vcmask 982912
        %v3774 = vsel %vm3773, %v3772, %v3767
        %v3775 = vadd.s32 %v3672, 4294967176
        %v3776 = vlaneseq
        %v3777 = vshrl.u32 %v3776, 7
        %v3778 = vsub.s32 %v3775, %v3777
        %v3779 = vrot.slane %v3064, %v3778
        %vm3780 = vcmask 1048512
        %v3781 = vsel %vm3780, %v3779, %v3774
        %v3782 = vlaneseq
        %v3783 = vshrl.u32 %v3782, 7
        %v3784 = vsub.s32 %v3672, %v3783
        %v3785 = vrot.slane %v3065, %v3784
        %v3786 = vlaneseq
        %v3787 = vshrl.u32 %v3786, 7
        %v3788 = vsub.s32 %v3677, %v3787
        %v3789 = vrot.slane %v3066, %v3788
        %v3790 = vsel %vm3682, %v3789, %v3785
        %v3791 = vlaneseq
        %v3792 = vshrl.u32 %v3791, 7
        %v3793 = vsub.s32 %v3684, %v3792
        %v3794 = vrot.slane %v3067, %v3793
        %v3795 = vsel %vm3689, %v3794, %v3790
        %v3796 = vlaneseq
        %v3797 = vshrl.u32 %v3796, 7
        %v3798 = vsub.s32 %v3691, %v3797
        %v3799 = vrot.slane %v3068, %v3798
        %v3800 = vsel %vm3696, %v3799, %v3795
        %v3801 = vlaneseq
        %v3802 = vshrl.u32 %v3801, 7
        %v3803 = vsub.s32 %v3698, %v3802
        %v3804 = vrot.slane %v3069, %v3803
        %v3805 = vsel %vm3703, %v3804, %v3800
        %v3806 = vlaneseq
        %v3807 = vshrl.u32 %v3806, 7
        %v3808 = vsub.s32 %v3705, %v3807
        %v3809 = vrot.slane %v3070, %v3808
        %v3810 = vsel %vm3710, %v3809, %v3805
        %v3811 = vlaneseq
        %v3812 = vshrl.u32 %v3811, 7
        %v3813 = vsub.s32 %v3712, %v3812
        %v3814 = vrot.slane %v3071, %v3813
        %v3815 = vsel %vm3717, %v3814, %v3810
        %v3816 = vlaneseq
        %v3817 = vshrl.u32 %v3816, 7
        %v3818 = vsub.s32 %v3719, %v3817
        %v3819 = vrot.slane %v3072, %v3818
        %v3820 = vsel %vm3724, %v3819, %v3815
        %v3821 = vlaneseq
        %v3822 = vshrl.u32 %v3821, 7
        %v3823 = vsub.s32 %v3726, %v3822
        %v3824 = vrot.slane %v3073, %v3823
        %v3825 = vsel %vm3731, %v3824, %v3820
        %v3826 = vlaneseq
        %v3827 = vshrl.u32 %v3826, 7
        %v3828 = vsub.s32 %v3733, %v3827
        %v3829 = vrot.slane %v3074, %v3828
        %v3830 = vsel %vm3738, %v3829, %v3825
        %v3831 = vlaneseq
        %v3832 = vshrl.u32 %v3831, 7
        %v3833 = vsub.s32 %v3740, %v3832
        %v3834 = vrot.slane %v3075, %v3833
        %v3835 = vsel %vm3745, %v3834, %v3830
        %v3836 = vlaneseq
        %v3837 = vshrl.u32 %v3836, 7
        %v3838 = vsub.s32 %v3747, %v3837
        %v3839 = vrot.slane %v3076, %v3838
        %v3840 = vsel %vm3752, %v3839, %v3835
        %v3841 = vlaneseq
        %v3842 = vshrl.u32 %v3841, 7
        %v3843 = vsub.s32 %v3754, %v3842
        %v3844 = vrot.slane %v3077, %v3843
        %v3845 = vsel %vm3759, %v3844, %v3840
        %v3846 = vlaneseq
        %v3847 = vshrl.u32 %v3846, 7
        %v3848 = vsub.s32 %v3761, %v3847
        %v3849 = vrot.slane %v3078, %v3848
        %v3850 = vsel %vm3766, %v3849, %v3845
        %v3851 = vlaneseq
        %v3852 = vshrl.u32 %v3851, 7
        %v3853 = vsub.s32 %v3768, %v3852
        %v3854 = vrot.slane %v3079, %v3853
        %v3855 = vsel %vm3773, %v3854, %v3850
        %v3856 = vlaneseq
        %v3857 = vshrl.u32 %v3856, 7
        %v3858 = vsub.s32 %v3775, %v3857
        %v3859 = vrot.slane %v3080, %v3858
        %v3860 = vsel %vm3780, %v3859, %v3855
        %v3861 = vlaneseq
        %v3862 = vshrl.u32 %v3861, 7
        %v3863 = vsub.s32 %v3672, %v3862
        %v3864 = vrot.slane %v3081, %v3863
        %v3865 = vlaneseq
        %v3866 = vshrl.u32 %v3865, 7
        %v3867 = vsub.s32 %v3677, %v3866
        %v3868 = vrot.slane %v3082, %v3867
        %v3869 = vsel %vm3682, %v3868, %v3864
        %v3870 = vlaneseq
        %v3871 = vshrl.u32 %v3870, 7
        %v3872 = vsub.s32 %v3684, %v3871
        %v3873 = vrot.slane %v3083, %v3872
        %v3874 = vsel %vm3689, %v3873, %v3869
        %v3875 = vlaneseq
        %v3876 = vshrl.u32 %v3875, 7
        %v3877 = vsub.s32 %v3691, %v3876
        %v3878 = vrot.slane %v3084, %v3877
        %v3879 = vsel %vm3696, %v3878, %v3874
        %v3880 = vlaneseq
        %v3881 = vshrl.u32 %v3880, 7
        %v3882 = vsub.s32 %v3698, %v3881
        %v3883 = vrot.slane %v3085, %v3882
        %v3884 = vsel %vm3703, %v3883, %v3879
        %v3885 = vlaneseq
        %v3886 = vshrl.u32 %v3885, 7
        %v3887 = vsub.s32 %v3705, %v3886
        %v3888 = vrot.slane %v3086, %v3887
        %v3889 = vsel %vm3710, %v3888, %v3884
        %v3890 = vlaneseq
        %v3891 = vshrl.u32 %v3890, 7
        %v3892 = vsub.s32 %v3712, %v3891
        %v3893 = vrot.slane %v3087, %v3892
        %v3894 = vsel %vm3717, %v3893, %v3889
        %v3895 = vlaneseq
        %v3896 = vshrl.u32 %v3895, 7
        %v3897 = vsub.s32 %v3719, %v3896
        %v3898 = vrot.slane %v3088, %v3897
        %v3899 = vsel %vm3724, %v3898, %v3894
        %v3900 = vlaneseq
        %v3901 = vshrl.u32 %v3900, 7
        %v3902 = vsub.s32 %v3726, %v3901
        %v3903 = vrot.slane %v3089, %v3902
        %v3904 = vsel %vm3731, %v3903, %v3899
        %v3905 = vlaneseq
        %v3906 = vshrl.u32 %v3905, 7
        %v3907 = vsub.s32 %v3733, %v3906
        %v3908 = vrot.slane %v3090, %v3907
        %v3909 = vsel %vm3738, %v3908, %v3904
        %v3910 = vlaneseq
        %v3911 = vshrl.u32 %v3910, 7
        %v3912 = vsub.s32 %v3740, %v3911
        %v3913 = vrot.slane %v3091, %v3912
        %v3914 = vsel %vm3745, %v3913, %v3909
        %v3915 = vlaneseq
        %v3916 = vshrl.u32 %v3915, 7
        %v3917 = vsub.s32 %v3747, %v3916
        %v3918 = vrot.slane %v3092, %v3917
        %v3919 = vsel %vm3752, %v3918, %v3914
        %v3920 = vlaneseq
        %v3921 = vshrl.u32 %v3920, 7
        %v3922 = vsub.s32 %v3754, %v3921
        %v3923 = vrot.slane %v3093, %v3922
        %v3924 = vsel %vm3759, %v3923, %v3919
        %v3925 = vlaneseq
        %v3926 = vshrl.u32 %v3925, 7
        %v3927 = vsub.s32 %v3761, %v3926
        %v3928 = vrot.slane %v3094, %v3927
        %v3929 = vsel %vm3766, %v3928, %v3924
        %v3930 = vlaneseq
        %v3931 = vshrl.u32 %v3930, 7
        %v3932 = vsub.s32 %v3768, %v3931
        %v3933 = vrot.slane %v3095, %v3932
        %v3934 = vsel %vm3773, %v3933, %v3929
        %v3935 = vlaneseq
        %v3936 = vshrl.u32 %v3935, 7
        %v3937 = vsub.s32 %v3775, %v3936
        %v3938 = vrot.slane %v3096, %v3937
        %v3939 = vsel %vm3780, %v3938, %v3934
        %v3940 = vlaneseq
        %v3941 = vshrl.u32 %v3940, 7
        %v3942 = vsub.s32 %v3672, %v3941
        %v3943 = vrot.slane %v3097, %v3942
        %v3944 = vlaneseq
        %v3945 = vshrl.u32 %v3944, 7
        %v3946 = vsub.s32 %v3677, %v3945
        %v3947 = vrot.slane %v3098, %v3946
        %v3948 = vsel %vm3682, %v3947, %v3943
        %v3949 = vlaneseq
        %v3950 = vshrl.u32 %v3949, 7
        %v3951 = vsub.s32 %v3684, %v3950
        %v3952 = vrot.slane %v3099, %v3951
        %v3953 = vsel %vm3689, %v3952, %v3948
        %v3954 = vlaneseq
        %v3955 = vshrl.u32 %v3954, 7
        %v3956 = vsub.s32 %v3691, %v3955
        %v3957 = vrot.slane %v3100, %v3956
        %v3958 = vsel %vm3696, %v3957, %v3953
        %v3959 = vlaneseq
        %v3960 = vshrl.u32 %v3959, 7
        %v3961 = vsub.s32 %v3698, %v3960
        %v3962 = vrot.slane %v3101, %v3961
        %v3963 = vsel %vm3703, %v3962, %v3958
        %v3964 = vlaneseq
        %v3965 = vshrl.u32 %v3964, 7
        %v3966 = vsub.s32 %v3705, %v3965
        %v3967 = vrot.slane %v3102, %v3966
        %v3968 = vsel %vm3710, %v3967, %v3963
        %v3969 = vlaneseq
        %v3970 = vshrl.u32 %v3969, 7
        %v3971 = vsub.s32 %v3712, %v3970
        %v3972 = vrot.slane %v3103, %v3971
        %v3973 = vsel %vm3717, %v3972, %v3968
        %v3974 = vlaneseq
        %v3975 = vshrl.u32 %v3974, 7
        %v3976 = vsub.s32 %v3719, %v3975
        %v3977 = vrot.slane %v3104, %v3976
        %v3978 = vsel %vm3724, %v3977, %v3973
        %v3979 = vlaneseq
        %v3980 = vshrl.u32 %v3979, 7
        %v3981 = vsub.s32 %v3726, %v3980
        %v3982 = vrot.slane %v3105, %v3981
        %v3983 = vsel %vm3731, %v3982, %v3978
        %v3984 = vlaneseq
        %v3985 = vshrl.u32 %v3984, 7
        %v3986 = vsub.s32 %v3733, %v3985
        %v3987 = vrot.slane %v3106, %v3986
        %v3988 = vsel %vm3738, %v3987, %v3983
        %v3989 = vlaneseq
        %v3990 = vshrl.u32 %v3989, 7
        %v3991 = vsub.s32 %v3740, %v3990
        %v3992 = vrot.slane %v3107, %v3991
        %v3993 = vsel %vm3745, %v3992, %v3988
        %v3994 = vlaneseq
        %v3995 = vshrl.u32 %v3994, 7
        %v3996 = vsub.s32 %v3747, %v3995
        %v3997 = vrot.slane %v3108, %v3996
        %v3998 = vsel %vm3752, %v3997, %v3993
        %v3999 = vlaneseq
        %v4000 = vshrl.u32 %v3999, 7
        %v4001 = vsub.s32 %v3754, %v4000
        %v4002 = vrot.slane %v3109, %v4001
        %v4003 = vsel %vm3759, %v4002, %v3998
        %v4004 = vlaneseq
        %v4005 = vshrl.u32 %v4004, 7
        %v4006 = vsub.s32 %v3761, %v4005
        %v4007 = vrot.slane %v3110, %v4006
        %v4008 = vsel %vm3766, %v4007, %v4003
        %v4009 = vlaneseq
        %v4010 = vshrl.u32 %v4009, 7
        %v4011 = vsub.s32 %v3768, %v4010
        %v4012 = vrot.slane %v3111, %v4011
        %v4013 = vsel %vm3773, %v4012, %v4008
        %v4014 = vlaneseq
        %v4015 = vshrl.u32 %v4014, 7
        %v4016 = vsub.s32 %v3775, %v4015
        %v4017 = vrot.slane %v3112, %v4016
        %v4018 = vsel %vm3780, %v4017, %v4013
        %v4019 = vlaneseq
        %v4020 = vshrl.u32 %v4019, 7
        %v4021 = vsub.s32 %v3672, %v4020
        %v4022 = vrot.slane %v3113, %v4021
        %v4023 = vlaneseq
        %v4024 = vshrl.u32 %v4023, 7
        %v4025 = vsub.s32 %v3677, %v4024
        %v4026 = vrot.slane %v3114, %v4025
        %v4027 = vsel %vm3682, %v4026, %v4022
        %v4028 = vlaneseq
        %v4029 = vshrl.u32 %v4028, 7
        %v4030 = vsub.s32 %v3684, %v4029
        %v4031 = vrot.slane %v3115, %v4030
        %v4032 = vsel %vm3689, %v4031, %v4027
        %v4033 = vlaneseq
        %v4034 = vshrl.u32 %v4033, 7
        %v4035 = vsub.s32 %v3691, %v4034
        %v4036 = vrot.slane %v3116, %v4035
        %v4037 = vsel %vm3696, %v4036, %v4032
        %v4038 = vlaneseq
        %v4039 = vshrl.u32 %v4038, 7
        %v4040 = vsub.s32 %v3698, %v4039
        %v4041 = vrot.slane %v3117, %v4040
        %v4042 = vsel %vm3703, %v4041, %v4037
        %v4043 = vlaneseq
        %v4044 = vshrl.u32 %v4043, 7
        %v4045 = vsub.s32 %v3672, %v4044
        %v4046 = vrot.slane %v3118, %v4045
        %v4047 = vlaneseq
        %v4048 = vshrl.u32 %v4047, 7
        %v4049 = vsub.s32 %v3677, %v4048
        %v4050 = vrot.slane %v3119, %v4049
        %v4051 = vsel %vm3682, %v4050, %v4046
        %v4052 = vlaneseq
        %v4053 = vshrl.u32 %v4052, 7
        %v4054 = vsub.s32 %v3684, %v4053
        %v4055 = vrot.slane %v3120, %v4054
        %v4056 = vsel %vm3689, %v4055, %v4051
        %v4057 = vlaneseq
        %v4058 = vshrl.u32 %v4057, 7
        %v4059 = vsub.s32 %v3691, %v4058
        %v4060 = vrot.slane %v3121, %v4059
        %v4061 = vsel %vm3696, %v4060, %v4056
        %v4062 = vlaneseq
        %v4063 = vshrl.u32 %v4062, 7
        %v4064 = vsub.s32 %v3698, %v4063
        %v4065 = vrot.slane %v3122, %v4064
        %v4066 = vsel %vm3703, %v4065, %v4061
        %v4067 = vlaneseq
        %v4068 = vshrl.u32 %v4067, 7
        %v4069 = vsub.s32 %v3705, %v4068
        %v4070 = vrot.slane %v3123, %v4069
        %v4071 = vsel %vm3710, %v4070, %v4066
        %v4072 = vlaneseq
        %v4073 = vshrl.u32 %v4072, 7
        %v4074 = vsub.s32 %v3712, %v4073
        %v4075 = vrot.slane %v3124, %v4074
        %v4076 = vsel %vm3717, %v4075, %v4071
        %v4077 = vlaneseq
        %v4078 = vshrl.u32 %v4077, 7
        %v4079 = vsub.s32 %v3719, %v4078
        %v4080 = vrot.slane %v3125, %v4079
        %v4081 = vsel %vm3724, %v4080, %v4076
        %v4082 = vlaneseq
        %v4083 = vshrl.u32 %v4082, 7
        %v4084 = vsub.s32 %v3726, %v4083
        %v4085 = vrot.slane %v3126, %v4084
        %v4086 = vsel %vm3731, %v4085, %v4081
        %v4087 = vlaneseq
        %v4088 = vshrl.u32 %v4087, 7
        %v4089 = vsub.s32 %v3733, %v4088
        %v4090 = vrot.slane %v3127, %v4089
        %v4091 = vsel %vm3738, %v4090, %v4086
        %v4092 = vlaneseq
        %v4093 = vshrl.u32 %v4092, 7
        %v4094 = vsub.s32 %v3740, %v4093
        %v4095 = vrot.slane %v3128, %v4094
        %v4096 = vsel %vm3745, %v4095, %v4091
        %v4097 = vlaneseq
        %v4098 = vshrl.u32 %v4097, 7
        %v4099 = vsub.s32 %v3747, %v4098
        %v4100 = vrot.slane %v3129, %v4099
        %v4101 = vsel %vm3752, %v4100, %v4096
        %v4102 = vlaneseq
        %v4103 = vshrl.u32 %v4102, 7
        %v4104 = vsub.s32 %v3754, %v4103
        %v4105 = vrot.slane %v3130, %v4104
        %v4106 = vsel %vm3759, %v4105, %v4101
        %v4107 = vlaneseq
        %v4108 = vshrl.u32 %v4107, 7
        %v4109 = vsub.s32 %v3761, %v4108
        %v4110 = vrot.slane %v3131, %v4109
        %v4111 = vsel %vm3766, %v4110, %v4106
        %v4112 = vlaneseq
        %v4113 = vshrl.u32 %v4112, 7
        %v4114 = vsub.s32 %v3768, %v4113
        %v4115 = vrot.slane %v3132, %v4114
        %v4116 = vsel %vm3773, %v4115, %v4111
        %v4117 = vlaneseq
        %v4118 = vshrl.u32 %v4117, 7
        %v4119 = vsub.s32 %v3775, %v4118
        %v4120 = vrot.slane %v3133, %v4119
        %v4121 = vsel %vm3780, %v4120, %v4116
        %v4122 = vlaneseq
        %v4123 = vshrl.u32 %v4122, 7
        %v4124 = vsub.s32 %v3672, %v4123
        %v4125 = vrot.slane %v3134, %v4124
        %v4126 = vlaneseq
        %v4127 = vshrl.u32 %v4126, 7
        %v4128 = vsub.s32 %v3677, %v4127
        %v4129 = vrot.slane %v3135, %v4128
        %v4130 = vsel %vm3682, %v4129, %v4125
        %v4131 = vlaneseq
        %v4132 = vshrl.u32 %v4131, 7
        %v4133 = vsub.s32 %v3684, %v4132
        %v4134 = vrot.slane %v3136, %v4133
        %v4135 = vsel %vm3689, %v4134, %v4130
        %v4136 = vlaneseq
        %v4137 = vshrl.u32 %v4136, 7
        %v4138 = vsub.s32 %v3691, %v4137
        %v4139 = vrot.slane %v3137, %v4138
        %v4140 = vsel %vm3696, %v4139, %v4135
        %v4141 = vlaneseq
        %v4142 = vshrl.u32 %v4141, 7
        %v4143 = vsub.s32 %v3698, %v4142
        %v4144 = vrot.slane %v3138, %v4143
        %v4145 = vsel %vm3703, %v4144, %v4140
        %v4146 = vlaneseq
        %v4147 = vshrl.u32 %v4146, 7
        %v4148 = vsub.s32 %v3705, %v4147
        %v4149 = vrot.slane %v3139, %v4148
        %v4150 = vsel %vm3710, %v4149, %v4145
        %v4151 = vlaneseq
        %v4152 = vshrl.u32 %v4151, 7
        %v4153 = vsub.s32 %v3712, %v4152
        %v4154 = vrot.slane %v3140, %v4153
        %v4155 = vsel %vm3717, %v4154, %v4150
        %v4156 = vlaneseq
        %v4157 = vshrl.u32 %v4156, 7
        %v4158 = vsub.s32 %v3719, %v4157
        %v4159 = vrot.slane %v3141, %v4158
        %v4160 = vsel %vm3724, %v4159, %v4155
        %v4161 = vlaneseq
        %v4162 = vshrl.u32 %v4161, 7
        %v4163 = vsub.s32 %v3726, %v4162
        %v4164 = vrot.slane %v3142, %v4163
        %v4165 = vsel %vm3731, %v4164, %v4160
        %v4166 = vlaneseq
        %v4167 = vshrl.u32 %v4166, 7
        %v4168 = vsub.s32 %v3733, %v4167
        %v4169 = vrot.slane %v3143, %v4168
        %v4170 = vsel %vm3738, %v4169, %v4165
        %v4171 = vlaneseq
        %v4172 = vshrl.u32 %v4171, 7
        %v4173 = vsub.s32 %v3740, %v4172
        %v4174 = vrot.slane %v3144, %v4173
        %v4175 = vsel %vm3745, %v4174, %v4170
        %v4176 = vlaneseq
        %v4177 = vshrl.u32 %v4176, 7
        %v4178 = vsub.s32 %v3747, %v4177
        %v4179 = vrot.slane %v3145, %v4178
        %v4180 = vsel %vm3752, %v4179, %v4175
        %v4181 = vlaneseq
        %v4182 = vshrl.u32 %v4181, 7
        %v4183 = vsub.s32 %v3754, %v4182
        %v4184 = vrot.slane %v3146, %v4183
        %v4185 = vsel %vm3759, %v4184, %v4180
        %v4186 = vlaneseq
        %v4187 = vshrl.u32 %v4186, 7
        %v4188 = vsub.s32 %v3761, %v4187
        %v4189 = vrot.slane %v3147, %v4188
        %v4190 = vsel %vm3766, %v4189, %v4185
        %v4191 = vlaneseq
        %v4192 = vshrl.u32 %v4191, 7
        %v4193 = vsub.s32 %v3768, %v4192
        %v4194 = vrot.slane %v3148, %v4193
        %v4195 = vsel %vm3773, %v4194, %v4190
        %v4196 = vlaneseq
        %v4197 = vshrl.u32 %v4196, 7
        %v4198 = vsub.s32 %v3775, %v4197
        %v4199 = vrot.slane %v3149, %v4198
        %v4200 = vsel %vm3780, %v4199, %v4195
        %v4201 = vlaneseq
        %v4202 = vshrl.u32 %v4201, 7
        %v4203 = vsub.s32 %v3672, %v4202
        %v4204 = vrot.slane %v3150, %v4203
        %v4205 = vlaneseq
        %v4206 = vshrl.u32 %v4205, 7
        %v4207 = vsub.s32 %v3677, %v4206
        %v4208 = vrot.slane %v3151, %v4207
        %v4209 = vsel %vm3682, %v4208, %v4204
        %v4210 = vlaneseq
        %v4211 = vshrl.u32 %v4210, 7
        %v4212 = vsub.s32 %v3684, %v4211
        %v4213 = vrot.slane %v3152, %v4212
        %v4214 = vsel %vm3689, %v4213, %v4209
        %v4215 = vlaneseq
        %v4216 = vshrl.u32 %v4215, 7
        %v4217 = vsub.s32 %v3691, %v4216
        %v4218 = vrot.slane %v3153, %v4217
        %v4219 = vsel %vm3696, %v4218, %v4214
        %v4220 = vlaneseq
        %v4221 = vshrl.u32 %v4220, 7
        %v4222 = vsub.s32 %v3698, %v4221
        %v4223 = vrot.slane %v3154, %v4222
        %v4224 = vsel %vm3703, %v4223, %v4219
        %v4225 = vlaneseq
        %v4226 = vshrl.u32 %v4225, 7
        %v4227 = vsub.s32 %v3705, %v4226
        %v4228 = vrot.slane %v3155, %v4227
        %v4229 = vsel %vm3710, %v4228, %v4224
        %v4230 = vlaneseq
        %v4231 = vshrl.u32 %v4230, 7
        %v4232 = vsub.s32 %v3712, %v4231
        %v4233 = vrot.slane %v3156, %v4232
        %v4234 = vsel %vm3717, %v4233, %v4229
        %v4235 = vlaneseq
        %v4236 = vshrl.u32 %v4235, 7
        %v4237 = vsub.s32 %v3719, %v4236
        %v4238 = vrot.slane %v3157, %v4237
        %v4239 = vsel %vm3724, %v4238, %v4234
        %v4240 = vlaneseq
        %v4241 = vshrl.u32 %v4240, 7
        %v4242 = vsub.s32 %v3726, %v4241
        %v4243 = vrot.slane %v3158, %v4242
        %v4244 = vsel %vm3731, %v4243, %v4239
        %v4245 = vlaneseq
        %v4246 = vshrl.u32 %v4245, 7
        %v4247 = vsub.s32 %v3733, %v4246
        %v4248 = vrot.slane %v3159, %v4247
        %v4249 = vsel %vm3738, %v4248, %v4244
        %v4250 = vlaneseq
        %v4251 = vshrl.u32 %v4250, 7
        %v4252 = vsub.s32 %v3740, %v4251
        %v4253 = vrot.slane %v3160, %v4252
        %v4254 = vsel %vm3745, %v4253, %v4249
        %v4255 = vlaneseq
        %v4256 = vshrl.u32 %v4255, 7
        %v4257 = vsub.s32 %v3747, %v4256
        %v4258 = vrot.slane %v3161, %v4257
        %v4259 = vsel %vm3752, %v4258, %v4254
        %v4260 = vlaneseq
        %v4261 = vshrl.u32 %v4260, 7
        %v4262 = vsub.s32 %v3754, %v4261
        %v4263 = vrot.slane %v3162, %v4262
        %v4264 = vsel %vm3759, %v4263, %v4259
        %v4265 = vlaneseq
        %v4266 = vshrl.u32 %v4265, 7
        %v4267 = vsub.s32 %v3761, %v4266
        %v4268 = vrot.slane %v3163, %v4267
        %v4269 = vsel %vm3766, %v4268, %v4264
        %v4270 = vlaneseq
        %v4271 = vshrl.u32 %v4270, 7
        %v4272 = vsub.s32 %v3768, %v4271
        %v4273 = vrot.slane %v3164, %v4272
        %v4274 = vsel %vm3773, %v4273, %v4269
        %v4275 = vlaneseq
        %v4276 = vshrl.u32 %v4275, 7
        %v4277 = vsub.s32 %v3775, %v4276
        %v4278 = vrot.slane %v3165, %v4277
        %v4279 = vsel %vm3780, %v4278, %v4274
        %v4280 = vlaneseq
        %v4281 = vshrl.u32 %v4280, 7
        %v4282 = vsub.s32 %v3672, %v4281
        %v4283 = vrot.slane %v3166, %v4282
        %v4284 = vlaneseq
        %v4285 = vshrl.u32 %v4284, 7
        %v4286 = vsub.s32 %v3677, %v4285
        %v4287 = vrot.slane %v3167, %v4286
        %v4288 = vsel %vm3682, %v4287, %v4283
        %v4289 = vlaneseq
        %v4290 = vshrl.u32 %v4289, 7
        %v4291 = vsub.s32 %v3684, %v4290
        %v4292 = vrot.slane %v3168, %v4291
        %v4293 = vsel %vm3689, %v4292, %v4288
        %v4294 = vlaneseq
        %v4295 = vshrl.u32 %v4294, 7
        %v4296 = vsub.s32 %v3691, %v4295
        %v4297 = vrot.slane %v3169, %v4296
        %v4298 = vsel %vm3696, %v4297, %v4293
        %v4299 = vlaneseq
        %v4300 = vshrl.u32 %v4299, 7
        %v4301 = vsub.s32 %v3698, %v4300
        %v4302 = vrot.slane %v3170, %v4301
        %v4303 = vsel %vm3703, %v4302, %v4298
        %v4304 = vlaneseq
        %v4305 = vshrl.u32 %v4304, 7
        %v4306 = vsub.s32 %v3705, %v4305
        %v4307 = vrot.slane %v3171, %v4306
        %v4308 = vsel %vm3710, %v4307, %v4303
        %v4309 = vlaneseq
        %v4310 = vshrl.u32 %v4309, 7
        %v4311 = vsub.s32 %v3712, %v4310
        %v4312 = vrot.slane %v3172, %v4311
        %v4313 = vsel %vm3717, %v4312, %v4308
        %v4314 = vlaneseq
        %v4315 = vshrl.u32 %v4314, 7
        %v4316 = vsub.s32 %v3719, %v4315
        %v4317 = vrot.slane %v3173, %v4316
        %v4318 = vsel %vm3724, %v4317, %v4313
        %v4319 = vlaneseq
        %v4320 = vshrl.u32 %v4319, 7
        %v4321 = vsub.s32 %v3726, %v4320
        %v4322 = vrot.slane %v3174, %v4321
        %v4323 = vsel %vm3731, %v4322, %v4318
        %v4324 = vlaneseq
        %v4325 = vshrl.u32 %v4324, 7
        %v4326 = vsub.s32 %v3733, %v4325
        %v4327 = vrot.slane %v3175, %v4326
        %v4328 = vsel %vm3738, %v4327, %v4323
        %v4329 = vlaneseq
        %v4330 = vshrl.u32 %v4329, 7
        %v4331 = vsub.s32 %v3740, %v4330
        %v4332 = vrot.slane %v3176, %v4331
        %v4333 = vsel %vm3745, %v4332, %v4328
        %v4334 = vlaneseq
        %v4335 = vshrl.u32 %v4334, 7
        %v4336 = vsub.s32 %v3747, %v4335
        %v4337 = vrot.slane %v3177, %v4336
        %v4338 = vsel %vm3752, %v4337, %v4333
        %v4339 = vlaneseq
        %v4340 = vshrl.u32 %v4339, 7
        %v4341 = vsub.s32 %v3754, %v4340
        %v4342 = vrot.slane %v3178, %v4341
        %v4343 = vsel %vm3759, %v4342, %v4338
        %v4344 = vlaneseq
        %v4345 = vshrl.u32 %v4344, 7
        %v4346 = vsub.s32 %v3761, %v4345
        %v4347 = vrot.slane %v3179, %v4346
        %v4348 = vsel %vm3766, %v4347, %v4343
        %v4349 = vlaneseq
        %v4350 = vshrl.u32 %v4349, 7
        %v4351 = vsub.s32 %v3768, %v4350
        %v4352 = vrot.slane %v3180, %v4351
        %v4353 = vsel %vm3773, %v4352, %v4348
        %v4354 = vlaneseq
        %v4355 = vshrl.u32 %v4354, 7
        %v4356 = vsub.s32 %v3775, %v4355
        %v4357 = vrot.slane %v3181, %v4356
        %v4358 = vsel %vm3780, %v4357, %v4353
        %v4359 = vlaneseq
        %v4360 = vshrl.u32 %v4359, 7
        %v4361 = vsub.s32 %v3672, %v4360
        %v4362 = vrot.slane %v3182, %v4361
        %v4363 = vlaneseq
        %v4364 = vshrl.u32 %v4363, 7
        %v4365 = vsub.s32 %v3677, %v4364
        %v4366 = vrot.slane %v3183, %v4365
        %v4367 = vsel %vm3682, %v4366, %v4362
        %v4368 = vlaneseq
        %v4369 = vshrl.u32 %v4368, 7
        %v4370 = vsub.s32 %v3684, %v4369
        %v4371 = vrot.slane %v3184, %v4370
        %v4372 = vsel %vm3689, %v4371, %v4367
        %v4373 = vlaneseq
        %v4374 = vshrl.u32 %v4373, 7
        %v4375 = vsub.s32 %v3691, %v4374
        %v4376 = vrot.slane %v3185, %v4375
        %v4377 = vsel %vm3696, %v4376, %v4372
        %v4378 = vlaneseq
        %v4379 = vshrl.u32 %v4378, 7
        %v4380 = vsub.s32 %v3698, %v4379
        %v4381 = vrot.slane %v3186, %v4380
        %v4382 = vsel %vm3703, %v4381, %v4377
        %v4383 = vlaneseq
        %v4384 = vshrl.u32 %v4383, 7
        %v4385 = vsub.s32 %v3672, %v4384
        %v4386 = vrot.slane %v3187, %v4385
        %v4387 = vlaneseq
        %v4388 = vshrl.u32 %v4387, 7
        %v4389 = vsub.s32 %v3677, %v4388
        %v4390 = vrot.slane %v3188, %v4389
        %v4391 = vsel %vm3682, %v4390, %v4386
        %v4392 = vlaneseq
        %v4393 = vshrl.u32 %v4392, 7
        %v4394 = vsub.s32 %v3684, %v4393
        %v4395 = vrot.slane %v3189, %v4394
        %v4396 = vsel %vm3689, %v4395, %v4391
        %v4397 = vlaneseq
        %v4398 = vshrl.u32 %v4397, 7
        %v4399 = vsub.s32 %v3691, %v4398
        %v4400 = vrot.slane %v3190, %v4399
        %v4401 = vsel %vm3696, %v4400, %v4396
        %v4402 = vlaneseq
        %v4403 = vshrl.u32 %v4402, 7
        %v4404 = vsub.s32 %v3698, %v4403
        %v4405 = vrot.slane %v3191, %v4404
        %v4406 = vsel %vm3703, %v4405, %v4401
        %v4407 = vlaneseq
        %v4408 = vshrl.u32 %v4407, 7
        %v4409 = vsub.s32 %v3705, %v4408
        %v4410 = vrot.slane %v3192, %v4409
        %v4411 = vsel %vm3710, %v4410, %v4406
        %v4412 = vlaneseq
        %v4413 = vshrl.u32 %v4412, 7
        %v4414 = vsub.s32 %v3712, %v4413
        %v4415 = vrot.slane %v3193, %v4414
        %v4416 = vsel %vm3717, %v4415, %v4411
        %v4417 = vlaneseq
        %v4418 = vshrl.u32 %v4417, 7
        %v4419 = vsub.s32 %v3719, %v4418
        %v4420 = vrot.slane %v3194, %v4419
        %v4421 = vsel %vm3724, %v4420, %v4416
        %v4422 = vlaneseq
        %v4423 = vshrl.u32 %v4422, 7
        %v4424 = vsub.s32 %v3726, %v4423
        %v4425 = vrot.slane %v3195, %v4424
        %v4426 = vsel %vm3731, %v4425, %v4421
        %v4427 = vlaneseq
        %v4428 = vshrl.u32 %v4427, 7
        %v4429 = vsub.s32 %v3733, %v4428
        %v4430 = vrot.slane %v3196, %v4429
        %v4431 = vsel %vm3738, %v4430, %v4426
        %v4432 = vlaneseq
        %v4433 = vshrl.u32 %v4432, 7
        %v4434 = vsub.s32 %v3740, %v4433
        %v4435 = vrot.slane %v3197, %v4434
        %v4436 = vsel %vm3745, %v4435, %v4431
        %v4437 = vlaneseq
        %v4438 = vshrl.u32 %v4437, 7
        %v4439 = vsub.s32 %v3747, %v4438
        %v4440 = vrot.slane %v3198, %v4439
        %v4441 = vsel %vm3752, %v4440, %v4436
        %v4442 = vlaneseq
        %v4443 = vshrl.u32 %v4442, 7
        %v4444 = vsub.s32 %v3754, %v4443
        %v4445 = vrot.slane %v3199, %v4444
        %v4446 = vsel %vm3759, %v4445, %v4441
        %v4447 = vlaneseq
        %v4448 = vshrl.u32 %v4447, 7
        %v4449 = vsub.s32 %v3761, %v4448
        %v4450 = vrot.slane %v3200, %v4449
        %v4451 = vsel %vm3766, %v4450, %v4446
        %v4452 = vlaneseq
        %v4453 = vshrl.u32 %v4452, 7
        %v4454 = vsub.s32 %v3768, %v4453
        %v4455 = vrot.slane %v3201, %v4454
        %v4456 = vsel %vm3773, %v4455, %v4451
        %v4457 = vlaneseq
        %v4458 = vshrl.u32 %v4457, 7
        %v4459 = vsub.s32 %v3775, %v4458
        %v4460 = vrot.slane %v3202, %v4459
        %v4461 = vsel %vm3780, %v4460, %v4456
        %v4462 = vlaneseq
        %v4463 = vshrl.u32 %v4462, 7
        %v4464 = vsub.s32 %v3672, %v4463
        %v4465 = vrot.slane %v3203, %v4464
        %v4466 = vlaneseq
        %v4467 = vshrl.u32 %v4466, 7
        %v4468 = vsub.s32 %v3677, %v4467
        %v4469 = vrot.slane %v3204, %v4468
        %v4470 = vsel %vm3682, %v4469, %v4465
        %v4471 = vlaneseq
        %v4472 = vshrl.u32 %v4471, 7
        %v4473 = vsub.s32 %v3684, %v4472
        %v4474 = vrot.slane %v3205, %v4473
        %v4475 = vsel %vm3689, %v4474, %v4470
        %v4476 = vlaneseq
        %v4477 = vshrl.u32 %v4476, 7
        %v4478 = vsub.s32 %v3691, %v4477
        %v4479 = vrot.slane %v3206, %v4478
        %v4480 = vsel %vm3696, %v4479, %v4475
        %v4481 = vlaneseq
        %v4482 = vshrl.u32 %v4481, 7
        %v4483 = vsub.s32 %v3698, %v4482
        %v4484 = vrot.slane %v3207, %v4483
        %v4485 = vsel %vm3703, %v4484, %v4480
        %v4486 = vlaneseq
        %v4487 = vshrl.u32 %v4486, 7
        %v4488 = vsub.s32 %v3705, %v4487
        %v4489 = vrot.slane %v3208, %v4488
        %v4490 = vsel %vm3710, %v4489, %v4485
        %v4491 = vlaneseq
        %v4492 = vshrl.u32 %v4491, 7
        %v4493 = vsub.s32 %v3712, %v4492
        %v4494 = vrot.slane %v3209, %v4493
        %v4495 = vsel %vm3717, %v4494, %v4490
        %v4496 = vlaneseq
        %v4497 = vshrl.u32 %v4496, 7
        %v4498 = vsub.s32 %v3719, %v4497
        %v4499 = vrot.slane %v3210, %v4498
        %v4500 = vsel %vm3724, %v4499, %v4495
        %v4501 = vlaneseq
        %v4502 = vshrl.u32 %v4501, 7
        %v4503 = vsub.s32 %v3726, %v4502
        %v4504 = vrot.slane %v3211, %v4503
        %v4505 = vsel %vm3731, %v4504, %v4500
        %v4506 = vlaneseq
        %v4507 = vshrl.u32 %v4506, 7
        %v4508 = vsub.s32 %v3733, %v4507
        %v4509 = vrot.slane %v3212, %v4508
        %v4510 = vsel %vm3738, %v4509, %v4505
        %v4511 = vlaneseq
        %v4512 = vshrl.u32 %v4511, 7
        %v4513 = vsub.s32 %v3740, %v4512
        %v4514 = vrot.slane %v3213, %v4513
        %v4515 = vsel %vm3745, %v4514, %v4510
        %v4516 = vlaneseq
        %v4517 = vshrl.u32 %v4516, 7
        %v4518 = vsub.s32 %v3747, %v4517
        %v4519 = vrot.slane %v3214, %v4518
        %v4520 = vsel %vm3752, %v4519, %v4515
        %v4521 = vlaneseq
        %v4522 = vshrl.u32 %v4521, 7
        %v4523 = vsub.s32 %v3754, %v4522
        %v4524 = vrot.slane %v3215, %v4523
        %v4525 = vsel %vm3759, %v4524, %v4520
        %v4526 = vlaneseq
        %v4527 = vshrl.u32 %v4526, 7
        %v4528 = vsub.s32 %v3761, %v4527
        %v4529 = vrot.slane %v3216, %v4528
        %v4530 = vsel %vm3766, %v4529, %v4525
        %v4531 = vlaneseq
        %v4532 = vshrl.u32 %v4531, 7
        %v4533 = vsub.s32 %v3768, %v4532
        %v4534 = vrot.slane %v3217, %v4533
        %v4535 = vsel %vm3773, %v4534, %v4530
        %v4536 = vlaneseq
        %v4537 = vshrl.u32 %v4536, 7
        %v4538 = vsub.s32 %v3775, %v4537
        %v4539 = vrot.slane %v3218, %v4538
        %v4540 = vsel %vm3780, %v4539, %v4535
        %v4541 = vlaneseq
        %v4542 = vshrl.u32 %v4541, 7
        %v4543 = vsub.s32 %v3672, %v4542
        %v4544 = vrot.slane %v3219, %v4543
        %v4545 = vlaneseq
        %v4546 = vshrl.u32 %v4545, 7
        %v4547 = vsub.s32 %v3677, %v4546
        %v4548 = vrot.slane %v3220, %v4547
        %v4549 = vsel %vm3682, %v4548, %v4544
        %v4550 = vlaneseq
        %v4551 = vshrl.u32 %v4550, 7
        %v4552 = vsub.s32 %v3684, %v4551
        %v4553 = vrot.slane %v3221, %v4552
        %v4554 = vsel %vm3689, %v4553, %v4549
        %v4555 = vlaneseq
        %v4556 = vshrl.u32 %v4555, 7
        %v4557 = vsub.s32 %v3691, %v4556
        %v4558 = vrot.slane %v3222, %v4557
        %v4559 = vsel %vm3696, %v4558, %v4554
        %v4560 = vlaneseq
        %v4561 = vshrl.u32 %v4560, 7
        %v4562 = vsub.s32 %v3698, %v4561
        %v4563 = vrot.slane %v3223, %v4562
        %v4564 = vsel %vm3703, %v4563, %v4559
        %v4565 = vlaneseq
        %v4566 = vshrl.u32 %v4565, 7
        %v4567 = vsub.s32 %v3705, %v4566
        %v4568 = vrot.slane %v3224, %v4567
        %v4569 = vsel %vm3710, %v4568, %v4564
        %v4570 = vlaneseq
        %v4571 = vshrl.u32 %v4570, 7
        %v4572 = vsub.s32 %v3712, %v4571
        %v4573 = vrot.slane %v3225, %v4572
        %v4574 = vsel %vm3717, %v4573, %v4569
        %v4575 = vlaneseq
        %v4576 = vshrl.u32 %v4575, 7
        %v4577 = vsub.s32 %v3719, %v4576
        %v4578 = vrot.slane %v3226, %v4577
        %v4579 = vsel %vm3724, %v4578, %v4574
        %v4580 = vlaneseq
        %v4581 = vshrl.u32 %v4580, 7
        %v4582 = vsub.s32 %v3726, %v4581
        %v4583 = vrot.slane %v3227, %v4582
        %v4584 = vsel %vm3731, %v4583, %v4579
        %v4585 = vlaneseq
        %v4586 = vshrl.u32 %v4585, 7
        %v4587 = vsub.s32 %v3733, %v4586
        %v4588 = vrot.slane %v3228, %v4587
        %v4589 = vsel %vm3738, %v4588, %v4584
        %v4590 = vlaneseq
        %v4591 = vshrl.u32 %v4590, 7
        %v4592 = vsub.s32 %v3740, %v4591
        %v4593 = vrot.slane %v3229, %v4592
        %v4594 = vsel %vm3745, %v4593, %v4589
        %v4595 = vlaneseq
        %v4596 = vshrl.u32 %v4595, 7
        %v4597 = vsub.s32 %v3747, %v4596
        %v4598 = vrot.slane %v3230, %v4597
        %v4599 = vsel %vm3752, %v4598, %v4594
        %v4600 = vlaneseq
        %v4601 = vshrl.u32 %v4600, 7
        %v4602 = vsub.s32 %v3754, %v4601
        %v4603 = vrot.slane %v3231, %v4602
        %v4604 = vsel %vm3759, %v4603, %v4599
        %v4605 = vlaneseq
        %v4606 = vshrl.u32 %v4605, 7
        %v4607 = vsub.s32 %v3761, %v4606
        %v4608 = vrot.slane %v3232, %v4607
        %v4609 = vsel %vm3766, %v4608, %v4604
        %v4610 = vlaneseq
        %v4611 = vshrl.u32 %v4610, 7
        %v4612 = vsub.s32 %v3768, %v4611
        %v4613 = vrot.slane %v3233, %v4612
        %v4614 = vsel %vm3773, %v4613, %v4609
        %v4615 = vlaneseq
        %v4616 = vshrl.u32 %v4615, 7
        %v4617 = vsub.s32 %v3775, %v4616
        %v4618 = vrot.slane %v3234, %v4617
        %v4619 = vsel %vm3780, %v4618, %v4614
        %v4620 = vlaneseq
        %v4621 = vshrl.u32 %v4620, 7
        %v4622 = vsub.s32 %v3672, %v4621
        %v4623 = vrot.slane %v3235, %v4622
        %v4624 = vlaneseq
        %v4625 = vshrl.u32 %v4624, 7
        %v4626 = vsub.s32 %v3677, %v4625
        %v4627 = vrot.slane %v3236, %v4626
        %v4628 = vsel %vm3682, %v4627, %v4623
        %v4629 = vlaneseq
        %v4630 = vshrl.u32 %v4629, 7
        %v4631 = vsub.s32 %v3684, %v4630
        %v4632 = vrot.slane %v3237, %v4631
        %v4633 = vsel %vm3689, %v4632, %v4628
        %v4634 = vlaneseq
        %v4635 = vshrl.u32 %v4634, 7
        %v4636 = vsub.s32 %v3691, %v4635
        %v4637 = vrot.slane %v3238, %v4636
        %v4638 = vsel %vm3696, %v4637, %v4633
        %v4639 = vlaneseq
        %v4640 = vshrl.u32 %v4639, 7
        %v4641 = vsub.s32 %v3698, %v4640
        %v4642 = vrot.slane %v3239, %v4641
        %v4643 = vsel %vm3703, %v4642, %v4638
        %v4644 = vlaneseq
        %v4645 = vshrl.u32 %v4644, 7
        %v4646 = vsub.s32 %v3705, %v4645
        %v4647 = vrot.slane %v3240, %v4646
        %v4648 = vsel %vm3710, %v4647, %v4643
        %v4649 = vlaneseq
        %v4650 = vshrl.u32 %v4649, 7
        %v4651 = vsub.s32 %v3712, %v4650
        %v4652 = vrot.slane %v3241, %v4651
        %v4653 = vsel %vm3717, %v4652, %v4648
        %v4654 = vlaneseq
        %v4655 = vshrl.u32 %v4654, 7
        %v4656 = vsub.s32 %v3719, %v4655
        %v4657 = vrot.slane %v3242, %v4656
        %v4658 = vsel %vm3724, %v4657, %v4653
        %v4659 = vlaneseq
        %v4660 = vshrl.u32 %v4659, 7
        %v4661 = vsub.s32 %v3726, %v4660
        %v4662 = vrot.slane %v3243, %v4661
        %v4663 = vsel %vm3731, %v4662, %v4658
        %v4664 = vlaneseq
        %v4665 = vshrl.u32 %v4664, 7
        %v4666 = vsub.s32 %v3733, %v4665
        %v4667 = vrot.slane %v3244, %v4666
        %v4668 = vsel %vm3738, %v4667, %v4663
        %v4669 = vlaneseq
        %v4670 = vshrl.u32 %v4669, 7
        %v4671 = vsub.s32 %v3740, %v4670
        %v4672 = vrot.slane %v3245, %v4671
        %v4673 = vsel %vm3745, %v4672, %v4668
        %v4674 = vlaneseq
        %v4675 = vshrl.u32 %v4674, 7
        %v4676 = vsub.s32 %v3747, %v4675
        %v4677 = vrot.slane %v3246, %v4676
        %v4678 = vsel %vm3752, %v4677, %v4673
        %v4679 = vlaneseq
        %v4680 = vshrl.u32 %v4679, 7
        %v4681 = vsub.s32 %v3754, %v4680
        %v4682 = vrot.slane %v3247, %v4681
        %v4683 = vsel %vm3759, %v4682, %v4678
        %v4684 = vlaneseq
        %v4685 = vshrl.u32 %v4684, 7
        %v4686 = vsub.s32 %v3761, %v4685
        %v4687 = vrot.slane %v3248, %v4686
        %v4688 = vsel %vm3766, %v4687, %v4683
        %v4689 = vlaneseq
        %v4690 = vshrl.u32 %v4689, 7
        %v4691 = vsub.s32 %v3768, %v4690
        %v4692 = vrot.slane %v3249, %v4691
        %v4693 = vsel %vm3773, %v4692, %v4688
        %v4694 = vlaneseq
        %v4695 = vshrl.u32 %v4694, 7
        %v4696 = vsub.s32 %v3775, %v4695
        %v4697 = vrot.slane %v3250, %v4696
        %v4698 = vsel %vm3780, %v4697, %v4693
        %v4699 = vlaneseq
        %v4700 = vshrl.u32 %v4699, 7
        %v4701 = vsub.s32 %v3672, %v4700
        %v4702 = vrot.slane %v3251, %v4701
        %v4703 = vlaneseq
        %v4704 = vshrl.u32 %v4703, 7
        %v4705 = vsub.s32 %v3677, %v4704
        %v4706 = vrot.slane %v3252, %v4705
        %v4707 = vsel %vm3682, %v4706, %v4702
        %v4708 = vlaneseq
        %v4709 = vshrl.u32 %v4708, 7
        %v4710 = vsub.s32 %v3684, %v4709
        %v4711 = vrot.slane %v3253, %v4710
        %v4712 = vsel %vm3689, %v4711, %v4707
        %v4713 = vlaneseq
        %v4714 = vshrl.u32 %v4713, 7
        %v4715 = vsub.s32 %v3691, %v4714
        %v4716 = vrot.slane %v3254, %v4715
        %v4717 = vsel %vm3696, %v4716, %v4712
        %v4718 = vlaneseq
        %v4719 = vshrl.u32 %v4718, 7
        %v4720 = vsub.s32 %v3698, %v4719
        %v4721 = vrot.slane %v3255, %v4720
        %v4722 = vsel %vm3703, %v4721, %v4717
        %v4723 = vlaneseq
        %v4724 = vshrl.u32 %v4723, 7
        %v4725 = vsub.s32 %v3672, %v4724
        %v4726 = vrot.slane %v3256, %v4725
        %v4727 = vlaneseq
        %v4728 = vshrl.u32 %v4727, 7
        %v4729 = vsub.s32 %v3677, %v4728
        %v4730 = vrot.slane %v3257, %v4729
        %v4731 = vsel %vm3682, %v4730, %v4726
        %v4732 = vlaneseq
        %v4733 = vshrl.u32 %v4732, 7
        %v4734 = vsub.s32 %v3684, %v4733
        %v4735 = vrot.slane %v3258, %v4734
        %v4736 = vsel %vm3689, %v4735, %v4731
        %v4737 = vlaneseq
        %v4738 = vshrl.u32 %v4737, 7
        %v4739 = vsub.s32 %v3691, %v4738
        %v4740 = vrot.slane %v3259, %v4739
        %v4741 = vsel %vm3696, %v4740, %v4736
        %v4742 = vlaneseq
        %v4743 = vshrl.u32 %v4742, 7
        %v4744 = vsub.s32 %v3698, %v4743
        %v4745 = vrot.slane %v3260, %v4744
        %v4746 = vsel %vm3703, %v4745, %v4741
        %v4747 = vlaneseq
        %v4748 = vshrl.u32 %v4747, 7
        %v4749 = vsub.s32 %v3705, %v4748
        %v4750 = vrot.slane %v3261, %v4749
        %v4751 = vsel %vm3710, %v4750, %v4746
        %v4752 = vlaneseq
        %v4753 = vshrl.u32 %v4752, 7
        %v4754 = vsub.s32 %v3712, %v4753
        %v4755 = vrot.slane %v3262, %v4754
        %v4756 = vsel %vm3717, %v4755, %v4751
        %v4757 = vlaneseq
        %v4758 = vshrl.u32 %v4757, 7
        %v4759 = vsub.s32 %v3719, %v4758
        %v4760 = vrot.slane %v3263, %v4759
        %v4761 = vsel %vm3724, %v4760, %v4756
        %v4762 = vlaneseq
        %v4763 = vshrl.u32 %v4762, 7
        %v4764 = vsub.s32 %v3726, %v4763
        %v4765 = vrot.slane %v3264, %v4764
        %v4766 = vsel %vm3731, %v4765, %v4761
        %v4767 = vlaneseq
        %v4768 = vshrl.u32 %v4767, 7
        %v4769 = vsub.s32 %v3733, %v4768
        %v4770 = vrot.slane %v3265, %v4769
        %v4771 = vsel %vm3738, %v4770, %v4766
        %v4772 = vlaneseq
        %v4773 = vshrl.u32 %v4772, 7
        %v4774 = vsub.s32 %v3740, %v4773
        %v4775 = vrot.slane %v3266, %v4774
        %v4776 = vsel %vm3745, %v4775, %v4771
        %v4777 = vlaneseq
        %v4778 = vshrl.u32 %v4777, 7
        %v4779 = vsub.s32 %v3747, %v4778
        %v4780 = vrot.slane %v3267, %v4779
        %v4781 = vsel %vm3752, %v4780, %v4776
        %v4782 = vlaneseq
        %v4783 = vshrl.u32 %v4782, 7
        %v4784 = vsub.s32 %v3754, %v4783
        %v4785 = vrot.slane %v3268, %v4784
        %v4786 = vsel %vm3759, %v4785, %v4781
        %v4787 = vlaneseq
        %v4788 = vshrl.u32 %v4787, 7
        %v4789 = vsub.s32 %v3761, %v4788
        %v4790 = vrot.slane %v3269, %v4789
        %v4791 = vsel %vm3766, %v4790, %v4786
        %v4792 = vlaneseq
        %v4793 = vshrl.u32 %v4792, 7
        %v4794 = vsub.s32 %v3768, %v4793
        %v4795 = vrot.slane %v3270, %v4794
        %v4796 = vsel %vm3773, %v4795, %v4791
        %v4797 = vlaneseq
        %v4798 = vshrl.u32 %v4797, 7
        %v4799 = vsub.s32 %v3775, %v4798
        %v4800 = vrot.slane %v3271, %v4799
        %v4801 = vsel %vm3780, %v4800, %v4796
        %v4802 = vlaneseq
        %v4803 = vshrl.u32 %v4802, 7
        %v4804 = vsub.s32 %v3672, %v4803
        %v4805 = vrot.slane %v3272, %v4804
        %v4806 = vlaneseq
        %v4807 = vshrl.u32 %v4806, 7
        %v4808 = vsub.s32 %v3677, %v4807
        %v4809 = vrot.slane %v3273, %v4808
        %v4810 = vsel %vm3682, %v4809, %v4805
        %v4811 = vlaneseq
        %v4812 = vshrl.u32 %v4811, 7
        %v4813 = vsub.s32 %v3684, %v4812
        %v4814 = vrot.slane %v3274, %v4813
        %v4815 = vsel %vm3689, %v4814, %v4810
        %v4816 = vlaneseq
        %v4817 = vshrl.u32 %v4816, 7
        %v4818 = vsub.s32 %v3691, %v4817
        %v4819 = vrot.slane %v3275, %v4818
        %v4820 = vsel %vm3696, %v4819, %v4815
        %v4821 = vlaneseq
        %v4822 = vshrl.u32 %v4821, 7
        %v4823 = vsub.s32 %v3698, %v4822
        %v4824 = vrot.slane %v3276, %v4823
        %v4825 = vsel %vm3703, %v4824, %v4820
        %v4826 = vlaneseq
        %v4827 = vshrl.u32 %v4826, 7
        %v4828 = vsub.s32 %v3705, %v4827
        %v4829 = vrot.slane %v3277, %v4828
        %v4830 = vsel %vm3710, %v4829, %v4825
        %v4831 = vlaneseq
        %v4832 = vshrl.u32 %v4831, 7
        %v4833 = vsub.s32 %v3712, %v4832
        %v4834 = vrot.slane %v3278, %v4833
        %v4835 = vsel %vm3717, %v4834, %v4830
        %v4836 = vlaneseq
        %v4837 = vshrl.u32 %v4836, 7
        %v4838 = vsub.s32 %v3719, %v4837
        %v4839 = vrot.slane %v3279, %v4838
        %v4840 = vsel %vm3724, %v4839, %v4835
        %v4841 = vlaneseq
        %v4842 = vshrl.u32 %v4841, 7
        %v4843 = vsub.s32 %v3726, %v4842
        %v4844 = vrot.slane %v3280, %v4843
        %v4845 = vsel %vm3731, %v4844, %v4840
        %v4846 = vlaneseq
        %v4847 = vshrl.u32 %v4846, 7
        %v4848 = vsub.s32 %v3733, %v4847
        %v4849 = vrot.slane %v3281, %v4848
        %v4850 = vsel %vm3738, %v4849, %v4845
        %v4851 = vlaneseq
        %v4852 = vshrl.u32 %v4851, 7
        %v4853 = vsub.s32 %v3740, %v4852
        %v4854 = vrot.slane %v3282, %v4853
        %v4855 = vsel %vm3745, %v4854, %v4850
        %v4856 = vlaneseq
        %v4857 = vshrl.u32 %v4856, 7
        %v4858 = vsub.s32 %v3747, %v4857
        %v4859 = vrot.slane %v3283, %v4858
        %v4860 = vsel %vm3752, %v4859, %v4855
        %v4861 = vlaneseq
        %v4862 = vshrl.u32 %v4861, 7
        %v4863 = vsub.s32 %v3754, %v4862
        %v4864 = vrot.slane %v3284, %v4863
        %v4865 = vsel %vm3759, %v4864, %v4860
        %v4866 = vlaneseq
        %v4867 = vshrl.u32 %v4866, 7
        %v4868 = vsub.s32 %v3761, %v4867
        %v4869 = vrot.slane %v3285, %v4868
        %v4870 = vsel %vm3766, %v4869, %v4865
        %v4871 = vlaneseq
        %v4872 = vshrl.u32 %v4871, 7
        %v4873 = vsub.s32 %v3768, %v4872
        %v4874 = vrot.slane %v3286, %v4873
        %v4875 = vsel %vm3773, %v4874, %v4870
        %v4876 = vlaneseq
        %v4877 = vshrl.u32 %v4876, 7
        %v4878 = vsub.s32 %v3775, %v4877
        %v4879 = vrot.slane %v3287, %v4878
        %v4880 = vsel %vm3780, %v4879, %v4875
        %v4881 = vlaneseq
        %v4882 = vshrl.u32 %v4881, 7
        %v4883 = vsub.s32 %v3672, %v4882
        %v4884 = vrot.slane %v3288, %v4883
        %v4885 = vlaneseq
        %v4886 = vshrl.u32 %v4885, 7
        %v4887 = vsub.s32 %v3677, %v4886
        %v4888 = vrot.slane %v3289, %v4887
        %v4889 = vsel %vm3682, %v4888, %v4884
        %v4890 = vlaneseq
        %v4891 = vshrl.u32 %v4890, 7
        %v4892 = vsub.s32 %v3684, %v4891
        %v4893 = vrot.slane %v3290, %v4892
        %v4894 = vsel %vm3689, %v4893, %v4889
        %v4895 = vlaneseq
        %v4896 = vshrl.u32 %v4895, 7
        %v4897 = vsub.s32 %v3691, %v4896
        %v4898 = vrot.slane %v3291, %v4897
        %v4899 = vsel %vm3696, %v4898, %v4894
        %v4900 = vlaneseq
        %v4901 = vshrl.u32 %v4900, 7
        %v4902 = vsub.s32 %v3698, %v4901
        %v4903 = vrot.slane %v3292, %v4902
        %v4904 = vsel %vm3703, %v4903, %v4899
        %v4905 = vlaneseq
        %v4906 = vshrl.u32 %v4905, 7
        %v4907 = vsub.s32 %v3705, %v4906
        %v4908 = vrot.slane %v3293, %v4907
        %v4909 = vsel %vm3710, %v4908, %v4904
        %v4910 = vlaneseq
        %v4911 = vshrl.u32 %v4910, 7
        %v4912 = vsub.s32 %v3712, %v4911
        %v4913 = vrot.slane %v3294, %v4912
        %v4914 = vsel %vm3717, %v4913, %v4909
        %v4915 = vlaneseq
        %v4916 = vshrl.u32 %v4915, 7
        %v4917 = vsub.s32 %v3719, %v4916
        %v4918 = vrot.slane %v3295, %v4917
        %v4919 = vsel %vm3724, %v4918, %v4914
        %v4920 = vlaneseq
        %v4921 = vshrl.u32 %v4920, 7
        %v4922 = vsub.s32 %v3726, %v4921
        %v4923 = vrot.slane %v3296, %v4922
        %v4924 = vsel %vm3731, %v4923, %v4919
        %v4925 = vlaneseq
        %v4926 = vshrl.u32 %v4925, 7
        %v4927 = vsub.s32 %v3733, %v4926
        %v4928 = vrot.slane %v3297, %v4927
        %v4929 = vsel %vm3738, %v4928, %v4924
        %v4930 = vlaneseq
        %v4931 = vshrl.u32 %v4930, 7
        %v4932 = vsub.s32 %v3740, %v4931
        %v4933 = vrot.slane %v3298, %v4932
        %v4934 = vsel %vm3745, %v4933, %v4929
        %v4935 = vlaneseq
        %v4936 = vshrl.u32 %v4935, 7
        %v4937 = vsub.s32 %v3747, %v4936
        %v4938 = vrot.slane %v3299, %v4937
        %v4939 = vsel %vm3752, %v4938, %v4934
        %v4940 = vlaneseq
        %v4941 = vshrl.u32 %v4940, 7
        %v4942 = vsub.s32 %v3754, %v4941
        %v4943 = vrot.slane %v3300, %v4942
        %v4944 = vsel %vm3759, %v4943, %v4939
        %v4945 = vlaneseq
        %v4946 = vshrl.u32 %v4945, 7
        %v4947 = vsub.s32 %v3761, %v4946
        %v4948 = vrot.slane %v3301, %v4947
        %v4949 = vsel %vm3766, %v4948, %v4944
        %v4950 = vlaneseq
        %v4951 = vshrl.u32 %v4950, 7
        %v4952 = vsub.s32 %v3768, %v4951
        %v4953 = vrot.slane %v3302, %v4952
        %v4954 = vsel %vm3773, %v4953, %v4949
        %v4955 = vlaneseq
        %v4956 = vshrl.u32 %v4955, 7
        %v4957 = vsub.s32 %v3775, %v4956
        %v4958 = vrot.slane %v3303, %v4957
        %v4959 = vsel %vm3780, %v4958, %v4954
        %v4960 = vlaneseq
        %v4961 = vshrl.u32 %v4960, 7
        %v4962 = vsub.s32 %v3672, %v4961
        %v4963 = vrot.slane %v3304, %v4962
        %v4964 = vlaneseq
        %v4965 = vshrl.u32 %v4964, 7
        %v4966 = vsub.s32 %v3677, %v4965
        %v4967 = vrot.slane %v3305, %v4966
        %v4968 = vsel %vm3682, %v4967, %v4963
        %v4969 = vlaneseq
        %v4970 = vshrl.u32 %v4969, 7
        %v4971 = vsub.s32 %v3684, %v4970
        %v4972 = vrot.slane %v3306, %v4971
        %v4973 = vsel %vm3689, %v4972, %v4968
        %v4974 = vlaneseq
        %v4975 = vshrl.u32 %v4974, 7
        %v4976 = vsub.s32 %v3691, %v4975
        %v4977 = vrot.slane %v3307, %v4976
        %v4978 = vsel %vm3696, %v4977, %v4973
        %v4979 = vlaneseq
        %v4980 = vshrl.u32 %v4979, 7
        %v4981 = vsub.s32 %v3698, %v4980
        %v4982 = vrot.slane %v3308, %v4981
        %v4983 = vsel %vm3703, %v4982, %v4978
        %v4984 = vlaneseq
        %v4985 = vshrl.u32 %v4984, 7
        %v4986 = vsub.s32 %v3705, %v4985
        %v4987 = vrot.slane %v3309, %v4986
        %v4988 = vsel %vm3710, %v4987, %v4983
        %v4989 = vlaneseq
        %v4990 = vshrl.u32 %v4989, 7
        %v4991 = vsub.s32 %v3712, %v4990
        %v4992 = vrot.slane %v3310, %v4991
        %v4993 = vsel %vm3717, %v4992, %v4988
        %v4994 = vlaneseq
        %v4995 = vshrl.u32 %v4994, 7
        %v4996 = vsub.s32 %v3719, %v4995
        %v4997 = vrot.slane %v3311, %v4996
        %v4998 = vsel %vm3724, %v4997, %v4993
        %v4999 = vlaneseq
        %v5000 = vshrl.u32 %v4999, 7
        %v5001 = vsub.s32 %v3726, %v5000
        %v5002 = vrot.slane %v3312, %v5001
        %v5003 = vsel %vm3731, %v5002, %v4998
        %v5004 = vlaneseq
        %v5005 = vshrl.u32 %v5004, 7
        %v5006 = vsub.s32 %v3733, %v5005
        %v5007 = vrot.slane %v3313, %v5006
        %v5008 = vsel %vm3738, %v5007, %v5003
        %v5009 = vlaneseq
        %v5010 = vshrl.u32 %v5009, 7
        %v5011 = vsub.s32 %v3740, %v5010
        %v5012 = vrot.slane %v3314, %v5011
        %v5013 = vsel %vm3745, %v5012, %v5008
        %v5014 = vlaneseq
        %v5015 = vshrl.u32 %v5014, 7
        %v5016 = vsub.s32 %v3747, %v5015
        %v5017 = vrot.slane %v3315, %v5016
        %v5018 = vsel %vm3752, %v5017, %v5013
        %v5019 = vlaneseq
        %v5020 = vshrl.u32 %v5019, 7
        %v5021 = vsub.s32 %v3754, %v5020
        %v5022 = vrot.slane %v3316, %v5021
        %v5023 = vsel %vm3759, %v5022, %v5018
        %v5024 = vlaneseq
        %v5025 = vshrl.u32 %v5024, 7
        %v5026 = vsub.s32 %v3761, %v5025
        %v5027 = vrot.slane %v3317, %v5026
        %v5028 = vsel %vm3766, %v5027, %v5023
        %v5029 = vlaneseq
        %v5030 = vshrl.u32 %v5029, 7
        %v5031 = vsub.s32 %v3768, %v5030
        %v5032 = vrot.slane %v3318, %v5031
        %v5033 = vsel %vm3773, %v5032, %v5028
        %v5034 = vlaneseq
        %v5035 = vshrl.u32 %v5034, 7
        %v5036 = vsub.s32 %v3775, %v5035
        %v5037 = vrot.slane %v3319, %v5036
        %v5038 = vsel %vm3780, %v5037, %v5033
        %v5039 = vlaneseq
        %v5040 = vshrl.u32 %v5039, 7
        %v5041 = vsub.s32 %v3672, %v5040
        %v5042 = vrot.slane %v3320, %v5041
        %v5043 = vlaneseq
        %v5044 = vshrl.u32 %v5043, 7
        %v5045 = vsub.s32 %v3677, %v5044
        %v5046 = vrot.slane %v3321, %v5045
        %v5047 = vsel %vm3682, %v5046, %v5042
        %v5048 = vlaneseq
        %v5049 = vshrl.u32 %v5048, 7
        %v5050 = vsub.s32 %v3684, %v5049
        %v5051 = vrot.slane %v3322, %v5050
        %v5052 = vsel %vm3689, %v5051, %v5047
        %v5053 = vlaneseq
        %v5054 = vshrl.u32 %v5053, 7
        %v5055 = vsub.s32 %v3691, %v5054
        %v5056 = vrot.slane %v3323, %v5055
        %v5057 = vsel %vm3696, %v5056, %v5052
        %v5058 = vlaneseq
        %v5059 = vshrl.u32 %v5058, 7
        %v5060 = vsub.s32 %v3698, %v5059
        %v5061 = vrot.slane %v3324, %v5060
        %v5062 = vsel %vm3703, %v5061, %v5057
        %vm5063 = vcmask 1041409
        %v5064 = vsel %vm5063, %v4121, %v3781
        %vm5065 = vcmask 1042434
        %v5066 = vsel %vm5065, %v4461, %v5064
        %vm5067 = vcmask 1043459
        %v5068 = vsel %vm5067, %v4801, %v5066
        %v5069 = vsel %vm5063, %v4200, %v3860
        %v5070 = vsel %vm5065, %v4540, %v5069
        %v5071 = vsel %vm5067, %v4880, %v5070
        %v5072 = vsel %vm5063, %v4279, %v3939
        %v5073 = vsel %vm5065, %v4619, %v5072
        %v5074 = vsel %vm5067, %v4959, %v5073
        %v5075 = vsel %vm5063, %v4358, %v4018
        %v5076 = vsel %vm5065, %v4698, %v5075
        %v5077 = vsel %vm5067, %v5038, %v5076
        %v5078 = vsel %vm5063, %v4382, %v4042
        %v5079 = vsel %vm5065, %v4722, %v5078
        %v5080 = vsel %vm5067, %v5062, %v5079
        %vm5085 = vcmask 326656
        %v5086 = vsel %vm5085, %v5080, 0
        %5088 = vmatprep.subr.mxu0 0.0
        %5089 = vmatpush1.msra.mxu0 %v3326
        %5090 = vmatprep.subr.mxu0 0.0
        %5091 = vmatpush1.msra.mxu0 %v3327
        %5092 = vmatprep.subr.mxu0 0.0
        %5093 = vmatpush1.msra.mxu0 %v3328
        %5094 = vmatprep.subr.mxu0 0.0
        %5095 = vmatpush1.msra.mxu0 %v3329
        %5096 = vmatprep.subr.mxu0 0.0
        %5097 = vmatpush1.msra.mxu0 %v3330
        %5098 = vmatprep.subr.mxu0 0.0
        %5099 = vmatpush1.msra.mxu0 %v3331
        %5100 = vmatprep.subr.mxu0 0.0
        %5101 = vmatpush1.msra.mxu0 %v3332
        %5102 = vmatprep.subr.mxu0 0.0
        %5103 = vmatpush1.msra.mxu0 %v3333
        %5104 = vmatprep.subr.mxu0 0.0
        %5105 = vmatpush1.msra.mxu0 %v3334
        %5106 = vmatprep.subr.mxu0 0.0
        %5107 = vmatpush1.msra.mxu0 %v3335
        %5108 = vmatprep.subr.mxu0 0.0
        %5109 = vmatpush1.msra.mxu0 %v3336
        %5110 = vmatprep.subr.mxu0 0.0
        %5111 = vmatpush1.msra.mxu0 %v3337
        %5112 = vmatprep.subr.mxu0 0.0
        %5113 = vmatpush1.msra.mxu0 %v3338
        %5114 = vmatprep.subr.mxu0 0.0
        %5115 = vmatpush1.msra.mxu0 %v3339
        %5116 = vmatprep.subr.mxu0 0.0
        %5117 = vmatpush1.msra.mxu0 %v3340
        %5118 = vmatprep.subr.mxu0 0.0
        %5119 = vmatpush1.msra.mxu0 %v3341
        %5120 = vmatprep.subr.mxu0 0.0
        %5121 = vmatpush1.msra.mxu0 %v3342
        %5122 = vmatprep.subr.mxu0 0.0
        %5123 = vmatpush1.msra.mxu0 %v3343
        %5124 = vmatprep.subr.mxu0 0.0
        %5125 = vmatpush1.msra.mxu0 %v3344
        %5126 = vmatprep.subr.mxu0 0.0
        %5127 = vmatpush1.msra.mxu0 %v3345
        %5128 = vmatprep.subr.mxu0 0.0
        %5129 = vmatpush1.msra.mxu0 %v3346
        %5130 = vmatprep.subr.mxu0 0.0
        %5131 = vmatpush1.msra.mxu0 %v3347
        %5132 = vmatprep.subr.mxu0 0.0
        %5133 = vmatpush1.msra.mxu0 %v3348
        %5134 = vmatprep.subr.mxu0 0.0
        %5135 = vmatpush1.msra.mxu0 %v3349
        %5136 = vmatprep.subr.mxu0 0.0
        %5137 = vmatpush1.msra.mxu0 %v3350
        %5138 = vmatprep.subr.mxu0 0.0
        %5139 = vmatpush1.msra.mxu0 %v3351
        %5140 = vmatprep.subr.mxu0 0.0
        %5141 = vmatpush1.msra.mxu0 %v3352
        %5142 = vmatprep.subr.mxu0 0.0
        %5143 = vmatpush1.msra.mxu0 %v3353
        %5144 = vmatprep.subr.mxu0 0.0
        %5145 = vmatpush1.msra.mxu0 %v3354
        %5146 = vmatprep.subr.mxu0 0.0
        %5147 = vmatpush1.msra.mxu0 %v3355
        %5148 = vmatprep.subr.mxu0 0.0
        %5149 = vmatpush1.msra.mxu0 %v3356
        %5150 = vmatprep.subr.mxu0 0.0
        %5151 = vmatpush1.msra.mxu0 %v3357
        %5152 = vmatprep.mubr.f32.mxu0 %v5071
        %5153 = vmatmul.mubr.f32.gmra.mrb[0].mxu0 %v5068
        %v5154 = vpop.f32.mrb[0].mxu0
        %v5155 = vadd.f32 0.0, %v5154
        %v5156 = vpop.f32.mrb[0].mxu0
        %5157 = vdwg.mxu0
        %5158 = vmatprep.subr.mxu0 0.0
        %5159 = vmatpush1.msra.mxu0 %v3358
        %5160 = vmatprep.subr.mxu0 0.0
        %5161 = vmatpush1.msra.mxu0 %v3359
        %5162 = vmatprep.subr.mxu0 0.0
        %5163 = vmatpush1.msra.mxu0 %v3360
        %5164 = vmatprep.subr.mxu0 0.0
        %5165 = vmatpush1.msra.mxu0 %v3361
        %5166 = vmatprep.subr.mxu0 0.0
        %5167 = vmatpush1.msra.mxu0 %v3362
        %5168 = vmatprep.subr.mxu0 0.0
        %5169 = vmatpush1.msra.mxu0 %v3363
        %5170 = vmatprep.subr.mxu0 0.0
        %5171 = vmatpush1.msra.mxu0 %v3364
        %5172 = vmatprep.subr.mxu0 0.0
        %5173 = vmatpush1.msra.mxu0 %v3365
        %5174 = vmatprep.subr.mxu0 0.0
        %5175 = vmatpush1.msra.mxu0 %v3366
        %5176 = vmatprep.subr.mxu0 0.0
        %5177 = vmatpush1.msra.mxu0 %v3367
        %5178 = vmatprep.subr.mxu0 0.0
        %5179 = vmatpush1.msra.mxu0 %v3368
        %5180 = vmatprep.subr.mxu0 0.0
        %5181 = vmatpush1.msra.mxu0 %v3369
        %5182 = vmatprep.subr.mxu0 0.0
        %5183 = vmatpush1.msra.mxu0 %v3370
        %5184 = vmatprep.subr.mxu0 0.0
        %5185 = vmatpush1.msra.mxu0 %v3371
        %5186 = vmatprep.subr.mxu0 0.0
        %5187 = vmatpush1.msra.mxu0 %v3372
        %5188 = vmatprep.subr.mxu0 0.0
        %5189 = vmatpush1.msra.mxu0 %v3373
        %5190 = vmatprep.subr.mxu0 0.0
        %5191 = vmatpush1.msra.mxu0 %v3374
        %5192 = vmatprep.subr.mxu0 0.0
        %5193 = vmatpush1.msra.mxu0 %v3375
        %5194 = vmatprep.subr.mxu0 0.0
        %5195 = vmatpush1.msra.mxu0 %v3376
        %5196 = vmatprep.subr.mxu0 0.0
        %5197 = vmatpush1.msra.mxu0 %v3377
        %5198 = vmatprep.subr.mxu0 0.0
        %5199 = vmatpush1.msra.mxu0 %v3378
        %5200 = vmatprep.subr.mxu0 0.0
        %5201 = vmatpush1.msra.mxu0 %v3379
        %5202 = vmatprep.subr.mxu0 0.0
        %5203 = vmatpush1.msra.mxu0 %v3380
        %5204 = vmatprep.subr.mxu0 0.0
        %5205 = vmatpush1.msra.mxu0 %v3381
        %5206 = vmatprep.subr.mxu0 0.0
        %5207 = vmatpush1.msra.mxu0 %v3382
        %5208 = vmatprep.subr.mxu0 0.0
        %5209 = vmatpush1.msra.mxu0 %v3383
        %5210 = vmatprep.subr.mxu0 0.0
        %5211 = vmatpush1.msra.mxu0 %v3384
        %5212 = vmatprep.subr.mxu0 0.0
        %5213 = vmatpush1.msra.mxu0 %v3385
        %5214 = vmatprep.subr.mxu0 0.0
        %5215 = vmatpush1.msra.mxu0 %v3386
        %5216 = vmatprep.subr.mxu0 0.0
        %5217 = vmatpush1.msra.mxu0 %v3387
        %5218 = vmatprep.subr.mxu0 0.0
        %5219 = vmatpush1.msra.mxu0 %v3388
        %5220 = vmatprep.subr.mxu0 0.0
        %5221 = vmatpush1.msra.mxu0 %v3389
        %5222 = vmatprep.mubr.f32.mxu0 %v5077
        %5223 = vmatmul.mubr.f32.gmra.mrb[0].mxu0 %v5074
        %v5224 = vpop.f32.mrb[0].mxu0
        %v5225 = vadd.f32 %v5155, %v5224
        %v5226 = vpop.f32.mrb[0].mxu0
        %5227 = vdwg.mxu0
        %5228 = vmatprep.subr.mxu0 0.0
        %5229 = vmatpush1.msra.mxu0 %v3390
        %5230 = vmatprep.subr.mxu0 0.0
        %5231 = vmatpush1.msra.mxu0 %v3391
        %5232 = vmatprep.subr.mxu0 0.0
        %5233 = vmatpush1.msra.mxu0 %v3392
        %5234 = vmatprep.subr.mxu0 0.0
        %5235 = vmatpush1.msra.mxu0 %v3393
        %5236 = vmatprep.subr.mxu0 0.0
        %5237 = vmatpush1.msra.mxu0 %v3394
        %5238 = vmatprep.subr.mxu0 0.0
        %5239 = vmatpush1.msra.mxu0 0.0
        %5240 = vmatprep.subr.mxu0 0.0
        %5241 = vmatpush1.msra.mxu0 0.0
        %5242 = vmatprep.subr.mxu0 0.0
        %5243 = vmatpush1.msra.mxu0 0.0
        %5244 = vmatprep.subr.mxu0 0.0
        %5245 = vmatpush1.msra.mxu0 0.0
        %5246 = vmatprep.subr.mxu0 0.0
        %5247 = vmatpush1.msra.mxu0 0.0
        %5248 = vmatprep.subr.mxu0 0.0
        %5249 = vmatpush1.msra.mxu0 0.0
        %5250 = vmatprep.subr.mxu0 0.0
        %5251 = vmatpush1.msra.mxu0 0.0
        %5252 = vmatprep.subr.mxu0 0.0
        %5253 = vmatpush1.msra.mxu0 0.0
        %5254 = vmatprep.subr.mxu0 0.0
        %5255 = vmatpush1.msra.mxu0 0.0
        %5256 = vmatprep.subr.mxu0 0.0
        %5257 = vmatpush1.msra.mxu0 0.0
        %5258 = vmatprep.subr.mxu0 0.0
        %5259 = vmatpush1.msra.mxu0 0.0
        %5260 = vmatprep.subr.mxu0 0.0
        %5261 = vmatpush1.msra.mxu0 0.0
        %5262 = vmatprep.subr.mxu0 0.0
        %5263 = vmatpush1.msra.mxu0 0.0
        %5264 = vmatprep.subr.mxu0 0.0
        %5265 = vmatpush1.msra.mxu0 0.0
        %5266 = vmatprep.subr.mxu0 0.0
        %5267 = vmatpush1.msra.mxu0 0.0
        %5268 = vmatprep.subr.mxu0 0.0
        %5269 = vmatpush1.msra.mxu0 0.0
        %5270 = vmatprep.subr.mxu0 0.0
        %5271 = vmatpush1.msra.mxu0 0.0
        %5272 = vmatprep.subr.mxu0 0.0
        %5273 = vmatpush1.msra.mxu0 0.0
        %5274 = vmatprep.subr.mxu0 0.0
        %5275 = vmatpush1.msra.mxu0 0.0
        %5276 = vmatprep.subr.mxu0 0.0
        %5277 = vmatpush1.msra.mxu0 0.0
        %5278 = vmatprep.subr.mxu0 0.0
        %5279 = vmatpush1.msra.mxu0 0.0
        %5280 = vmatprep.subr.mxu0 0.0
        %5281 = vmatpush1.msra.mxu0 0.0
        %5282 = vmatprep.subr.mxu0 0.0
        %5283 = vmatpush1.msra.mxu0 0.0
        %5284 = vmatprep.subr.mxu0 0.0
        %5285 = vmatpush1.msra.mxu0 0.0
        %5286 = vmatprep.subr.mxu0 0.0
        %5287 = vmatpush1.msra.mxu0 0.0
        %5288 = vmatprep.subr.mxu0 0.0
        %5289 = vmatpush1.msra.mxu0 0.0
        %5290 = vmatprep.subr.mxu0 0.0
        %5291 = vmatpush1.msra.mxu0 0.0
        %5292 = vmatprep.mubr.f32.mxu0 0.0
        %5293 = vmatmul.mubr.f32.gmra.mrb[0].mxu0 %v5086
        %v5294 = vpop.f32.mrb[0].mxu0
        %v5295 = vadd.f32 %v5225, %v5294
        %v5296 = vpop.f32.mrb[0].mxu0
        %5297 = vdwg.mxu0
        %v5298 = vadd.f32 %v3325, %v5295
        %5299 = vst [vmem:[#allocation2] sm:$0xf] %v5298
        %p5300 = scmp.eq.s32.totalorder %s22, 3
        // Predicated region
        $region113: #{tpu_custom_call.1} parent=99 // pred_check
          %p5301 = pneg %p5300
        $region114: #{tpu_custom_call.1} parent=99 // pred_check_branch
          %5303 = sbr.rel (%p5301) target = $region116
        $region115: #{tpu_custom_call.1} parent=99 // pred_region
          %v5304 = vld [vmem:[#allocation2] sm:$0xf]
          %v5305 = vld [vmem:[%s1662] sm:$0x1]
          %v5307 = vlaneseq
          %v5308 = vshrl.u32 %v5307, 7
          %v5309 = vsub.s32 0, %v5308
          %v5310 = vrot.slane %v5305, %v5309
          %v5312 = vadd.f32 %v5304, %v5310
          %5313 = vst [vmem:[%s1657] sm:$0xf] %v5312
        $region116: #{tpu_custom_call.1} parent=99 // pred_fallthru
          _
        %s5314 = sand.u32 %s117, 1
        %s5315 = scalar_lea.sflag [#allocation6], %s5314
        %s5316 = sand.u32 %s117, 1
        %s5317 = smul.addr %s5316, 4
        %s5318 = scalar_lea.vmem [#allocation5], %s5317
        // Predicated region
        $region117: #{tpu_custom_call.1} parent=99 // pred_check
          %p5319 = pneg %p127
        $region118: #{tpu_custom_call.1} parent=99 // pred_check_branch
          %5321 = sbr.rel (%p5319) target = $region120
        $region119: #{tpu_custom_call.1} parent=99 // pred_region
          %s5323 = ssub.s32 64, 64
          %5324 = vsyncadd %s5315, %s5323
          %s5325 = smul.addr %s21, 64
          %s5326 = scalar_lea.hbm %s3, %s5325
          %s5328 = sshll.u32 %s5318, 4
          %s5329 = int_to_ptr.vmem [resolvable:$true] %s5328
          %5331 = dma.vmem_to_hbm [thread:$0]  %s5329, 64, %s5326, %s5315
        $region120: #{tpu_custom_call.1} parent=99 // pred_fallthru
          _
      $region100: #{tpu_custom_call.1} parent=5 // pred_fallthru
        _
      %p5332 = scmp.le.s32.totalorder 2, %s12
      // Predicated region
      $region121: #{tpu_custom_call.1} parent=5 // pred_check
        %p5333 = pneg %p5332
      $region122: #{tpu_custom_call.1} parent=5 // pred_check_branch
        %5335 = sbr.rel (%p5333) target = $region124
      $region123: #{tpu_custom_call.1} parent=5 // pred_region
        %s5336 = ssub.s32 %s12, 2
        // Predicated region
        $region125: #{tpu_custom_call.1} parent=123 // pred_check
          %p5337 = pneg %p133
        $region126: #{tpu_custom_call.1} parent=123 // pred_check_branch
          %5339 = sbr.rel (%p5337) target = $region128
        $region127: #{tpu_custom_call.1} parent=123 // pred_region
          %s5340 = sand.u32 %s118, 1
          %s5341 = scalar_lea.sflag [#allocation6], %s5340
          %s5342 = sand.u32 %s118, 1
          %s5343 = smul.addr %s5342, 4
          %s5344 = scalar_lea.vmem [#allocation5], %s5343
          %5345 = dma.done %s5341, 64
        $region128: #{tpu_custom_call.1} parent=123 // pred_fallthru
          _
      $region124: #{tpu_custom_call.1} parent=5 // pred_fallthru
        _
    $region6: #{tpu_custom_call.1} parent=1 // loop_footer
      %s16 = sadd.s32 1, %s12
    $region7: #{tpu_custom_call.1} parent=1 // loop_footer_branch
      %11 = sbr.rel target = $region3
    $region8: #{tpu_custom_call.1} parent=1 // loop_exit
      _
    %5346 = vsyncpa [#allocation6], 1
    %s5347 = scalar_lea.sflag [#allocation6], 1
    %5348 = vsyncpa %s5347, 1

</llo_original>
